<compile_context>
chip_gen: v7x
topology: tpu7x:2x2x1
jax: 0.10.0
libtpu: 0.0.40
codegen_flags: <defaults>
</compile_context>

<pallas_src>
import jax
import jax.numpy as jnp
from jax.experimental import pallas as pl
from jax.experimental.pallas import tpu as pltpu


def nn_kernel(x_ref, xe_ref,
              w1_ref, b1_ref,
              w2_ref, b2_ref,
              w3_ref, b3_ref,
              w4_ref, b4_ref,
              w5a_ref, w5b_ref, b5_ref,
              out_ref):
    # x tile is bf16; MXU matmuls in bf16 with f32 accumulation.
    x = x_ref[...]                                                  # (TB, z_dim) bf16
    h = jnp.dot(x, w1_ref[...], preferred_element_type=jnp.float32) + b1_ref[...]
    h = jnp.maximum(h, 0.0)
    h = jnp.dot(h.astype(jnp.bfloat16), w2_ref[...],
                preferred_element_type=jnp.float32) + b2_ref[...]
    h = jnp.maximum(h, 0.0)
    h = jnp.dot(h.astype(jnp.bfloat16), w3_ref[...],
                preferred_element_type=jnp.float32) + b3_ref[...]
    h = jnp.maximum(h, 0.0)                                         # (TB, 512) f32

    # linear4 (out_features = 1): VPU multiply + XLU lane reduce, then tanh.
    b4 = b4_ref[0, 0]
    y = jnp.tanh(jnp.sum(h * w4_ref[...], axis=-1, keepdims=True) + b4)   # (TB, 1)

    # linear5 over cat([y, x_extra], 1), concat folded into two terms.
    extra = jnp.sum(xe_ref[...] * w5b_ref[...], axis=-1, keepdims=True)   # (TB, 1)
    out = y * w5a_ref[0, 0] + extra + b5_ref[0, 0]                        # (TB, 1)

    # Lane-dense store: broadcast to the full 128-lane output slab.
    out_ref[...] = jnp.broadcast_to(out, out_ref.shape).astype(out_ref.dtype)


def nn_forward(x, x_extra, params, *, block_b=128):
    """Forward pass. x: (B, z_dim) f32, x_extra: (B, extra_dim) f32 -> (B, 1) f32."""
    B, z_dim = x.shape
    extra_dim = x_extra.shape[1]

    tb = block_b
    b_pad = ((B + tb - 1) // tb) * tb
    if b_pad != B:
        x = jnp.pad(x, ((0, b_pad - B), (0, 0)))
        x_extra = jnp.pad(x_extra, ((0, b_pad - B), (0, 0)))

    # Activations and wide weights in bf16 (halves HBM traffic, 2x MXU rate).
    x_bf16 = x.astype(jnp.bfloat16)
    w1 = params["w1"].astype(jnp.bfloat16)
    w2 = params["w2"].astype(jnp.bfloat16)
    w3 = params["w3"].astype(jnp.bfloat16)

    grid = (b_pad // tb,)

    def resident(shape):
        # Whole array as one block, constant block index -> stays in VMEM.
        return pl.BlockSpec(shape, lambda i: (0, 0))

    smem_scalar = pl.BlockSpec((1, 1), lambda i: (0, 0),
                               memory_space=pltpu.MemorySpace.SMEM)

    in_specs = [
        pl.BlockSpec((tb, z_dim), lambda i: (i, 0)),        # x tile (pipelined)
        pl.BlockSpec((tb, extra_dim), lambda i: (i, 0)),    # x_extra tile (pipelined)
        resident(w1.shape), resident(params["b1"].shape),   # w1, b1
        resident(w2.shape), resident(params["b2"].shape),   # w2, b2
        resident(w3.shape), resident(params["b3"].shape),   # w3, b3
        resident(params["w4"].shape), smem_scalar,          # w4 row, b4 scalar
        smem_scalar,                                        # w5a scalar
        resident(params["w5b"].shape), smem_scalar,         # w5b row, b5 scalar
    ]
    out_specs = pl.BlockSpec((tb, 128), lambda i: (i, 0))

    out_slab = pl.pallas_call(
        nn_kernel,
        out_shape=jax.ShapeDtypeStruct((b_pad, 128), jnp.float32),
        grid=grid,
        in_specs=in_specs,
        out_specs=out_specs,
        compiler_params=pltpu.CompilerParams(
            dimension_semantics=("parallel",)),
    )(x_bf16, x_extra,
      w1, params["b1"],
      w2, params["b2"],
      w3, params["b3"],
      params["w4"], params["b4"],
      params["w5a"], params["w5b"], params["b5"])

    return out_slab[:B, :1]


def init_params(key, z_dim, extra_dim):
    """Deterministic parameter init (PyTorch-like uniform fan-in scaling)."""
    def linear(key, fan_in, fan_out):
        kw, kb = jax.random.split(key)
        bound = 1.0 / jnp.sqrt(fan_in)
        # stored as (in, out) so the kernel computes x @ W
        w = jax.random.uniform(kw, (fan_in, fan_out), jnp.float32, -bound, bound)
        b = jax.random.uniform(kb, (1, fan_out), jnp.float32, -bound, bound)
        return w, b

    k1, k2, k3, k4, k5 = jax.random.split(key, 5)
    w1, b1 = linear(k1, z_dim, 512)
    w2, b2 = linear(k2, 512, 512)
    w3, b3 = linear(k3, 512, 512)
    w4, b4 = linear(k4, 512, 1)                 # w4: (512, 1)
    w5, b5 = linear(k5, extra_dim + 1, 1)       # w5: (extra_dim + 1, 1)
    return {
        "w1": w1, "b1": b1,
        "w2": w2, "b2": b2,
        "w3": w3, "b3": b3,
        "w4": w4.T,              # (1, 512) row for VPU multiply + reduce
        "b4": b4,                # (1, 1) scalar
        "w5a": w5[:1, :],        # (1, 1) coefficient multiplying tanh output
        "w5b": w5[1:, :].T,      # (1, extra_dim) row
        "b5": b5,                # (1, 1) scalar
    }


def reference_forward(x, x_extra, p):
    """Pure-JAX reference matching the kernel's bf16-matmul / f32-accumulate path."""
    h = jnp.dot(x.astype(jnp.bfloat16), p["w1"].astype(jnp.bfloat16),
                preferred_element_type=jnp.float32) + p["b1"]
    h = jnp.maximum(h, 0.0)
    h = jnp.dot(h.astype(jnp.bfloat16), p["w2"].astype(jnp.bfloat16),
                preferred_element_type=jnp.float32) + p["b2"]
    h = jnp.maximum(h, 0.0)
    h = jnp.dot(h.astype(jnp.bfloat16), p["w3"].astype(jnp.bfloat16),
                preferred_element_type=jnp.float32) + p["b3"]
    h = jnp.maximum(h, 0.0)
    y = jnp.tanh(jnp.sum(h * p["w4"], axis=-1, keepdims=True) + p["b4"])
    extra = jnp.sum(x_extra * p["w5b"], axis=-1, keepdims=True)
    return y * p["w5a"] + extra + p["b5"]


if __name__ == "__main__":
    # Small shapes; B deliberately not a multiple of the batch tile to
    # exercise the padding path (B=200, TB=128 -> grid of 2).
    B, Z_DIM, EXTRA_DIM = 200, 32, 4

    key = jax.random.PRNGKey(0)
    kx, kxe, kp = jax.random.split(key, 3)
    x = jax.random.normal(kx, (B, Z_DIM), jnp.float32)
    x_extra = jax.random.normal(kxe, (B, EXTRA_DIM), jnp.float32)
    params = init_params(kp, Z_DIM, EXTRA_DIM)

    out = nn_forward(x, x_extra, params, block_b=128)
    out = jax.block_until_ready(out)

    ref = reference_forward(x, x_extra, params)
    assert out.shape == (B, 1)
    assert jnp.allclose(out, ref, atol=1e-4, rtol=1e-4), "mismatch vs reference"
    print("KERNEL_OK")
</pallas_src>

<mosaic_0001>
module attributes {stable_mosaic.version = 11 : i64} {
  func.func @nn_kernel(%arg0: i32, %arg1: memref<128x32xbf16, #tpu.memory_space<vmem>>, %arg2: memref<128x4xf32, #tpu.memory_space<vmem>>, %arg3: memref<32x512xbf16, #tpu.memory_space<vmem>>, %arg4: memref<1x512xf32, #tpu.memory_space<vmem>>, %arg5: memref<512x512xbf16, #tpu.memory_space<vmem>>, %arg6: memref<1x512xf32, #tpu.memory_space<vmem>>, %arg7: memref<512x512xbf16, #tpu.memory_space<vmem>>, %arg8: memref<1x512xf32, #tpu.memory_space<vmem>>, %arg9: memref<1x512xf32, #tpu.memory_space<vmem>>, %arg10: memref<1x1xf32, #tpu.memory_space<smem>>, %arg11: memref<1x1xf32, #tpu.memory_space<smem>>, %arg12: memref<1x4xf32, #tpu.memory_space<vmem>>, %arg13: memref<1x1xf32, #tpu.memory_space<smem>>, %arg14: memref<128x128xf32, #tpu.memory_space<vmem>>) attributes {dimension_semantics = [#tpu.dimension_semantics<parallel>], iteration_bounds = array<i64: 2>, scalar_prefetch = 0 : i64, scratch_operands = 0 : i64, tpu.core_type = #tpu.core_type<tc>, window_params = [{transform_indices = @transform_0, window_bounds = array<i64: 128, 32>}, {transform_indices = @transform_1, window_bounds = array<i64: 128, 4>}, {pipeline_mode = #tpu.pipeline_mode<synchronous>, transform_indices = @transform_2, window_bounds = array<i64: 32, 512>}, {pipeline_mode = #tpu.pipeline_mode<synchronous>, transform_indices = @transform_3, window_bounds = array<i64: 1, 512>}, {pipeline_mode = #tpu.pipeline_mode<synchronous>, transform_indices = @transform_4, window_bounds = array<i64: 512, 512>}, {pipeline_mode = #tpu.pipeline_mode<synchronous>, transform_indices = @transform_5, window_bounds = array<i64: 1, 512>}, {pipeline_mode = #tpu.pipeline_mode<synchronous>, transform_indices = @transform_6, window_bounds = array<i64: 512, 512>}, {pipeline_mode = #tpu.pipeline_mode<synchronous>, transform_indices = @transform_7, window_bounds = array<i64: 1, 512>}, {pipeline_mode = #tpu.pipeline_mode<synchronous>, transform_indices = @transform_8, window_bounds = array<i64: 1, 512>}, {transform_indices = @transform_9, window_bounds = array<i64: 1, 1>}, {transform_indices = @transform_10, window_bounds = array<i64: 1, 1>}, {pipeline_mode = #tpu.pipeline_mode<synchronous>, transform_indices = @transform_11, window_bounds = array<i64: 1, 4>}, {transform_indices = @transform_12, window_bounds = array<i64: 1, 1>}, {transform_indices = @transform_13, window_bounds = array<i64: 128, 128>}]} {
    %c0 = arith.constant 0 : index
    %c0_0 = arith.constant 0 : index
    %0 = vector.load %arg1[%c0, %c0_0] : memref<128x32xbf16, #tpu.memory_space<vmem>>, vector<128x32xbf16>
    %c0_1 = arith.constant 0 : index
    %c0_2 = arith.constant 0 : index
    %1 = vector.load %arg3[%c0_1, %c0_2] : memref<32x512xbf16, #tpu.memory_space<vmem>>, vector<32x512xbf16>
    %cst = arith.constant dense<0.000000e+00> : vector<128x512xf32>
    %2 = tpu.matmul %0, %1, %cst {dimension_numbers = #tpu.dot_dimension_numbers<[1], [0], [0], [1], [0, 0, 1, 1], [], []>} : vector<128x32xbf16>, vector<32x512xbf16>, vector<128x512xf32> -> vector<128x512xf32>
    %c0_3 = arith.constant 0 : index
    %c0_4 = arith.constant 0 : index
    %3 = vector.load %arg4[%c0_3, %c0_4] : memref<1x512xf32, #tpu.memory_space<vmem>>, vector<1x512xf32>
    %4 = vector.broadcast %3 : vector<1x512xf32> to vector<128x512xf32>
    %5 = arith.addf %2, %4 : vector<128x512xf32>
    %cst_5 = arith.constant 0.000000e+00 : f32
    %6 = vector.broadcast %cst_5 : f32 to vector<128x512xf32>
    %7 = arith.maximumf %5, %6 : vector<128x512xf32>
    %8 = arith.truncf %7 : vector<128x512xf32> to vector<128x512xbf16>
    %c0_6 = arith.constant 0 : index
    %c0_7 = arith.constant 0 : index
    %9 = vector.load %arg5[%c0_6, %c0_7] : memref<512x512xbf16, #tpu.memory_space<vmem>>, vector<512x512xbf16>
    %cst_8 = arith.constant dense<0.000000e+00> : vector<128x512xf32>
    %10 = tpu.matmul %8, %9, %cst_8 {dimension_numbers = #tpu.dot_dimension_numbers<[1], [0], [0], [1], [0, 0, 1, 1], [], []>} : vector<128x512xbf16>, vector<512x512xbf16>, vector<128x512xf32> -> vector<128x512xf32>
    %c0_9 = arith.constant 0 : index
    %c0_10 = arith.constant 0 : index
    %11 = vector.load %arg6[%c0_9, %c0_10] : memref<1x512xf32, #tpu.memory_space<vmem>>, vector<1x512xf32>
    %12 = vector.broadcast %11 : vector<1x512xf32> to vector<128x512xf32>
    %13 = arith.addf %10, %12 : vector<128x512xf32>
    %cst_11 = arith.constant 0.000000e+00 : f32
    %14 = vector.broadcast %cst_11 : f32 to vector<128x512xf32>
    %15 = arith.maximumf %13, %14 : vector<128x512xf32>
    %16 = arith.truncf %15 : vector<128x512xf32> to vector<128x512xbf16>
    %c0_12 = arith.constant 0 : index
    %c0_13 = arith.constant 0 : index
    %17 = vector.load %arg7[%c0_12, %c0_13] : memref<512x512xbf16, #tpu.memory_space<vmem>>, vector<512x512xbf16>
    %cst_14 = arith.constant dense<0.000000e+00> : vector<128x512xf32>
    %18 = tpu.matmul %16, %17, %cst_14 {dimension_numbers = #tpu.dot_dimension_numbers<[1], [0], [0], [1], [0, 0, 1, 1], [], []>} : vector<128x512xbf16>, vector<512x512xbf16>, vector<128x512xf32> -> vector<128x512xf32>
    %c0_15 = arith.constant 0 : index
    %c0_16 = arith.constant 0 : index
    %19 = vector.load %arg8[%c0_15, %c0_16] : memref<1x512xf32, #tpu.memory_space<vmem>>, vector<1x512xf32>
    %20 = vector.broadcast %19 : vector<1x512xf32> to vector<128x512xf32>
    %21 = arith.addf %18, %20 : vector<128x512xf32>
    %cst_17 = arith.constant 0.000000e+00 : f32
    %22 = vector.broadcast %cst_17 : f32 to vector<128x512xf32>
    %23 = arith.maximumf %21, %22 : vector<128x512xf32>
    %c0_18 = arith.constant 0 : index
    %c0_19 = arith.constant 0 : index
    %24 = memref.load %arg10[%c0_18, %c0_19] : memref<1x1xf32, #tpu.memory_space<smem>>
    %c0_20 = arith.constant 0 : index
    %c0_21 = arith.constant 0 : index
    %25 = vector.load %arg9[%c0_20, %c0_21] : memref<1x512xf32, #tpu.memory_space<vmem>>, vector<1x512xf32>
    %26 = vector.broadcast %25 : vector<1x512xf32> to vector<128x512xf32>
    %27 = arith.mulf %23, %26 : vector<128x512xf32>
    %cst_22 = arith.constant dense<0.000000e+00> : vector<128xf32>
    %28 = vector.multi_reduction <add>, %27, %cst_22 [1] : vector<128x512xf32> to vector<128xf32>
    %29 = vector.shape_cast %28 : vector<128xf32> to vector<128x1xf32>
    %30 = vector.broadcast %24 : f32 to vector<128x1xf32>
    %31 = arith.addf %29, %30 : vector<128x1xf32>
    %32 = math.tanh %31 : vector<128x1xf32>
    %c0_23 = arith.constant 0 : index
    %c0_24 = arith.constant 0 : index
    %33 = vector.load %arg2[%c0_23, %c0_24] : memref<128x4xf32, #tpu.memory_space<vmem>>, vector<128x4xf32>
    %c0_25 = arith.constant 0 : index
    %c0_26 = arith.constant 0 : index
    %34 = vector.load %arg12[%c0_25, %c0_26] : memref<1x4xf32, #tpu.memory_space<vmem>>, vector<1x4xf32>
    %35 = vector.broadcast %34 : vector<1x4xf32> to vector<128x4xf32>
    %36 = arith.mulf %33, %35 : vector<128x4xf32>
    %cst_27 = arith.constant dense<0.000000e+00> : vector<128xf32>
    %37 = vector.multi_reduction <add>, %36, %cst_27 [1] : vector<128x4xf32> to vector<128xf32>
    %38 = vector.shape_cast %37 : vector<128xf32> to vector<128x1xf32>
    %c0_28 = arith.constant 0 : index
    %c0_29 = arith.constant 0 : index
    %39 = memref.load %arg11[%c0_28, %c0_29] : memref<1x1xf32, #tpu.memory_space<smem>>
    %40 = vector.broadcast %39 : f32 to vector<128x1xf32>
    %41 = arith.mulf %32, %40 : vector<128x1xf32>
    %42 = arith.addf %41, %38 : vector<128x1xf32>
    %c0_30 = arith.constant 0 : index
    %c0_31 = arith.constant 0 : index
    %43 = memref.load %arg13[%c0_30, %c0_31] : memref<1x1xf32, #tpu.memory_space<smem>>
    %44 = vector.broadcast %43 : f32 to vector<128x1xf32>
    %45 = arith.addf %42, %44 : vector<128x1xf32>
    %46 = vector.shape_cast %45 : vector<128x1xf32> to vector<128x1xf32>
    %47 = vector.broadcast %46 : vector<128x1xf32> to vector<128x128xf32>
    %c0_32 = arith.constant 0 : index
    %c0_33 = arith.constant 0 : index
    %48 = vector.load %arg14[%c0_32, %c0_33] : memref<128x128xf32, #tpu.memory_space<vmem>>, vector<128x128xf32>
    tpu.vector_store %arg14[%c0_32, %c0_33], %47 {strides = array<i32>} : memref<128x128xf32, #tpu.memory_space<vmem>>, vector<128x128xf32>,
    return
  }
  func.func @transform_0(%arg0: i32) -> (i32, i32) {
    %c0_i32 = arith.constant 0 : i32
    %c0_i32_0 = arith.constant 0 : i32
    return %arg0, %c0_i32 : i32, i32
  }
  func.func @transform_1(%arg0: i32) -> (i32, i32) {
    %c0_i32 = arith.constant 0 : i32
    %c0_i32_0 = arith.constant 0 : i32
    return %arg0, %c0_i32 : i32, i32
  }
  func.func @transform_2(%arg0: i32) -> (i32, i32) {
    %c0_i32 = arith.constant 0 : i32
    %c0_i32_0 = arith.constant 0 : i32
    %c0_i32_1 = arith.constant 0 : i32
    return %c0_i32, %c0_i32_0 : i32, i32
  }
  func.func @transform_3(%arg0: i32) -> (i32, i32) {
    %c0_i32 = arith.constant 0 : i32
    %c0_i32_0 = arith.constant 0 : i32
    %c0_i32_1 = arith.constant 0 : i32
    return %c0_i32, %c0_i32_0 : i32, i32
  }
  func.func @transform_4(%arg0: i32) -> (i32, i32) {
    %c0_i32 = arith.constant 0 : i32
    %c0_i32_0 = arith.constant 0 : i32
    %c0_i32_1 = arith.constant 0 : i32
    return %c0_i32, %c0_i32_0 : i32, i32
  }
  func.func @transform_5(%arg0: i32) -> (i32, i32) {
    %c0_i32 = arith.constant 0 : i32
    %c0_i32_0 = arith.constant 0 : i32
    %c0_i32_1 = arith.constant 0 : i32
    return %c0_i32, %c0_i32_0 : i32, i32
  }
  func.func @transform_6(%arg0: i32) -> (i32, i32) {
    %c0_i32 = arith.constant 0 : i32
    %c0_i32_0 = arith.constant 0 : i32
    %c0_i32_1 = arith.constant 0 : i32
    return %c0_i32, %c0_i32_0 : i32, i32
  }
  func.func @transform_7(%arg0: i32) -> (i32, i32) {
    %c0_i32 = arith.constant 0 : i32
    %c0_i32_0 = arith.constant 0 : i32
    %c0_i32_1 = arith.constant 0 : i32
    return %c0_i32, %c0_i32_0 : i32, i32
  }
  func.func @transform_8(%arg0: i32) -> (i32, i32) {
    %c0_i32 = arith.constant 0 : i32
    %c0_i32_0 = arith.constant 0 : i32
    %c0_i32_1 = arith.constant 0 : i32
    return %c0_i32, %c0_i32_0 : i32, i32
  }
  func.func @transform_9(%arg0: i32) -> (i32, i32) {
    %c0_i32 = arith.constant 0 : i32
    %c0_i32_0 = arith.constant 0 : i32
    %c0_i32_1 = arith.constant 0 : i32
    return %c0_i32, %c0_i32_0 : i32, i32
  }
  func.func @transform_10(%arg0: i32) -> (i32, i32) {
    %c0_i32 = arith.constant 0 : i32
    %c0_i32_0 = arith.constant 0 : i32
    %c0_i32_1 = arith.constant 0 : i32
    return %c0_i32, %c0_i32_0 : i32, i32
  }
  func.func @transform_11(%arg0: i32) -> (i32, i32) {
    %c0_i32 = arith.constant 0 : i32
    %c0_i32_0 = arith.constant 0 : i32
    %c0_i32_1 = arith.constant 0 : i32
    return %c0_i32, %c0_i32_0 : i32, i32
  }
  func.func @transform_12(%arg0: i32) -> (i32, i32) {
    %c0_i32 = arith.constant 0 : i32
    %c0_i32_0 = arith.constant 0 : i32
    %c0_i32_1 = arith.constant 0 : i32
    return %c0_i32, %c0_i32_0 : i32, i32
  }
  func.func @transform_13(%arg0: i32) -> (i32, i32) {
    %c0_i32 = arith.constant 0 : i32
    %c0_i32_0 = arith.constant 0 : i32
    return %arg0, %c0_i32 : i32, i32
  }
}

</mosaic_0001>

<llo_original>
// kernel: tpu_custom_call.1
$region0: #{tpu_custom_call.1}
  #allocation0 [shape = 'u32[]', space=smem, size = 0x4, offset = 0x4, fixed_abs, tag = 'smem constant byte address 0x4 - core index']
  #allocation1 [shape = 'u32[144,128]{1,0:T(1,128)}', space=vmem, size = 0x12000, scoped, tag = 'internal scratch']
  #allocation2 [shape = 'f32[1,1]{1,0:T(1,128)S(6)}', space=smem, size = 0x200, scoped, tag = 'scoped memory for tpu_custom_call.1']
  #allocation3 [shape = 'f32[1,1]{1,0:T(1,128)S(6)}', space=smem, size = 0x200, scoped, tag = 'scoped memory for tpu_custom_call.1']
  #allocation4 [shape = 'f32[1,1]{1,0:T(1,128)S(6)}', space=smem, size = 0x200, scoped, tag = 'scoped memory for tpu_custom_call.1']
  %s0 = inlined_call_operand.vmem [shape: bf16[256,32], index: 0, kind: input, shape index: {}]
  %s1 = inlined_call_operand.vmem [shape: f32[256,4], index: 1, kind: input, shape index: {}]
  %s2 = inlined_call_operand.vmem [shape: bf16[32,512], index: 2, kind: input, shape index: {}]
  %s3 = inlined_call_operand.vmem [shape: f32[1,512], index: 3, kind: input, shape index: {}]
  %s4 = inlined_call_operand.hbm [shape: bf16[512,512], index: 4, kind: input, shape index: {}]
  %s5 = inlined_call_operand.vmem [shape: f32[1,512], index: 5, kind: input, shape index: {}]
  %s6 = inlined_call_operand.hbm [shape: bf16[512,512], index: 6, kind: input, shape index: {}]
  %s7 = inlined_call_operand.vmem [shape: f32[1,512], index: 7, kind: input, shape index: {}]
  %s8 = inlined_call_operand.vmem [shape: f32[1,512], index: 8, kind: input, shape index: {}]
  %s9 = inlined_call_operand.<no memory space> [shape: f32[1,1], index: 9, kind: input, shape index: {}]
  %s10 = inlined_call_operand.<no memory space> [shape: f32[1,1], index: 10, kind: input, shape index: {}]
  %s11 = inlined_call_operand.vmem [shape: f32[1,4], index: 11, kind: input, shape index: {}]
  %s12 = inlined_call_operand.<no memory space> [shape: f32[1,1], index: 12, kind: input, shape index: {}]
  %s13 = inlined_call_operand.hbm [shape: f32[256,128], index: 13, kind: output, shape index: {}]
  %s14 = sld [smem:[#allocation0]]
  $region93: #{tpu_custom_call.1} parent=0
    _
  %s16 = ssub.s32 1, %s14
  %s17 = scalar_select 0, %s16, %s14
  %18 = sst [smem:[#allocation2]] %s9
  %19 = sst [smem:[#allocation3]] %s10
  %20 = sst [smem:[#allocation4]] %s12
  $region1: #{tpu_custom_call.1} parent=0
    #allocation5 [shape = 'u8[524288]{0}', space=vmem, size = 0x80000, scoped, tag = 'input window, operand 4, single buffered']
    #allocation6 [shape = 's32[2]{0}', space=sflag, size = 0x8, scoped, tag = 'scoped memory for tpu_custom_call.1']
    #allocation7 [shape = 's32[2]{0}', space=sflag, size = 0x8, scoped, tag = 'scoped memory for tpu_custom_call.1']
    #allocation8 [shape = 'u8[524288]{0}', space=vmem, size = 0x80000, scoped, tag = 'input window, operand 6, single buffered']
    #allocation9 [shape = 's32[1]{0}', space=sflag, size = 0x4, scoped, tag = 'scoped memory for tpu_custom_call.1']
    #allocation10 [shape = 'u8[131072]{0}', space=vmem, size = 0x20000, scoped, tag = 'output window, operand 0']
    %21 = vsyncpa [#allocation6], 0
    %22 = vsyncpa [#allocation9], 0
    %23 = vsyncpa [#allocation7], 0
    %s24 = scalar_lea.sflag [#allocation7], 1
    %25 = vsyncpa %s24, 0
    loop: start=0, step=1, limit=4
    $region2: #{tpu_custom_call.1} parent=1 // loop_pre_header
      _
    $region3: #{tpu_custom_call.1} parent=1 // loop_header
      %s27 = sphi 0, %s31
      %p28 = scmp.ge.s32.totalorder %s27, 4
      %s37 = sphi 0, %s39
      %s40 = sphi 0, %s37
      %s41 = sphi 0, %s40
      %s57 = sphi 0, %s41
      %s63 = sphi 0, %s65
      %s66 = sphi 0, %s63
      %s67 = sphi 0, %s66
      %s83 = sphi 0, %s67
      %s87 = sphi 0, %s87
      %s89 = sphi 0, %s87
      %s90 = sphi 0, %s89
      %s104 = sphi 0, %s90
      %s108 = sphi 0, %s108
      %s110 = sphi 0, %s108
      %s111 = sphi 0, %s110
      %s125 = sphi 0, %s111
      %s129 = sphi 0, %s129
      %s131 = sphi 0, %s129
      %s132 = sphi 0, %s131
      %s146 = sphi 0, %s132
      %s150 = sphi 0, %s150
      %s152 = sphi 0, %s150
      %s153 = sphi 0, %s152
      %s167 = sphi 0, %s153
      %s171 = sphi 0, %s171
      %s173 = sphi 0, %s171
      %s174 = sphi 0, %s173
      %s188 = sphi 0, %s174
      %s192 = sphi 0, %s192
      %s194 = sphi 0, %s192
      %s195 = sphi 0, %s194
      %s209 = sphi 0, %s195
      %s213 = sphi 0, %s213
      %s215 = sphi 0, %s213
      %s216 = sphi 0, %s215
      %s230 = sphi 0, %s216
      %s234 = sphi 0, %s234
      %s236 = sphi 0, %s234
      %s237 = sphi 0, %s236
      %s251 = sphi 0, %s237
      %s255 = sphi 0, %s255
      %s257 = sphi 0, %s255
      %s258 = sphi 0, %s257
      %s272 = sphi 0, %s258
      %s276 = sphi 0, %s276
      %s278 = sphi 0, %s276
      %s279 = sphi 0, %s278
      %s293 = sphi 0, %s279
      %s297 = sphi 0, %s297
      %s299 = sphi 0, %s297
      %s300 = sphi 0, %s299
      %s314 = sphi 0, %s300
      %s320 = sphi 0, %s322
      %s323 = sphi 0, %s320
      %s324 = sphi 0, %s323
      %s340 = sphi 0, %s324
    $region4: #{tpu_custom_call.1} parent=1 // loop_header_branch
      %30 = sbr.rel (%p28) target = $region8
    $region5: #{tpu_custom_call.1} parent=1 // loop_body
      %s32 = ssub.s32 %s27, 1
      %s33 = ssub.s32 %s27, 2
      %s34 = sadd.s32 %s27, 1
      %s35 = ssub.s32 %s27, %s34
      %p36 = scmp.eq.s32.totalorder %s35, 0
      %s38 = sadd.s32 %s37, 1
      %s39 = scalar_select %p36, %s37, %s38
      %p42 = pneg %p36
      %p43 = scmp.eq.s32.totalorder %s27, 1
      %p44 = por %p42, %p43
      %p45 = scmp.ne.s32.totalorder %s37, %s40
      %p46 = scmp.eq.s32.totalorder %s27, 0
      %p47 = por %p45, %p46
      %p48 = scmp.ne.s32.totalorder %s37, %s40
      %p49 = scmp.eq.s32.totalorder %s32, 1
      %p50 = por %p48, %p49
      %p51 = scmp.ne.s32.totalorder %s40, %s41
      %p52 = scmp.eq.s32.totalorder %s32, 0
      %p53 = por %p51, %p52
      %p54 = scmp.ne.s32.totalorder %s40, %s41
      %p55 = scmp.eq.s32.totalorder %s33, 1
      %p56 = por %p54, %p55
      %p58 = scmp.ne.s32.totalorder %s41, %s57
      %p59 = scmp.eq.s32.totalorder %s33, 0
      %p60 = por %p58, %p59
      %s61 = ssub.s32 %s27, %s34
      %p62 = scmp.eq.s32.totalorder %s61, 0
      %s64 = sadd.s32 %s63, 1
      %s65 = scalar_select %p62, %s63, %s64
      %p68 = pneg %p62
      %p69 = scmp.eq.s32.totalorder %s27, 1
      %p70 = por %p68, %p69
      %p71 = scmp.ne.s32.totalorder %s63, %s66
      %p72 = scmp.eq.s32.totalorder %s27, 0
      %p73 = por %p71, %p72
      %p74 = scmp.ne.s32.totalorder %s63, %s66
      %p75 = scmp.eq.s32.totalorder %s32, 1
      %p76 = por %p74, %p75
      %p77 = scmp.ne.s32.totalorder %s66, %s67
      %p78 = scmp.eq.s32.totalorder %s32, 0
      %p79 = por %p77, %p78
      %p80 = scmp.ne.s32.totalorder %s66, %s67
      %p81 = scmp.eq.s32.totalorder %s33, 1
      %p82 = por %p80, %p81
      %p84 = scmp.ne.s32.totalorder %s67, %s83
      %p85 = scmp.eq.s32.totalorder %s33, 0
      %p86 = por %p84, %p85
      %s88 = sadd.s32 %s87, 1
      %p91 = scmp.eq.s32.totalorder %s27, 1
      %p92 = scmp.ne.s32.totalorder %s87, %s89
      %p93 = scmp.eq.s32.totalorder %s27, 0
      %p94 = por %p92, %p93
      %p95 = scmp.ne.s32.totalorder %s87, %s89
      %p96 = scmp.eq.s32.totalorder %s32, 1
      %p97 = por %p95, %p96
      %p98 = scmp.ne.s32.totalorder %s89, %s90
      %p99 = scmp.eq.s32.totalorder %s32, 0
      %p100 = por %p98, %p99
      %p101 = scmp.ne.s32.totalorder %s89, %s90
      %p102 = scmp.eq.s32.totalorder %s33, 1
      %p103 = por %p101, %p102
      %p105 = scmp.ne.s32.totalorder %s90, %s104
      %p106 = scmp.eq.s32.totalorder %s33, 0
      %p107 = por %p105, %p106
      %s109 = sadd.s32 %s108, 1
      %p112 = scmp.eq.s32.totalorder %s27, 1
      %p113 = scmp.ne.s32.totalorder %s108, %s110
      %p114 = scmp.eq.s32.totalorder %s27, 0
      %p115 = por %p113, %p114
      %p116 = scmp.ne.s32.totalorder %s108, %s110
      %p117 = scmp.eq.s32.totalorder %s32, 1
      %p118 = por %p116, %p117
      %p119 = scmp.ne.s32.totalorder %s110, %s111
      %p120 = scmp.eq.s32.totalorder %s32, 0
      %p121 = por %p119, %p120
      %p122 = scmp.ne.s32.totalorder %s110, %s111
      %p123 = scmp.eq.s32.totalorder %s33, 1
      %p124 = por %p122, %p123
      %p126 = scmp.ne.s32.totalorder %s111, %s125
      %p127 = scmp.eq.s32.totalorder %s33, 0
      %p128 = por %p126, %p127
      %s130 = sadd.s32 %s129, 1
      %p133 = scmp.eq.s32.totalorder %s27, 1
      %p134 = scmp.ne.s32.totalorder %s129, %s131
      %p135 = scmp.eq.s32.totalorder %s27, 0
      %p136 = por %p134, %p135
      %p137 = scmp.ne.s32.totalorder %s129, %s131
      %p138 = scmp.eq.s32.totalorder %s32, 1
      %p139 = por %p137, %p138
      %p140 = scmp.ne.s32.totalorder %s131, %s132
      %p141 = scmp.eq.s32.totalorder %s32, 0
      %p142 = por %p140, %p141
      %p143 = scmp.ne.s32.totalorder %s131, %s132
      %p144 = scmp.eq.s32.totalorder %s33, 1
      %p145 = por %p143, %p144
      %p147 = scmp.ne.s32.totalorder %s132, %s146
      %p148 = scmp.eq.s32.totalorder %s33, 0
      %p149 = por %p147, %p148
      %s151 = sadd.s32 %s150, 1
      %p154 = scmp.eq.s32.totalorder %s27, 1
      %p155 = scmp.ne.s32.totalorder %s150, %s152
      %p156 = scmp.eq.s32.totalorder %s27, 0
      %p157 = por %p155, %p156
      %p158 = scmp.ne.s32.totalorder %s150, %s152
      %p159 = scmp.eq.s32.totalorder %s32, 1
      %p160 = por %p158, %p159
      %p161 = scmp.ne.s32.totalorder %s152, %s153
      %p162 = scmp.eq.s32.totalorder %s32, 0
      %p163 = por %p161, %p162
      %p164 = scmp.ne.s32.totalorder %s152, %s153
      %p165 = scmp.eq.s32.totalorder %s33, 1
      %p166 = por %p164, %p165
      %p168 = scmp.ne.s32.totalorder %s153, %s167
      %p169 = scmp.eq.s32.totalorder %s33, 0
      %p170 = por %p168, %p169
      %s172 = sadd.s32 %s171, 1
      %p175 = scmp.eq.s32.totalorder %s27, 1
      %p176 = scmp.ne.s32.totalorder %s171, %s173
      %p177 = scmp.eq.s32.totalorder %s27, 0
      %p178 = por %p176, %p177
      %p179 = scmp.ne.s32.totalorder %s171, %s173
      %p180 = scmp.eq.s32.totalorder %s32, 1
      %p181 = por %p179, %p180
      %p182 = scmp.ne.s32.totalorder %s173, %s174
      %p183 = scmp.eq.s32.totalorder %s32, 0
      %p184 = por %p182, %p183
      %p185 = scmp.ne.s32.totalorder %s173, %s174
      %p186 = scmp.eq.s32.totalorder %s33, 1
      %p187 = por %p185, %p186
      %p189 = scmp.ne.s32.totalorder %s174, %s188
      %p190 = scmp.eq.s32.totalorder %s33, 0
      %p191 = por %p189, %p190
      %s193 = sadd.s32 %s192, 1
      %p196 = scmp.eq.s32.totalorder %s27, 1
      %p197 = scmp.ne.s32.totalorder %s192, %s194
      %p198 = scmp.eq.s32.totalorder %s27, 0
      %p199 = por %p197, %p198
      %p200 = scmp.ne.s32.totalorder %s192, %s194
      %p201 = scmp.eq.s32.totalorder %s32, 1
      %p202 = por %p200, %p201
      %p203 = scmp.ne.s32.totalorder %s194, %s195
      %p204 = scmp.eq.s32.totalorder %s32, 0
      %p205 = por %p203, %p204
      %p206 = scmp.ne.s32.totalorder %s194, %s195
      %p207 = scmp.eq.s32.totalorder %s33, 1
      %p208 = por %p206, %p207
      %p210 = scmp.ne.s32.totalorder %s195, %s209
      %p211 = scmp.eq.s32.totalorder %s33, 0
      %p212 = por %p210, %p211
      %s214 = sadd.s32 %s213, 1
      %p217 = scmp.eq.s32.totalorder %s27, 1
      %p218 = scmp.ne.s32.totalorder %s213, %s215
      %p219 = scmp.eq.s32.totalorder %s27, 0
      %p220 = por %p218, %p219
      %p221 = scmp.ne.s32.totalorder %s213, %s215
      %p222 = scmp.eq.s32.totalorder %s32, 1
      %p223 = por %p221, %p222
      %p224 = scmp.ne.s32.totalorder %s215, %s216
      %p225 = scmp.eq.s32.totalorder %s32, 0
      %p226 = por %p224, %p225
      %p227 = scmp.ne.s32.totalorder %s215, %s216
      %p228 = scmp.eq.s32.totalorder %s33, 1
      %p229 = por %p227, %p228
      %p231 = scmp.ne.s32.totalorder %s216, %s230
      %p232 = scmp.eq.s32.totalorder %s33, 0
      %p233 = por %p231, %p232
      %s235 = sadd.s32 %s234, 1
      %p238 = scmp.eq.s32.totalorder %s27, 1
      %p239 = scmp.ne.s32.totalorder %s234, %s236
      %p240 = scmp.eq.s32.totalorder %s27, 0
      %p241 = por %p239, %p240
      %p242 = scmp.ne.s32.totalorder %s234, %s236
      %p243 = scmp.eq.s32.totalorder %s32, 1
      %p244 = por %p242, %p243
      %p245 = scmp.ne.s32.totalorder %s236, %s237
      %p246 = scmp.eq.s32.totalorder %s32, 0
      %p247 = por %p245, %p246
      %p248 = scmp.ne.s32.totalorder %s236, %s237
      %p249 = scmp.eq.s32.totalorder %s33, 1
      %p250 = por %p248, %p249
      %p252 = scmp.ne.s32.totalorder %s237, %s251
      %p253 = scmp.eq.s32.totalorder %s33, 0
      %p254 = por %p252, %p253
      %s256 = sadd.s32 %s255, 1
      %p259 = scmp.eq.s32.totalorder %s27, 1
      %p260 = scmp.ne.s32.totalorder %s255, %s257
      %p261 = scmp.eq.s32.totalorder %s27, 0
      %p262 = por %p260, %p261
      %p263 = scmp.ne.s32.totalorder %s255, %s257
      %p264 = scmp.eq.s32.totalorder %s32, 1
      %p265 = por %p263, %p264
      %p266 = scmp.ne.s32.totalorder %s257, %s258
      %p267 = scmp.eq.s32.totalorder %s32, 0
      %p268 = por %p266, %p267
      %p269 = scmp.ne.s32.totalorder %s257, %s258
      %p270 = scmp.eq.s32.totalorder %s33, 1
      %p271 = por %p269, %p270
      %p273 = scmp.ne.s32.totalorder %s258, %s272
      %p274 = scmp.eq.s32.totalorder %s33, 0
      %p275 = por %p273, %p274
      %s277 = sadd.s32 %s276, 1
      %p280 = scmp.eq.s32.totalorder %s27, 1
      %p281 = scmp.ne.s32.totalorder %s276, %s278
      %p282 = scmp.eq.s32.totalorder %s27, 0
      %p283 = por %p281, %p282
      %p284 = scmp.ne.s32.totalorder %s276, %s278
      %p285 = scmp.eq.s32.totalorder %s32, 1
      %p286 = por %p284, %p285
      %p287 = scmp.ne.s32.totalorder %s278, %s279
      %p288 = scmp.eq.s32.totalorder %s32, 0
      %p289 = por %p287, %p288
      %p290 = scmp.ne.s32.totalorder %s278, %s279
      %p291 = scmp.eq.s32.totalorder %s33, 1
      %p292 = por %p290, %p291
      %p294 = scmp.ne.s32.totalorder %s279, %s293
      %p295 = scmp.eq.s32.totalorder %s33, 0
      %p296 = por %p294, %p295
      %s298 = sadd.s32 %s297, 1
      %p301 = scmp.eq.s32.totalorder %s27, 1
      %p302 = scmp.ne.s32.totalorder %s297, %s299
      %p303 = scmp.eq.s32.totalorder %s27, 0
      %p304 = por %p302, %p303
      %p305 = scmp.ne.s32.totalorder %s297, %s299
      %p306 = scmp.eq.s32.totalorder %s32, 1
      %p307 = por %p305, %p306
      %p308 = scmp.ne.s32.totalorder %s299, %s300
      %p309 = scmp.eq.s32.totalorder %s32, 0
      %p310 = por %p308, %p309
      %p311 = scmp.ne.s32.totalorder %s299, %s300
      %p312 = scmp.eq.s32.totalorder %s33, 1
      %p313 = por %p311, %p312
      %p315 = scmp.ne.s32.totalorder %s300, %s314
      %p316 = scmp.eq.s32.totalorder %s33, 0
      %p317 = por %p315, %p316
      %s318 = ssub.s32 %s27, %s34
      %p319 = scmp.eq.s32.totalorder %s318, 0
      %s321 = sadd.s32 %s320, 1
      %s322 = scalar_select %p319, %s320, %s321
      %p325 = pneg %p319
      %p326 = scmp.eq.s32.totalorder %s27, 1
      %p327 = por %p325, %p326
      %p328 = scmp.ne.s32.totalorder %s320, %s323
      %p329 = scmp.eq.s32.totalorder %s27, 0
      %p330 = por %p328, %p329
      %p331 = scmp.ne.s32.totalorder %s320, %s323
      %p332 = scmp.eq.s32.totalorder %s32, 1
      %p333 = por %p331, %p332
      %p334 = scmp.ne.s32.totalorder %s323, %s324
      %p335 = scmp.eq.s32.totalorder %s32, 0
      %p336 = por %p334, %p335
      %p337 = scmp.ne.s32.totalorder %s323, %s324
      %p338 = scmp.eq.s32.totalorder %s33, 1
      %p339 = por %p337, %p338
      %p341 = scmp.ne.s32.totalorder %s324, %s340
      %p342 = scmp.eq.s32.totalorder %s33, 0
      %p343 = por %p341, %p342
      %p344 = scmp.le.s32.totalorder 1, %s27
      %p345 = scmp.lt.s32.totalorder %s27, 3
      %p346 = pnand %p344, %p345
      %p347 = pneg %p346
      // Predicated region
      $region9: #{tpu_custom_call.1} parent=5 // pred_check
        _
      $region10: #{tpu_custom_call.1} parent=5 // pred_check_branch
        %349 = sbr.rel (%p346) target = $region12
      $region11: #{tpu_custom_call.1} parent=5 // pred_region
        %s350 = ssub.s32 %s27, 1
        // Predicated region
        $region13: #{tpu_custom_call.1} parent=11 // pred_check
          %p351 = pneg %p100
        $region14: #{tpu_custom_call.1} parent=11 // pred_check_branch
          %353 = sbr.rel (%p351) target = $region16
        $region15: #{tpu_custom_call.1} parent=11 // pred_region
          _
        $region16: #{tpu_custom_call.1} parent=11 // pred_fallthru
          _
        // Predicated region
        $region17: #{tpu_custom_call.1} parent=11 // pred_check
          %p354 = pneg %p121
        $region18: #{tpu_custom_call.1} parent=11 // pred_check_branch
          %356 = sbr.rel (%p354) target = $region20
        $region19: #{tpu_custom_call.1} parent=11 // pred_region
          _
        $region20: #{tpu_custom_call.1} parent=11 // pred_fallthru
          _
        // Predicated region
        $region21: #{tpu_custom_call.1} parent=11 // pred_check
          %p357 = pneg %p142
        $region22: #{tpu_custom_call.1} parent=11 // pred_check_branch
          %359 = sbr.rel (%p357) target = $region24
        $region23: #{tpu_custom_call.1} parent=11 // pred_region
          %s361 = ssub.s32 16384, 16384
          %362 = vsyncadd [#allocation6], %s361
          %s363 = sshll.u32 [#allocation5], 4
          %s364 = int_to_ptr.vmem [resolvable:$true] %s363
          %369 = dma.hbm_to_vmem [thread:$0]  %s4, 16384, %s364, [#allocation6], 256, 256, 16
        $region24: #{tpu_custom_call.1} parent=11 // pred_fallthru
          _
        // Predicated region
        $region25: #{tpu_custom_call.1} parent=11 // pred_check
          %p370 = pneg %p163
        $region26: #{tpu_custom_call.1} parent=11 // pred_check_branch
          %372 = sbr.rel (%p370) target = $region28
        $region27: #{tpu_custom_call.1} parent=11 // pred_region
          _
        $region28: #{tpu_custom_call.1} parent=11 // pred_fallthru
          _
        // Predicated region
        $region29: #{tpu_custom_call.1} parent=11 // pred_check
          %p373 = pneg %p184
        $region30: #{tpu_custom_call.1} parent=11 // pred_check_branch
          %375 = sbr.rel (%p373) target = $region32
        $region31: #{tpu_custom_call.1} parent=11 // pred_region
          %s377 = ssub.s32 16384, 16384
          %378 = vsyncadd [#allocation9], %s377
          %s379 = sshll.u32 [#allocation8], 4
          %s380 = int_to_ptr.vmem [resolvable:$true] %s379
          %385 = dma.hbm_to_vmem [thread:$0]  %s6, 16384, %s380, [#allocation9], 256, 256, 16
        $region32: #{tpu_custom_call.1} parent=11 // pred_fallthru
          _
        // Predicated region
        $region33: #{tpu_custom_call.1} parent=11 // pred_check
          %p386 = pneg %p205
        $region34: #{tpu_custom_call.1} parent=11 // pred_check_branch
          %388 = sbr.rel (%p386) target = $region36
        $region35: #{tpu_custom_call.1} parent=11 // pred_region
          _
        $region36: #{tpu_custom_call.1} parent=11 // pred_fallthru
          _
        // Predicated region
        $region37: #{tpu_custom_call.1} parent=11 // pred_check
          %p389 = pneg %p226
        $region38: #{tpu_custom_call.1} parent=11 // pred_check_branch
          %391 = sbr.rel (%p389) target = $region40
        $region39: #{tpu_custom_call.1} parent=11 // pred_region
          _
        $region40: #{tpu_custom_call.1} parent=11 // pred_fallthru
          _
        // Predicated region
        $region41: #{tpu_custom_call.1} parent=11 // pred_check
          %p392 = pneg %p247
        $region42: #{tpu_custom_call.1} parent=11 // pred_check_branch
          %394 = sbr.rel (%p392) target = $region44
        $region43: #{tpu_custom_call.1} parent=11 // pred_region
          _
        $region44: #{tpu_custom_call.1} parent=11 // pred_fallthru
          _
        // Predicated region
        $region45: #{tpu_custom_call.1} parent=11 // pred_check
          %p395 = pneg %p268
        $region46: #{tpu_custom_call.1} parent=11 // pred_check_branch
          %397 = sbr.rel (%p395) target = $region48
        $region47: #{tpu_custom_call.1} parent=11 // pred_region
          _
        $region48: #{tpu_custom_call.1} parent=11 // pred_fallthru
          _
        // Predicated region
        $region49: #{tpu_custom_call.1} parent=11 // pred_check
          %p398 = pneg %p289
        $region50: #{tpu_custom_call.1} parent=11 // pred_check_branch
          %400 = sbr.rel (%p398) target = $region52
        $region51: #{tpu_custom_call.1} parent=11 // pred_region
          _
        $region52: #{tpu_custom_call.1} parent=11 // pred_fallthru
          _
        // Predicated region
        $region53: #{tpu_custom_call.1} parent=11 // pred_check
          %p401 = pneg %p310
        $region54: #{tpu_custom_call.1} parent=11 // pred_check_branch
          %403 = sbr.rel (%p401) target = $region56
        $region55: #{tpu_custom_call.1} parent=11 // pred_region
          _
        $region56: #{tpu_custom_call.1} parent=11 // pred_fallthru
          _
      $region12: #{tpu_custom_call.1} parent=5 // pred_fallthru
        _
      %p404 = scmp.lt.s32.totalorder %s27, 2
      // Predicated region
      $region57: #{tpu_custom_call.1} parent=5 // pred_check
        %p405 = pneg %p404
      $region58: #{tpu_custom_call.1} parent=5 // pred_check_branch
        %407 = sbr.rel (%p405) target = $region60
      $region59: #{tpu_custom_call.1} parent=5 // pred_region
        // Predicated region
        $region61: #{tpu_custom_call.1} parent=59 // pred_check
          %p408 = pneg %p47
        $region62: #{tpu_custom_call.1} parent=59 // pred_check_branch
          %410 = sbr.rel (%p408) target = $region64
        $region63: #{tpu_custom_call.1} parent=59 // pred_region
          %s411 = smul.u32 16, %s27
          %p412 = scmp.lt.s32.totalorder %s411, 31
          %s413 = scalar_select %p412, %s411, 31
          %s414 = smul.addr %s413, 4
          %s415 = scalar_lea.vmem %s0, %s414
          %s416 = smul.u32 16, %s27
        $region64: #{tpu_custom_call.1} parent=59 // pred_fallthru
          _
        // Predicated region
        $region65: #{tpu_custom_call.1} parent=59 // pred_check
          %p417 = pneg %p73
        $region66: #{tpu_custom_call.1} parent=59 // pred_check_branch
          %419 = sbr.rel (%p417) target = $region68
        $region67: #{tpu_custom_call.1} parent=59 // pred_region
          %s420 = smul.u32 16, %s27
          %p421 = scmp.lt.s32.totalorder %s420, 31
          %s422 = scalar_select %p421, %s420, 31
          %s423 = smul.addr %s422, 8
          %s424 = scalar_lea.vmem %s1, %s423
          %s425 = smul.u32 16, %s27
        $region68: #{tpu_custom_call.1} parent=59 // pred_fallthru
          _
      $region60: #{tpu_custom_call.1} parent=5 // pred_fallthru
        _
      %p426 = scmp.le.s32.totalorder 1, %s27
      %p427 = scmp.lt.s32.totalorder %s27, 3
      %p428 = pnand %p426, %p427
      %p429 = pneg %p428
      // Predicated region
      $region69: #{tpu_custom_call.1} parent=5 // pred_check
        _
      $region70: #{tpu_custom_call.1} parent=5 // pred_check_branch
        %431 = sbr.rel (%p428) target = $region72
      $region71: #{tpu_custom_call.1} parent=5 // pred_region
        %s432 = ssub.s32 %s27, 1
        // Predicated region
        $region73: #{tpu_custom_call.1} parent=71 // pred_check
          %p433 = pneg %p142
        $region74: #{tpu_custom_call.1} parent=71 // pred_check_branch
          %435 = sbr.rel (%p433) target = $region76
        $region75: #{tpu_custom_call.1} parent=71 // pred_region
          %436 = dma.done [#allocation6], 16384
        $region76: #{tpu_custom_call.1} parent=71 // pred_fallthru
          _
        // Predicated region
        $region77: #{tpu_custom_call.1} parent=71 // pred_check
          %p437 = pneg %p184
        $region78: #{tpu_custom_call.1} parent=71 // pred_check_branch
          %439 = sbr.rel (%p437) target = $region80
        $region79: #{tpu_custom_call.1} parent=71 // pred_region
          %440 = dma.done [#allocation9], 16384
        $region80: #{tpu_custom_call.1} parent=71 // pred_fallthru
          _
        %s441 = smul.u32 16, %s32
        %p442 = scmp.lt.s32.totalorder %s441, 31
        %s443 = scalar_select %p442, %s441, 31
        %s444 = smul.addr %s443, 4
        %s445 = scalar_lea.vmem %s0, %s444
        %p446 = pneg %p53
        %p447 = pneg %p50
        %s448 = smul.u32 16, %s32
        %p449 = scmp.lt.s32.totalorder %s448, 31
        %s450 = scalar_select %p449, %s448, 31
        %s451 = smul.addr %s450, 8
        %s452 = scalar_lea.vmem %s1, %s451
        %p453 = pneg %p79
        %p454 = pneg %p76
        %p455 = pneg %p100
        %p456 = pneg %p97
        %p457 = pneg %p121
        %p458 = pneg %p118
        %p459 = pneg %p142
        %p460 = pneg %p139
        %p461 = pneg %p163
        %p462 = pneg %p160
        %p463 = pneg %p184
        %p464 = pneg %p181
        %p465 = pneg %p205
        %p466 = pneg %p202
        %p467 = pneg %p226
        %p468 = pneg %p223
        %p469 = pneg %p247
        %p470 = pneg %p244
        %p471 = pneg %p268
        %p472 = pneg %p265
        %p473 = pneg %p289
        %p474 = pneg %p286
        %p475 = pneg %p310
        %p476 = pneg %p307
        %p477 = pneg %p336
        %p478 = pneg %p333
        %s479 = sand.u32 %s323, 1
        %s480 = scalar_lea.sflag [#allocation7], %s479
        %s481 = sand.u32 %s323, 1
        %s482 = smul.addr %s481, 128
        %s483 = scalar_lea.vmem [#allocation10], %s482
        %s484 = smul.u32 16, %s32
        %p485 = scmp.lt.s32.totalorder %s484, 31
        %s486 = scalar_select %p485, %s484, 31
        %s487 = smul.addr %s486, 4
        %s488 = scalar_lea.vmem %s0, %s487
        %s489 = smul.u32 16, %s32
        %s490 = smul.u32 16, %s32
        %p491 = scmp.lt.s32.totalorder %s490, 31
        %s492 = scalar_select %p491, %s490, 31
        %s493 = smul.addr %s492, 8
        %s494 = scalar_lea.vmem %s1, %s493
        %s495 = smul.u32 16, %s32
        %s496 = smul.u32 16, %s32
        %v498 = vld [vmem:[%s488] sm:$0xf]
        %v499 = vld [vmem:[%s488 + $0x4] sm:$0xf]
        %v500 = vld [vmem:[%s488 + $0x8] sm:$0xf]
        %v501 = vld [vmem:[%s488 + $0xc] sm:$0xf]
        %v502 = vld [vmem:[%s488 + $0x10] sm:$0xf]
        %v503 = vld [vmem:[%s488 + $0x14] sm:$0xf]
        %v504 = vld [vmem:[%s488 + $0x18] sm:$0xf]
        %v505 = vld [vmem:[%s488 + $0x1c] sm:$0xf]
        %v506 = vld [vmem:[%s488 + $0x20] sm:$0xf]
        %v507 = vld [vmem:[%s488 + $0x24] sm:$0xf]
        %v508 = vld [vmem:[%s488 + $0x28] sm:$0xf]
        %v509 = vld [vmem:[%s488 + $0x2c] sm:$0xf]
        %v510 = vld [vmem:[%s488 + $0x30] sm:$0xf]
        %v511 = vld [vmem:[%s488 + $0x34] sm:$0xf]
        %v512 = vld [vmem:[%s488 + $0x38] sm:$0xf]
        %v513 = vld [vmem:[%s488 + $0x3c] sm:$0xf]
        %v514 = vld [vmem:[%s2] sm:$0xff]
        %v515 = vld [vmem:[%s2 + $0x8] sm:$0xff]
        %v516 = vld [vmem:[%s2 + $0x10] sm:$0xff]
        %v517 = vld [vmem:[%s2 + $0x18] sm:$0xff]
        %v518 = vld [vmem:[%s2 + $0x20] sm:$0xff]
        %v519 = vld [vmem:[%s2 + $0x28] sm:$0xff]
        %v520 = vld [vmem:[%s2 + $0x30] sm:$0xff]
        %v521 = vld [vmem:[%s2 + $0x38] sm:$0xff]
        %v522 = vld [vmem:[%s3] sm:$0xf]
        %v524 = vlaneseq
        %v525 = vshrl.u32 %v524, 7
        %v526 = vsub.s32 0, %v525
        %v527 = vrot.slane %v522, %v526
        %v528 = vlaneseq
        %v529 = vshrl.u32 %v528, 7
        %v530 = vsub.s32 1, %v529
        %v531 = vrot.slane %v522, %v530
        %v532 = vlaneseq
        %v533 = vshrl.u32 %v532, 7
        %v534 = vsub.s32 2, %v533
        %v535 = vrot.slane %v522, %v534
        %v536 = vlaneseq
        %v537 = vshrl.u32 %v536, 7
        %v538 = vsub.s32 3, %v537
        %v539 = vrot.slane %v522, %v538
        %v560 = vunpack.c.l.b16 %v498
        %v561 = vunpack.c.l.b16 %v499
        %v562 = vunpack.c.l.b16 %v500
        %v563 = vunpack.c.l.b16 %v501
        %v564 = vunpack.c.l.b16 %v502
        %v565 = vunpack.c.l.b16 %v503
        %v566 = vunpack.c.l.b16 %v504
        %v567 = vunpack.c.l.b16 %v505
        %v568 = vunpack.c.l.b16 %v506
        %v569 = vunpack.c.l.b16 %v507
        %v570 = vunpack.c.l.b16 %v508
        %v571 = vunpack.c.l.b16 %v509
        %v572 = vunpack.c.l.b16 %v510
        %v573 = vunpack.c.l.b16 %v511
        %v574 = vunpack.c.l.b16 %v512
        %v575 = vunpack.c.l.b16 %v513
        %v576 = vpack.c.b16 %v561, %v560
        %v577 = vpack.c.b16 %v563, %v562
        %v578 = vpack.c.b16 %v565, %v564
        %v579 = vpack.c.b16 %v567, %v566
        %v580 = vpack.c.b16 %v569, %v568
        %v581 = vpack.c.b16 %v571, %v570
        %v582 = vpack.c.b16 %v573, %v572
        %v583 = vpack.c.b16 %v575, %v574
        %v592 = vunpack.c.l.b16 %v514
        %v593 = vunpack.c.h.b16 %v514
        %v594 = vunpack.c.l.b16 %v515
        %v595 = vunpack.c.h.b16 %v515
        %v596 = vunpack.c.l.b16 %v516
        %v597 = vunpack.c.h.b16 %v516
        %v598 = vunpack.c.l.b16 %v517
        %v599 = vunpack.c.h.b16 %v517
        %v600 = vunpack.c.l.b16 %v518
        %v601 = vunpack.c.h.b16 %v518
        %v602 = vunpack.c.l.b16 %v519
        %v603 = vunpack.c.h.b16 %v519
        %v604 = vunpack.c.l.b16 %v520
        %v605 = vunpack.c.h.b16 %v520
        %v606 = vunpack.c.l.b16 %v521
        %v607 = vunpack.c.h.b16 %v521
        %v608 = vpack.c.b16 %v596, %v592
        %v609 = vpack.c.b16 %v597, %v593
        %v610 = vpack.c.b16 %v598, %v594
        %v611 = vpack.c.b16 %v599, %v595
        %v612 = vpack.c.b16 %v604, %v600
        %v613 = vpack.c.b16 %v605, %v601
        %v614 = vpack.c.b16 %v606, %v602
        %v615 = vpack.c.b16 %v607, %v603
        %vm624 = vcmask 261120
        %v626 = vsel %vm624, %v576, 0
        %v629 = vsel %vm624, %v577, 0
        %v632 = vsel %vm624, %v578, 0
        %v635 = vsel %vm624, %v579, 0
        %v638 = vsel %vm624, %v580, 0
        %v641 = vsel %vm624, %v581, 0
        %v644 = vsel %vm624, %v582, 0
        %v647 = vsel %vm624, %v583, 0
        %649 = vmatprep.subr.bf16.mxu0 %v609
        %650 = vmatpush1.bf16.msra.mxu0 %v608
        %651 = vmatprep.subr.bf16.mxu0 %v613
        %652 = vmatpush1.bf16.msra.mxu0 %v612
        %653 = vmatprep.subr.bf16.mxu0 0
        %654 = vmatpush1.bf16.msra.mxu0 0
        %655 = vmatprep.subr.bf16.mxu0 0
        %656 = vmatpush1.bf16.msra.mxu0 0
        %657 = vmatprep.subr.bf16.mxu0 0
        %658 = vmatpush1.bf16.msra.mxu0 0
        %659 = vmatprep.subr.bf16.mxu0 0
        %660 = vmatpush1.bf16.msra.mxu0 0
        %661 = vmatprep.subr.bf16.mxu0 0
        %662 = vmatpush1.bf16.msra.mxu0 0
        %663 = vmatprep.subr.bf16.mxu0 0
        %664 = vmatpush1.bf16.msra.mxu0 0
        %665 = vmatprep.subr.bf16.mxu0 0
        %666 = vmatpush1.bf16.msra.mxu0 0
        %667 = vmatprep.subr.bf16.mxu0 0
        %668 = vmatpush1.bf16.msra.mxu0 0
        %669 = vmatprep.subr.bf16.mxu0 0
        %670 = vmatpush1.bf16.msra.mxu0 0
        %671 = vmatprep.subr.bf16.mxu0 0
        %672 = vmatpush1.bf16.msra.mxu0 0
        %673 = vmatprep.subr.bf16.mxu0 0
        %674 = vmatpush1.bf16.msra.mxu0 0
        %675 = vmatprep.subr.bf16.mxu0 0
        %676 = vmatpush1.bf16.msra.mxu0 0
        %677 = vmatprep.subr.bf16.mxu0 0
        %678 = vmatpush1.bf16.msra.mxu0 0
        %679 = vmatprep.subr.bf16.mxu0 0
        %680 = vmatpush1.bf16.msra.mxu0 0
        %681 = vmatprep.mubr.bf16.mxu0 0
        %682 = vmatmul.mubr.bf16.gmra.mrb[0].mxu0 %v626
        %v683 = vpop.f32.mrb[0].mxu0
        %v684 = vadd.f32 %v527, %v683
        %v685 = vpop.f32.mrb[0].mxu0
        %v686 = vadd.f32 %v531, %v685
        %v687 = vpop.f32.mrb[0].mxu0
        %v688 = vadd.f32 %v527, %v687
        %v689 = vpop.f32.mrb[0].mxu0
        %v690 = vadd.f32 %v531, %v689
        %691 = vmatprep.mubr.bf16.mxu0 0
        %692 = vmatmul.mubr.bf16.gmra.mrb[0].mxu0 %v629
        %v693 = vpop.f32.mrb[0].mxu0
        %v694 = vadd.f32 %v527, %v693
        %v695 = vpop.f32.mrb[0].mxu0
        %v696 = vadd.f32 %v531, %v695
        %v697 = vpop.f32.mrb[0].mxu0
        %v698 = vadd.f32 %v527, %v697
        %v699 = vpop.f32.mrb[0].mxu0
        %v700 = vadd.f32 %v531, %v699
        %701 = vmatprep.mubr.bf16.mxu0 0
        %702 = vmatmul.mubr.bf16.gmra.mrb[0].mxu0 %v632
        %v703 = vpop.f32.mrb[0].mxu0
        %v704 = vadd.f32 %v527, %v703
        %v705 = vpop.f32.mrb[0].mxu0
        %v706 = vadd.f32 %v531, %v705
        %v707 = vpop.f32.mrb[0].mxu0
        %v708 = vadd.f32 %v527, %v707
        %v709 = vpop.f32.mrb[0].mxu0
        %v710 = vadd.f32 %v531, %v709
        %711 = vmatprep.mubr.bf16.mxu0 0
        %712 = vmatmul.mubr.bf16.gmra.mrb[0].mxu0 %v635
        %v713 = vpop.f32.mrb[0].mxu0
        %v714 = vadd.f32 %v527, %v713
        %v715 = vpop.f32.mrb[0].mxu0
        %v716 = vadd.f32 %v531, %v715
        %v717 = vpop.f32.mrb[0].mxu0
        %v718 = vadd.f32 %v527, %v717
        %v719 = vpop.f32.mrb[0].mxu0
        %v720 = vadd.f32 %v531, %v719
        %721 = vmatprep.mubr.bf16.mxu0 0
        %722 = vmatmul.mubr.bf16.gmra.mrb[0].mxu0 %v638
        %v723 = vpop.f32.mrb[0].mxu0
        %v724 = vadd.f32 %v527, %v723
        %v725 = vpop.f32.mrb[0].mxu0
        %v726 = vadd.f32 %v531, %v725
        %v727 = vpop.f32.mrb[0].mxu0
        %v728 = vadd.f32 %v527, %v727
        %v729 = vpop.f32.mrb[0].mxu0
        %v730 = vadd.f32 %v531, %v729
        %731 = vmatprep.mubr.bf16.mxu0 0
        %732 = vmatmul.mubr.bf16.gmra.mrb[0].mxu0 %v641
        %v733 = vpop.f32.mrb[0].mxu0
        %v734 = vadd.f32 %v527, %v733
        %v735 = vpop.f32.mrb[0].mxu0
        %v736 = vadd.f32 %v531, %v735
        %v737 = vpop.f32.mrb[0].mxu0
        %v738 = vadd.f32 %v527, %v737
        %v739 = vpop.f32.mrb[0].mxu0
        %v740 = vadd.f32 %v531, %v739
        %741 = vmatprep.mubr.bf16.mxu0 0
        %742 = vmatmul.mubr.bf16.gmra.mrb[0].mxu0 %v644
        %v743 = vpop.f32.mrb[0].mxu0
        %v744 = vadd.f32 %v527, %v743
        %v745 = vpop.f32.mrb[0].mxu0
        %v746 = vadd.f32 %v531, %v745
        %v747 = vpop.f32.mrb[0].mxu0
        %v748 = vadd.f32 %v527, %v747
        %v749 = vpop.f32.mrb[0].mxu0
        %v750 = vadd.f32 %v531, %v749
        %751 = vmatprep.mubr.bf16.mxu0 0
        %752 = vmatmul.mubr.bf16.gmra.mrb[0].mxu0 %v647
        %v753 = vpop.f32.mrb[0].mxu0
        %v754 = vadd.f32 %v527, %v753
        %v755 = vpop.f32.mrb[0].mxu0
        %v756 = vadd.f32 %v531, %v755
        %v757 = vpop.f32.mrb[0].mxu0
        %v758 = vadd.f32 %v527, %v757
        %v759 = vpop.f32.mrb[0].mxu0
        %v760 = vadd.f32 %v531, %v759
        %761 = vdwg.mxu0
        %762 = vmatprep.subr.bf16.mxu0 %v611
        %763 = vmatpush1.bf16.msra.mxu0 %v610
        %764 = vmatprep.subr.bf16.mxu0 %v615
        %765 = vmatpush1.bf16.msra.mxu0 %v614
        %766 = vmatprep.subr.bf16.mxu0 0
        %767 = vmatpush1.bf16.msra.mxu0 0
        %768 = vmatprep.subr.bf16.mxu0 0
        %769 = vmatpush1.bf16.msra.mxu0 0
        %770 = vmatprep.subr.bf16.mxu0 0
        %771 = vmatpush1.bf16.msra.mxu0 0
        %772 = vmatprep.subr.bf16.mxu0 0
        %773 = vmatpush1.bf16.msra.mxu0 0
        %774 = vmatprep.subr.bf16.mxu0 0
        %775 = vmatpush1.bf16.msra.mxu0 0
        %776 = vmatprep.subr.bf16.mxu0 0
        %777 = vmatpush1.bf16.msra.mxu0 0
        %778 = vmatprep.subr.bf16.mxu0 0
        %779 = vmatpush1.bf16.msra.mxu0 0
        %780 = vmatprep.subr.bf16.mxu0 0
        %781 = vmatpush1.bf16.msra.mxu0 0
        %782 = vmatprep.subr.bf16.mxu0 0
        %783 = vmatpush1.bf16.msra.mxu0 0
        %784 = vmatprep.subr.bf16.mxu0 0
        %785 = vmatpush1.bf16.msra.mxu0 0
        %786 = vmatprep.subr.bf16.mxu0 0
        %787 = vmatpush1.bf16.msra.mxu0 0
        %788 = vmatprep.subr.bf16.mxu0 0
        %789 = vmatpush1.bf16.msra.mxu0 0
        %790 = vmatprep.subr.bf16.mxu0 0
        %791 = vmatpush1.bf16.msra.mxu0 0
        %792 = vmatprep.subr.bf16.mxu0 0
        %793 = vmatpush1.bf16.msra.mxu0 0
        %794 = vmatprep.mubr.bf16.mxu0 0
        %795 = vmatmul.mubr.bf16.gmra.mrb[0].mxu0 %v626
        %v796 = vpop.f32.mrb[0].mxu0
        %v797 = vadd.f32 %v535, %v796
        %v798 = vpop.f32.mrb[0].mxu0
        %v799 = vadd.f32 %v539, %v798
        %v800 = vpop.f32.mrb[0].mxu0
        %v801 = vadd.f32 %v535, %v800
        %v802 = vpop.f32.mrb[0].mxu0
        %v803 = vadd.f32 %v539, %v802
        %804 = vmatprep.mubr.bf16.mxu0 0
        %805 = vmatmul.mubr.bf16.gmra.mrb[0].mxu0 %v629
        %v806 = vpop.f32.mrb[0].mxu0
        %v807 = vadd.f32 %v535, %v806
        %v808 = vpop.f32.mrb[0].mxu0
        %v809 = vadd.f32 %v539, %v808
        %v810 = vpop.f32.mrb[0].mxu0
        %v811 = vadd.f32 %v535, %v810
        %v812 = vpop.f32.mrb[0].mxu0
        %v813 = vadd.f32 %v539, %v812
        %814 = vmatprep.mubr.bf16.mxu0 0
        %815 = vmatmul.mubr.bf16.gmra.mrb[0].mxu0 %v632
        %v816 = vpop.f32.mrb[0].mxu0
        %v817 = vadd.f32 %v535, %v816
        %v818 = vpop.f32.mrb[0].mxu0
        %v819 = vadd.f32 %v539, %v818
        %v820 = vpop.f32.mrb[0].mxu0
        %v821 = vadd.f32 %v535, %v820
        %v822 = vpop.f32.mrb[0].mxu0
        %v823 = vadd.f32 %v539, %v822
        %824 = vmatprep.mubr.bf16.mxu0 0
        %825 = vmatmul.mubr.bf16.gmra.mrb[0].mxu0 %v635
        %v826 = vpop.f32.mrb[0].mxu0
        %v827 = vadd.f32 %v535, %v826
        %v828 = vpop.f32.mrb[0].mxu0
        %v829 = vadd.f32 %v539, %v828
        %v830 = vpop.f32.mrb[0].mxu0
        %v831 = vadd.f32 %v535, %v830
        %v832 = vpop.f32.mrb[0].mxu0
        %v833 = vadd.f32 %v539, %v832
        %834 = vmatprep.mubr.bf16.mxu0 0
        %835 = vmatmul.mubr.bf16.gmra.mrb[0].mxu0 %v638
        %v836 = vpop.f32.mrb[0].mxu0
        %v837 = vadd.f32 %v535, %v836
        %v838 = vpop.f32.mrb[0].mxu0
        %v839 = vadd.f32 %v539, %v838
        %v840 = vpop.f32.mrb[0].mxu0
        %v841 = vadd.f32 %v535, %v840
        %v842 = vpop.f32.mrb[0].mxu0
        %v843 = vadd.f32 %v539, %v842
        %844 = vmatprep.mubr.bf16.mxu0 0
        %845 = vmatmul.mubr.bf16.gmra.mrb[0].mxu0 %v641
        %v846 = vpop.f32.mrb[0].mxu0
        %v847 = vadd.f32 %v535, %v846
        %v848 = vpop.f32.mrb[0].mxu0
        %v849 = vadd.f32 %v539, %v848
        %v850 = vpop.f32.mrb[0].mxu0
        %v851 = vadd.f32 %v535, %v850
        %v852 = vpop.f32.mrb[0].mxu0
        %v853 = vadd.f32 %v539, %v852
        %854 = vmatprep.mubr.bf16.mxu0 0
        %855 = vmatmul.mubr.bf16.gmra.mrb[0].mxu0 %v644
        %v856 = vpop.f32.mrb[0].mxu0
        %v857 = vadd.f32 %v535, %v856
        %v858 = vpop.f32.mrb[0].mxu0
        %v859 = vadd.f32 %v539, %v858
        %v860 = vpop.f32.mrb[0].mxu0
        %v861 = vadd.f32 %v535, %v860
        %v862 = vpop.f32.mrb[0].mxu0
        %v863 = vadd.f32 %v539, %v862
        %864 = vmatprep.mubr.bf16.mxu0 0
        %865 = vmatmul.mubr.bf16.gmra.mrb[0].mxu0 %v647
        %v866 = vpop.f32.mrb[0].mxu0
        %v867 = vadd.f32 %v535, %v866
        %v868 = vpop.f32.mrb[0].mxu0
        %v869 = vadd.f32 %v539, %v868
        %v870 = vpop.f32.mrb[0].mxu0
        %v871 = vadd.f32 %v535, %v870
        %v872 = vpop.f32.mrb[0].mxu0
        %v873 = vadd.f32 %v539, %v872
        %874 = vdwg.mxu0
        %v875 = vmax.f32 %v684, 0.0
        %v876 = vmax.f32 %v686, 0.0
        %v877 = vmax.f32 %v797, 0.0
        %v878 = vmax.f32 %v799, 0.0
        %v879 = vmax.f32 %v688, 0.0
        %v880 = vmax.f32 %v690, 0.0
        %v881 = vmax.f32 %v801, 0.0
        %v882 = vmax.f32 %v803, 0.0
        %v883 = vmax.f32 %v694, 0.0
        %v884 = vmax.f32 %v696, 0.0
        %v885 = vmax.f32 %v807, 0.0
        %v886 = vmax.f32 %v809, 0.0
        %v887 = vmax.f32 %v698, 0.0
        %v888 = vmax.f32 %v700, 0.0
        %v889 = vmax.f32 %v811, 0.0
        %v890 = vmax.f32 %v813, 0.0
        %v891 = vmax.f32 %v704, 0.0
        %v892 = vmax.f32 %v706, 0.0
        %v893 = vmax.f32 %v817, 0.0
        %v894 = vmax.f32 %v819, 0.0
        %v895 = vmax.f32 %v708, 0.0
        %v896 = vmax.f32 %v710, 0.0
        %v897 = vmax.f32 %v821, 0.0
        %v898 = vmax.f32 %v823, 0.0
        %v899 = vmax.f32 %v714, 0.0
        %v900 = vmax.f32 %v716, 0.0
        %v901 = vmax.f32 %v827, 0.0
        %v902 = vmax.f32 %v829, 0.0
        %v903 = vmax.f32 %v718, 0.0
        %v904 = vmax.f32 %v720, 0.0
        %v905 = vmax.f32 %v831, 0.0
        %v906 = vmax.f32 %v833, 0.0
        %v907 = vmax.f32 %v724, 0.0
        %v908 = vmax.f32 %v726, 0.0
        %v909 = vmax.f32 %v837, 0.0
        %v910 = vmax.f32 %v839, 0.0
        %v911 = vmax.f32 %v728, 0.0
        %v912 = vmax.f32 %v730, 0.0
        %v913 = vmax.f32 %v841, 0.0
        %v914 = vmax.f32 %v843, 0.0
        %v915 = vmax.f32 %v734, 0.0
        %v916 = vmax.f32 %v736, 0.0
        %v917 = vmax.f32 %v847, 0.0
        %v918 = vmax.f32 %v849, 0.0
        %v919 = vmax.f32 %v738, 0.0
        %v920 = vmax.f32 %v740, 0.0
        %v921 = vmax.f32 %v851, 0.0
        %v922 = vmax.f32 %v853, 0.0
        %v923 = vmax.f32 %v744, 0.0
        %v924 = vmax.f32 %v746, 0.0
        %v925 = vmax.f32 %v857, 0.0
        %v926 = vmax.f32 %v859, 0.0
        %v927 = vmax.f32 %v748, 0.0
        %v928 = vmax.f32 %v750, 0.0
        %v929 = vmax.f32 %v861, 0.0
        %v930 = vmax.f32 %v863, 0.0
        %v931 = vmax.f32 %v754, 0.0
        %v932 = vmax.f32 %v756, 0.0
        %v933 = vmax.f32 %v867, 0.0
        %v934 = vmax.f32 %v869, 0.0
        %v935 = vmax.f32 %v758, 0.0
        %v936 = vmax.f32 %v760, 0.0
        %v937 = vmax.f32 %v871, 0.0
        %v938 = vmax.f32 %v873, 0.0
        %v939 = vpack.c.bf16 %v879, %v875
        %v940 = vpack.c.bf16 %v880, %v876
        %v941 = vpack.c.bf16 %v881, %v877
        %v942 = vpack.c.bf16 %v882, %v878
        %v943 = vpack.c.bf16 %v887, %v883
        %v944 = vpack.c.bf16 %v888, %v884
        %v945 = vpack.c.bf16 %v889, %v885
        %v946 = vpack.c.bf16 %v890, %v886
        %v947 = vpack.c.bf16 %v895, %v891
        %v948 = vpack.c.bf16 %v896, %v892
        %v949 = vpack.c.bf16 %v897, %v893
        %v950 = vpack.c.bf16 %v898, %v894
        %v951 = vpack.c.bf16 %v903, %v899
        %v952 = vpack.c.bf16 %v904, %v900
        %v953 = vpack.c.bf16 %v905, %v901
        %v954 = vpack.c.bf16 %v906, %v902
        %v955 = vpack.c.bf16 %v911, %v907
        %v956 = vpack.c.bf16 %v912, %v908
        %v957 = vpack.c.bf16 %v913, %v909
        %v958 = vpack.c.bf16 %v914, %v910
        %v959 = vpack.c.bf16 %v919, %v915
        %v960 = vpack.c.bf16 %v920, %v916
        %v961 = vpack.c.bf16 %v921, %v917
        %v962 = vpack.c.bf16 %v922, %v918
        %v963 = vpack.c.bf16 %v927, %v923
        %v964 = vpack.c.bf16 %v928, %v924
        %v965 = vpack.c.bf16 %v929, %v925
        %v966 = vpack.c.bf16 %v930, %v926
        %v967 = vpack.c.bf16 %v935, %v931
        %v968 = vpack.c.bf16 %v936, %v932
        %v969 = vpack.c.bf16 %v937, %v933
        %v970 = vpack.c.bf16 %v938, %v934
        %v971 = vld [vmem:[#allocation5] sm:$0xff]
        %v972 = vld [vmem:[#allocation5 + $0x8] sm:$0xff]
        %v973 = vld [vmem:[#allocation5 + $0x10] sm:$0xff]
        %v974 = vld [vmem:[#allocation5 + $0x18] sm:$0xff]
        %v975 = vld [vmem:[#allocation5 + $0x20] sm:$0xff]
        %v976 = vld [vmem:[#allocation5 + $0x28] sm:$0xff]
        %v977 = vld [vmem:[#allocation5 + $0x30] sm:$0xff]
        %v978 = vld [vmem:[#allocation5 + $0x38] sm:$0xff]
        %v979 = vld [vmem:[#allocation5 + $0x40] sm:$0xff]
        %v980 = vld [vmem:[#allocation5 + $0x48] sm:$0xff]
        %v981 = vld [vmem:[#allocation5 + $0x50] sm:$0xff]
        %v982 = vld [vmem:[#allocation5 + $0x58] sm:$0xff]
        %v983 = vld [vmem:[#allocation5 + $0x60] sm:$0xff]
        %v984 = vld [vmem:[#allocation5 + $0x68] sm:$0xff]
        %v985 = vld [vmem:[#allocation5 + $0x70] sm:$0xff]
        %v986 = vld [vmem:[#allocation5 + $0x78] sm:$0xff]
        %v987 = vld [vmem:[#allocation5 + $0x80] sm:$0xff]
        %v988 = vld [vmem:[#allocation5 + $0x88] sm:$0xff]
        %v989 = vld [vmem:[#allocation5 + $0x90] sm:$0xff]
        %v990 = vld [vmem:[#allocation5 + $0x98] sm:$0xff]
        %v991 = vld [vmem:[#allocation5 + $0xa0] sm:$0xff]
        %v992 = vld [vmem:[#allocation5 + $0xa8] sm:$0xff]
        %v993 = vld [vmem:[#allocation5 + $0xb0] sm:$0xff]
        %v994 = vld [vmem:[#allocation5 + $0xb8] sm:$0xff]
        %v995 = vld [vmem:[#allocation5 + $0xc0] sm:$0xff]
        %v996 = vld [vmem:[#allocation5 + $0xc8] sm:$0xff]
        %v997 = vld [vmem:[#allocation5 + $0xd0] sm:$0xff]
        %v998 = vld [vmem:[#allocation5 + $0xd8] sm:$0xff]
        %v999 = vld [vmem:[#allocation5 + $0xe0] sm:$0xff]
        %v1000 = vld [vmem:[#allocation5 + $0xe8] sm:$0xff]
        %v1001 = vld [vmem:[#allocation5 + $0xf0] sm:$0xff]
        %v1002 = vld [vmem:[#allocation5 + $0xf8] sm:$0xff]
        %v1003 = vld [vmem:[#allocation5 + $0x100] sm:$0xff]
        %v1004 = vld [vmem:[#allocation5 + $0x108] sm:$0xff]
        %v1005 = vld [vmem:[#allocation5 + $0x110] sm:$0xff]
        %v1006 = vld [vmem:[#allocation5 + $0x118] sm:$0xff]
        %v1007 = vld [vmem:[#allocation5 + $0x120] sm:$0xff]
        %v1008 = vld [vmem:[#allocation5 + $0x128] sm:$0xff]
        %v1009 = vld [vmem:[#allocation5 + $0x130] sm:$0xff]
        %v1010 = vld [vmem:[#allocation5 + $0x138] sm:$0xff]
        %v1011 = vld [vmem:[#allocation5 + $0x140] sm:$0xff]
        %v1012 = vld [vmem:[#allocation5 + $0x148] sm:$0xff]
        %v1013 = vld [vmem:[#allocation5 + $0x150] sm:$0xff]
        %v1014 = vld [vmem:[#allocation5 + $0x158] sm:$0xff]
        %v1015 = vld [vmem:[#allocation5 + $0x160] sm:$0xff]
        %v1016 = vld [vmem:[#allocation5 + $0x168] sm:$0xff]
        %v1017 = vld [vmem:[#allocation5 + $0x170] sm:$0xff]
        %v1018 = vld [vmem:[#allocation5 + $0x178] sm:$0xff]
        %v1019 = vld [vmem:[#allocation5 + $0x180] sm:$0xff]
        %v1020 = vld [vmem:[#allocation5 + $0x188] sm:$0xff]
        %v1021 = vld [vmem:[#allocation5 + $0x190] sm:$0xff]
        %v1022 = vld [vmem:[#allocation5 + $0x198] sm:$0xff]
        %v1023 = vld [vmem:[#allocation5 + $0x1a0] sm:$0xff]
        %v1024 = vld [vmem:[#allocation5 + $0x1a8] sm:$0xff]
        %v1025 = vld [vmem:[#allocation5 + $0x1b0] sm:$0xff]
        %v1026 = vld [vmem:[#allocation5 + $0x1b8] sm:$0xff]
        %v1027 = vld [vmem:[#allocation5 + $0x1c0] sm:$0xff]
        %v1028 = vld [vmem:[#allocation5 + $0x1c8] sm:$0xff]
        %v1029 = vld [vmem:[#allocation5 + $0x1d0] sm:$0xff]
        %v1030 = vld [vmem:[#allocation5 + $0x1d8] sm:$0xff]
        %v1031 = vld [vmem:[#allocation5 + $0x1e0] sm:$0xff]
        %v1032 = vld [vmem:[#allocation5 + $0x1e8] sm:$0xff]
        %v1033 = vld [vmem:[#allocation5 + $0x1f0] sm:$0xff]
        %v1034 = vld [vmem:[#allocation5 + $0x1f8] sm:$0xff]
        %v1035 = vld [vmem:[#allocation5 + $0x200] sm:$0xff]
        %v1036 = vld [vmem:[#allocation5 + $0x208] sm:$0xff]
        %v1037 = vld [vmem:[#allocation5 + $0x210] sm:$0xff]
        %v1038 = vld [vmem:[#allocation5 + $0x218] sm:$0xff]
        %v1039 = vld [vmem:[#allocation5 + $0x220] sm:$0xff]
        %v1040 = vld [vmem:[#allocation5 + $0x228] sm:$0xff]
        %v1041 = vld [vmem:[#allocation5 + $0x230] sm:$0xff]
        %v1042 = vld [vmem:[#allocation5 + $0x238] sm:$0xff]
        %v1043 = vld [vmem:[#allocation5 + $0x240] sm:$0xff]
        %v1044 = vld [vmem:[#allocation5 + $0x248] sm:$0xff]
        %v1045 = vld [vmem:[#allocation5 + $0x250] sm:$0xff]
        %v1046 = vld [vmem:[#allocation5 + $0x258] sm:$0xff]
        %v1047 = vld [vmem:[#allocation5 + $0x260] sm:$0xff]
        %v1048 = vld [vmem:[#allocation5 + $0x268] sm:$0xff]
        %v1049 = vld [vmem:[#allocation5 + $0x270] sm:$0xff]
        %v1050 = vld [vmem:[#allocation5 + $0x278] sm:$0xff]
        %v1051 = vld [vmem:[#allocation5 + $0x280] sm:$0xff]
        %v1052 = vld [vmem:[#allocation5 + $0x288] sm:$0xff]
        %v1053 = vld [vmem:[#allocation5 + $0x290] sm:$0xff]
        %v1054 = vld [vmem:[#allocation5 + $0x298] sm:$0xff]
        %v1055 = vld [vmem:[#allocation5 + $0x2a0] sm:$0xff]
        %v1056 = vld [vmem:[#allocation5 + $0x2a8] sm:$0xff]
        %v1057 = vld [vmem:[#allocation5 + $0x2b0] sm:$0xff]
        %v1058 = vld [vmem:[#allocation5 + $0x2b8] sm:$0xff]
        %v1059 = vld [vmem:[#allocation5 + $0x2c0] sm:$0xff]
        %v1060 = vld [vmem:[#allocation5 + $0x2c8] sm:$0xff]
        %v1061 = vld [vmem:[#allocation5 + $0x2d0] sm:$0xff]
        %v1062 = vld [vmem:[#allocation5 + $0x2d8] sm:$0xff]
        %v1063 = vld [vmem:[#allocation5 + $0x2e0] sm:$0xff]
        %v1064 = vld [vmem:[#allocation5 + $0x2e8] sm:$0xff]
        %v1065 = vld [vmem:[#allocation5 + $0x2f0] sm:$0xff]
        %v1066 = vld [vmem:[#allocation5 + $0x2f8] sm:$0xff]
        %v1067 = vld [vmem:[#allocation5 + $0x300] sm:$0xff]
        %v1068 = vld [vmem:[#allocation5 + $0x308] sm:$0xff]
        %v1069 = vld [vmem:[#allocation5 + $0x310] sm:$0xff]
        %v1070 = vld [vmem:[#allocation5 + $0x318] sm:$0xff]
        %v1071 = vld [vmem:[#allocation5 + $0x320] sm:$0xff]
        %v1072 = vld [vmem:[#allocation5 + $0x328] sm:$0xff]
        %v1073 = vld [vmem:[#allocation5 + $0x330] sm:$0xff]
        %v1074 = vld [vmem:[#allocation5 + $0x338] sm:$0xff]
        %v1075 = vld [vmem:[#allocation5 + $0x340] sm:$0xff]
        %v1076 = vld [vmem:[#allocation5 + $0x348] sm:$0xff]
        %v1077 = vld [vmem:[#allocation5 + $0x350] sm:$0xff]
        %v1078 = vld [vmem:[#allocation5 + $0x358] sm:$0xff]
        %v1079 = vld [vmem:[#allocation5 + $0x360] sm:$0xff]
        %v1080 = vld [vmem:[#allocation5 + $0x368] sm:$0xff]
        %v1081 = vld [vmem:[#allocation5 + $0x370] sm:$0xff]
        %v1082 = vld [vmem:[#allocation5 + $0x378] sm:$0xff]
        %v1083 = vld [vmem:[#allocation5 + $0x380] sm:$0xff]
        %v1084 = vld [vmem:[#allocation5 + $0x388] sm:$0xff]
        %v1085 = vld [vmem:[#allocation5 + $0x390] sm:$0xff]
        %v1086 = vld [vmem:[#allocation5 + $0x398] sm:$0xff]
        %v1087 = vld [vmem:[#allocation5 + $0x3a0] sm:$0xff]
        %v1088 = vld [vmem:[#allocation5 + $0x3a8] sm:$0xff]
        %v1089 = vld [vmem:[#allocation5 + $0x3b0] sm:$0xff]
        %v1090 = vld [vmem:[#allocation5 + $0x3b8] sm:$0xff]
        %v1091 = vld [vmem:[#allocation5 + $0x3c0] sm:$0xff]
        %v1092 = vld [vmem:[#allocation5 + $0x3c8] sm:$0xff]
        %v1093 = vld [vmem:[#allocation5 + $0x3d0] sm:$0xff]
        %v1094 = vld [vmem:[#allocation5 + $0x3d8] sm:$0xff]
        %v1095 = vld [vmem:[#allocation5 + $0x3e0] sm:$0xff]
        %v1096 = vld [vmem:[#allocation5 + $0x3e8] sm:$0xff]
        %v1097 = vld [vmem:[#allocation5 + $0x3f0] sm:$0xff]
        %v1098 = vld [vmem:[#allocation5 + $0x3f8] sm:$0xff]
        %v1099 = vld [vmem:[%s5] sm:$0xf]
        %v1101 = vlaneseq
        %v1102 = vshrl.u32 %v1101, 7
        %v1103 = vsub.s32 0, %v1102
        %v1104 = vrot.slane %v1099, %v1103
        %v1105 = vlaneseq
        %v1106 = vshrl.u32 %v1105, 7
        %v1107 = vsub.s32 1, %v1106
        %v1108 = vrot.slane %v1099, %v1107
        %v1109 = vlaneseq
        %v1110 = vshrl.u32 %v1109, 7
        %v1111 = vsub.s32 2, %v1110
        %v1112 = vrot.slane %v1099, %v1111
        %v1113 = vlaneseq
        %v1114 = vshrl.u32 %v1113, 7
        %v1115 = vsub.s32 3, %v1114
        %v1116 = vrot.slane %v1099, %v1115
        %v1249 = vunpack.c.l.b16 %v971
        %v1250 = vunpack.c.h.b16 %v971
        %v1251 = vunpack.c.l.b16 %v972
        %v1252 = vunpack.c.h.b16 %v972
        %v1253 = vunpack.c.l.b16 %v973
        %v1254 = vunpack.c.h.b16 %v973
        %v1255 = vunpack.c.l.b16 %v974
        %v1256 = vunpack.c.h.b16 %v974
        %v1257 = vunpack.c.l.b16 %v975
        %v1258 = vunpack.c.h.b16 %v975
        %v1259 = vunpack.c.l.b16 %v976
        %v1260 = vunpack.c.h.b16 %v976
        %v1261 = vunpack.c.l.b16 %v977
        %v1262 = vunpack.c.h.b16 %v977
        %v1263 = vunpack.c.l.b16 %v978
        %v1264 = vunpack.c.h.b16 %v978
        %v1265 = vunpack.c.l.b16 %v979
        %v1266 = vunpack.c.h.b16 %v979
        %v1267 = vunpack.c.l.b16 %v980
        %v1268 = vunpack.c.h.b16 %v980
        %v1269 = vunpack.c.l.b16 %v981
        %v1270 = vunpack.c.h.b16 %v981
        %v1271 = vunpack.c.l.b16 %v982
        %v1272 = vunpack.c.h.b16 %v982
        %v1273 = vunpack.c.l.b16 %v983
        %v1274 = vunpack.c.h.b16 %v983
        %v1275 = vunpack.c.l.b16 %v984
        %v1276 = vunpack.c.h.b16 %v984
        %v1277 = vunpack.c.l.b16 %v985
        %v1278 = vunpack.c.h.b16 %v985
        %v1279 = vunpack.c.l.b16 %v986
        %v1280 = vunpack.c.h.b16 %v986
        %v1281 = vunpack.c.l.b16 %v987
        %v1282 = vunpack.c.h.b16 %v987
        %v1283 = vunpack.c.l.b16 %v988
        %v1284 = vunpack.c.h.b16 %v988
        %v1285 = vunpack.c.l.b16 %v989
        %v1286 = vunpack.c.h.b16 %v989
        %v1287 = vunpack.c.l.b16 %v990
        %v1288 = vunpack.c.h.b16 %v990
        %v1289 = vunpack.c.l.b16 %v991
        %v1290 = vunpack.c.h.b16 %v991
        %v1291 = vunpack.c.l.b16 %v992
        %v1292 = vunpack.c.h.b16 %v992
        %v1293 = vunpack.c.l.b16 %v993
        %v1294 = vunpack.c.h.b16 %v993
        %v1295 = vunpack.c.l.b16 %v994
        %v1296 = vunpack.c.h.b16 %v994
        %v1297 = vunpack.c.l.b16 %v995
        %v1298 = vunpack.c.h.b16 %v995
        %v1299 = vunpack.c.l.b16 %v996
        %v1300 = vunpack.c.h.b16 %v996
        %v1301 = vunpack.c.l.b16 %v997
        %v1302 = vunpack.c.h.b16 %v997
        %v1303 = vunpack.c.l.b16 %v998
        %v1304 = vunpack.c.h.b16 %v998
        %v1305 = vunpack.c.l.b16 %v999
        %v1306 = vunpack.c.h.b16 %v999
        %v1307 = vunpack.c.l.b16 %v1000
        %v1308 = vunpack.c.h.b16 %v1000
        %v1309 = vunpack.c.l.b16 %v1001
        %v1310 = vunpack.c.h.b16 %v1001
        %v1311 = vunpack.c.l.b16 %v1002
        %v1312 = vunpack.c.h.b16 %v1002
        %v1313 = vunpack.c.l.b16 %v1003
        %v1314 = vunpack.c.h.b16 %v1003
        %v1315 = vunpack.c.l.b16 %v1004
        %v1316 = vunpack.c.h.b16 %v1004
        %v1317 = vunpack.c.l.b16 %v1005
        %v1318 = vunpack.c.h.b16 %v1005
        %v1319 = vunpack.c.l.b16 %v1006
        %v1320 = vunpack.c.h.b16 %v1006
        %v1321 = vunpack.c.l.b16 %v1007
        %v1322 = vunpack.c.h.b16 %v1007
        %v1323 = vunpack.c.l.b16 %v1008
        %v1324 = vunpack.c.h.b16 %v1008
        %v1325 = vunpack.c.l.b16 %v1009
        %v1326 = vunpack.c.h.b16 %v1009
        %v1327 = vunpack.c.l.b16 %v1010
        %v1328 = vunpack.c.h.b16 %v1010
        %v1329 = vunpack.c.l.b16 %v1011
        %v1330 = vunpack.c.h.b16 %v1011
        %v1331 = vunpack.c.l.b16 %v1012
        %v1332 = vunpack.c.h.b16 %v1012
        %v1333 = vunpack.c.l.b16 %v1013
        %v1334 = vunpack.c.h.b16 %v1013
        %v1335 = vunpack.c.l.b16 %v1014
        %v1336 = vunpack.c.h.b16 %v1014
        %v1337 = vunpack.c.l.b16 %v1015
        %v1338 = vunpack.c.h.b16 %v1015
        %v1339 = vunpack.c.l.b16 %v1016
        %v1340 = vunpack.c.h.b16 %v1016
        %v1341 = vunpack.c.l.b16 %v1017
        %v1342 = vunpack.c.h.b16 %v1017
        %v1343 = vunpack.c.l.b16 %v1018
        %v1344 = vunpack.c.h.b16 %v1018
        %v1345 = vunpack.c.l.b16 %v1019
        %v1346 = vunpack.c.h.b16 %v1019
        %v1347 = vunpack.c.l.b16 %v1020
        %v1348 = vunpack.c.h.b16 %v1020
        %v1349 = vunpack.c.l.b16 %v1021
        %v1350 = vunpack.c.h.b16 %v1021
        %v1351 = vunpack.c.l.b16 %v1022
        %v1352 = vunpack.c.h.b16 %v1022
        %v1353 = vunpack.c.l.b16 %v1023
        %v1354 = vunpack.c.h.b16 %v1023
        %v1355 = vunpack.c.l.b16 %v1024
        %v1356 = vunpack.c.h.b16 %v1024
        %v1357 = vunpack.c.l.b16 %v1025
        %v1358 = vunpack.c.h.b16 %v1025
        %v1359 = vunpack.c.l.b16 %v1026
        %v1360 = vunpack.c.h.b16 %v1026
        %v1361 = vunpack.c.l.b16 %v1027
        %v1362 = vunpack.c.h.b16 %v1027
        %v1363 = vunpack.c.l.b16 %v1028
        %v1364 = vunpack.c.h.b16 %v1028
        %v1365 = vunpack.c.l.b16 %v1029
        %v1366 = vunpack.c.h.b16 %v1029
        %v1367 = vunpack.c.l.b16 %v1030
        %v1368 = vunpack.c.h.b16 %v1030
        %v1369 = vunpack.c.l.b16 %v1031
        %v1370 = vunpack.c.h.b16 %v1031
        %v1371 = vunpack.c.l.b16 %v1032
        %v1372 = vunpack.c.h.b16 %v1032
        %v1373 = vunpack.c.l.b16 %v1033
        %v1374 = vunpack.c.h.b16 %v1033
        %v1375 = vunpack.c.l.b16 %v1034
        %v1376 = vunpack.c.h.b16 %v1034
        %v1377 = vunpack.c.l.b16 %v1035
        %v1378 = vunpack.c.h.b16 %v1035
        %v1379 = vunpack.c.l.b16 %v1036
        %v1380 = vunpack.c.h.b16 %v1036
        %v1381 = vunpack.c.l.b16 %v1037
        %v1382 = vunpack.c.h.b16 %v1037
        %v1383 = vunpack.c.l.b16 %v1038
        %v1384 = vunpack.c.h.b16 %v1038
        %v1385 = vunpack.c.l.b16 %v1039
        %v1386 = vunpack.c.h.b16 %v1039
        %v1387 = vunpack.c.l.b16 %v1040
        %v1388 = vunpack.c.h.b16 %v1040
        %v1389 = vunpack.c.l.b16 %v1041
        %v1390 = vunpack.c.h.b16 %v1041
        %v1391 = vunpack.c.l.b16 %v1042
        %v1392 = vunpack.c.h.b16 %v1042
        %v1393 = vunpack.c.l.b16 %v1043
        %v1394 = vunpack.c.h.b16 %v1043
        %v1395 = vunpack.c.l.b16 %v1044
        %v1396 = vunpack.c.h.b16 %v1044
        %v1397 = vunpack.c.l.b16 %v1045
        %v1398 = vunpack.c.h.b16 %v1045
        %v1399 = vunpack.c.l.b16 %v1046
        %v1400 = vunpack.c.h.b16 %v1046
        %v1401 = vunpack.c.l.b16 %v1047
        %v1402 = vunpack.c.h.b16 %v1047
        %v1403 = vunpack.c.l.b16 %v1048
        %v1404 = vunpack.c.h.b16 %v1048
        %v1405 = vunpack.c.l.b16 %v1049
        %v1406 = vunpack.c.h.b16 %v1049
        %v1407 = vunpack.c.l.b16 %v1050
        %v1408 = vunpack.c.h.b16 %v1050
        %v1409 = vunpack.c.l.b16 %v1051
        %v1410 = vunpack.c.h.b16 %v1051
        %v1411 = vunpack.c.l.b16 %v1052
        %v1412 = vunpack.c.h.b16 %v1052
        %v1413 = vunpack.c.l.b16 %v1053
        %v1414 = vunpack.c.h.b16 %v1053
        %v1415 = vunpack.c.l.b16 %v1054
        %v1416 = vunpack.c.h.b16 %v1054
        %v1417 = vunpack.c.l.b16 %v1055
        %v1418 = vunpack.c.h.b16 %v1055
        %v1419 = vunpack.c.l.b16 %v1056
        %v1420 = vunpack.c.h.b16 %v1056
        %v1421 = vunpack.c.l.b16 %v1057
        %v1422 = vunpack.c.h.b16 %v1057
        %v1423 = vunpack.c.l.b16 %v1058
        %v1424 = vunpack.c.h.b16 %v1058
        %v1425 = vunpack.c.l.b16 %v1059
        %v1426 = vunpack.c.h.b16 %v1059
        %v1427 = vunpack.c.l.b16 %v1060
        %v1428 = vunpack.c.h.b16 %v1060
        %v1429 = vunpack.c.l.b16 %v1061
        %v1430 = vunpack.c.h.b16 %v1061
        %v1431 = vunpack.c.l.b16 %v1062
        %v1432 = vunpack.c.h.b16 %v1062
        %v1433 = vunpack.c.l.b16 %v1063
        %v1434 = vunpack.c.h.b16 %v1063
        %v1435 = vunpack.c.l.b16 %v1064
        %v1436 = vunpack.c.h.b16 %v1064
        %v1437 = vunpack.c.l.b16 %v1065
        %v1438 = vunpack.c.h.b16 %v1065
        %v1439 = vunpack.c.l.b16 %v1066
        %v1440 = vunpack.c.h.b16 %v1066
        %v1441 = vunpack.c.l.b16 %v1067
        %v1442 = vunpack.c.h.b16 %v1067
        %v1443 = vunpack.c.l.b16 %v1068
        %v1444 = vunpack.c.h.b16 %v1068
        %v1445 = vunpack.c.l.b16 %v1069
        %v1446 = vunpack.c.h.b16 %v1069
        %v1447 = vunpack.c.l.b16 %v1070
        %v1448 = vunpack.c.h.b16 %v1070
        %v1449 = vunpack.c.l.b16 %v1071
        %v1450 = vunpack.c.h.b16 %v1071
        %v1451 = vunpack.c.l.b16 %v1072
        %v1452 = vunpack.c.h.b16 %v1072
        %v1453 = vunpack.c.l.b16 %v1073
        %v1454 = vunpack.c.h.b16 %v1073
        %v1455 = vunpack.c.l.b16 %v1074
        %v1456 = vunpack.c.h.b16 %v1074
        %v1457 = vunpack.c.l.b16 %v1075
        %v1458 = vunpack.c.h.b16 %v1075
        %v1459 = vunpack.c.l.b16 %v1076
        %v1460 = vunpack.c.h.b16 %v1076
        %v1461 = vunpack.c.l.b16 %v1077
        %v1462 = vunpack.c.h.b16 %v1077
        %v1463 = vunpack.c.l.b16 %v1078
        %v1464 = vunpack.c.h.b16 %v1078
        %v1465 = vunpack.c.l.b16 %v1079
        %v1466 = vunpack.c.h.b16 %v1079
        %v1467 = vunpack.c.l.b16 %v1080
        %v1468 = vunpack.c.h.b16 %v1080
        %v1469 = vunpack.c.l.b16 %v1081
        %v1470 = vunpack.c.h.b16 %v1081
        %v1471 = vunpack.c.l.b16 %v1082
        %v1472 = vunpack.c.h.b16 %v1082
        %v1473 = vunpack.c.l.b16 %v1083
        %v1474 = vunpack.c.h.b16 %v1083
        %v1475 = vunpack.c.l.b16 %v1084
        %v1476 = vunpack.c.h.b16 %v1084
        %v1477 = vunpack.c.l.b16 %v1085
        %v1478 = vunpack.c.h.b16 %v1085
        %v1479 = vunpack.c.l.b16 %v1086
        %v1480 = vunpack.c.h.b16 %v1086
        %v1481 = vunpack.c.l.b16 %v1087
        %v1482 = vunpack.c.h.b16 %v1087
        %v1483 = vunpack.c.l.b16 %v1088
        %v1484 = vunpack.c.h.b16 %v1088
        %v1485 = vunpack.c.l.b16 %v1089
        %v1486 = vunpack.c.h.b16 %v1089
        %v1487 = vunpack.c.l.b16 %v1090
        %v1488 = vunpack.c.h.b16 %v1090
        %v1489 = vunpack.c.l.b16 %v1091
        %v1490 = vunpack.c.h.b16 %v1091
        %v1491 = vunpack.c.l.b16 %v1092
        %v1492 = vunpack.c.h.b16 %v1092
        %v1493 = vunpack.c.l.b16 %v1093
        %v1494 = vunpack.c.h.b16 %v1093
        %v1495 = vunpack.c.l.b16 %v1094
        %v1496 = vunpack.c.h.b16 %v1094
        %v1497 = vunpack.c.l.b16 %v1095
        %v1498 = vunpack.c.h.b16 %v1095
        %v1499 = vunpack.c.l.b16 %v1096
        %v1500 = vunpack.c.h.b16 %v1096
        %v1501 = vunpack.c.l.b16 %v1097
        %v1502 = vunpack.c.h.b16 %v1097
        %v1503 = vunpack.c.l.b16 %v1098
        %v1504 = vunpack.c.h.b16 %v1098
        %v1505 = vpack.c.b16 %v1253, %v1249
        %v1506 = vpack.c.b16 %v1254, %v1250
        %v1507 = vpack.c.b16 %v1255, %v1251
        %v1508 = vpack.c.b16 %v1256, %v1252
        %v1509 = vpack.c.b16 %v1261, %v1257
        %v1510 = vpack.c.b16 %v1262, %v1258
        %v1511 = vpack.c.b16 %v1263, %v1259
        %v1512 = vpack.c.b16 %v1264, %v1260
        %v1513 = vpack.c.b16 %v1269, %v1265
        %v1514 = vpack.c.b16 %v1270, %v1266
        %v1515 = vpack.c.b16 %v1271, %v1267
        %v1516 = vpack.c.b16 %v1272, %v1268
        %v1517 = vpack.c.b16 %v1277, %v1273
        %v1518 = vpack.c.b16 %v1278, %v1274
        %v1519 = vpack.c.b16 %v1279, %v1275
        %v1520 = vpack.c.b16 %v1280, %v1276
        %v1521 = vpack.c.b16 %v1285, %v1281
        %v1522 = vpack.c.b16 %v1286, %v1282
        %v1523 = vpack.c.b16 %v1287, %v1283
        %v1524 = vpack.c.b16 %v1288, %v1284
        %v1525 = vpack.c.b16 %v1293, %v1289
        %v1526 = vpack.c.b16 %v1294, %v1290
        %v1527 = vpack.c.b16 %v1295, %v1291
        %v1528 = vpack.c.b16 %v1296, %v1292
        %v1529 = vpack.c.b16 %v1301, %v1297
        %v1530 = vpack.c.b16 %v1302, %v1298
        %v1531 = vpack.c.b16 %v1303, %v1299
        %v1532 = vpack.c.b16 %v1304, %v1300
        %v1533 = vpack.c.b16 %v1309, %v1305
        %v1534 = vpack.c.b16 %v1310, %v1306
        %v1535 = vpack.c.b16 %v1311, %v1307
        %v1536 = vpack.c.b16 %v1312, %v1308
        %v1537 = vpack.c.b16 %v1317, %v1313
        %v1538 = vpack.c.b16 %v1318, %v1314
        %v1539 = vpack.c.b16 %v1319, %v1315
        %v1540 = vpack.c.b16 %v1320, %v1316
        %v1541 = vpack.c.b16 %v1325, %v1321
        %v1542 = vpack.c.b16 %v1326, %v1322
        %v1543 = vpack.c.b16 %v1327, %v1323
        %v1544 = vpack.c.b16 %v1328, %v1324
        %v1545 = vpack.c.b16 %v1333, %v1329
        %v1546 = vpack.c.b16 %v1334, %v1330
        %v1547 = vpack.c.b16 %v1335, %v1331
        %v1548 = vpack.c.b16 %v1336, %v1332
        %v1549 = vpack.c.b16 %v1341, %v1337
        %v1550 = vpack.c.b16 %v1342, %v1338
        %v1551 = vpack.c.b16 %v1343, %v1339
        %v1552 = vpack.c.b16 %v1344, %v1340
        %v1553 = vpack.c.b16 %v1349, %v1345
        %v1554 = vpack.c.b16 %v1350, %v1346
        %v1555 = vpack.c.b16 %v1351, %v1347
        %v1556 = vpack.c.b16 %v1352, %v1348
        %v1557 = vpack.c.b16 %v1357, %v1353
        %v1558 = vpack.c.b16 %v1358, %v1354
        %v1559 = vpack.c.b16 %v1359, %v1355
        %v1560 = vpack.c.b16 %v1360, %v1356
        %v1561 = vpack.c.b16 %v1365, %v1361
        %v1562 = vpack.c.b16 %v1366, %v1362
        %v1563 = vpack.c.b16 %v1367, %v1363
        %v1564 = vpack.c.b16 %v1368, %v1364
        %v1565 = vpack.c.b16 %v1373, %v1369
        %v1566 = vpack.c.b16 %v1374, %v1370
        %v1567 = vpack.c.b16 %v1375, %v1371
        %v1568 = vpack.c.b16 %v1376, %v1372
        %v1569 = vpack.c.b16 %v1381, %v1377
        %v1570 = vpack.c.b16 %v1382, %v1378
        %v1571 = vpack.c.b16 %v1383, %v1379
        %v1572 = vpack.c.b16 %v1384, %v1380
        %v1573 = vpack.c.b16 %v1389, %v1385
        %v1574 = vpack.c.b16 %v1390, %v1386
        %v1575 = vpack.c.b16 %v1391, %v1387
        %v1576 = vpack.c.b16 %v1392, %v1388
        %v1577 = vpack.c.b16 %v1397, %v1393
        %v1578 = vpack.c.b16 %v1398, %v1394
        %v1579 = vpack.c.b16 %v1399, %v1395
        %v1580 = vpack.c.b16 %v1400, %v1396
        %v1581 = vpack.c.b16 %v1405, %v1401
        %v1582 = vpack.c.b16 %v1406, %v1402
        %v1583 = vpack.c.b16 %v1407, %v1403
        %v1584 = vpack.c.b16 %v1408, %v1404
        %v1585 = vpack.c.b16 %v1413, %v1409
        %v1586 = vpack.c.b16 %v1414, %v1410
        %v1587 = vpack.c.b16 %v1415, %v1411
        %v1588 = vpack.c.b16 %v1416, %v1412
        %v1589 = vpack.c.b16 %v1421, %v1417
        %v1590 = vpack.c.b16 %v1422, %v1418
        %v1591 = vpack.c.b16 %v1423, %v1419
        %v1592 = vpack.c.b16 %v1424, %v1420
        %v1593 = vpack.c.b16 %v1429, %v1425
        %v1594 = vpack.c.b16 %v1430, %v1426
        %v1595 = vpack.c.b16 %v1431, %v1427
        %v1596 = vpack.c.b16 %v1432, %v1428
        %v1597 = vpack.c.b16 %v1437, %v1433
        %v1598 = vpack.c.b16 %v1438, %v1434
        %v1599 = vpack.c.b16 %v1439, %v1435
        %v1600 = vpack.c.b16 %v1440, %v1436
        %v1601 = vpack.c.b16 %v1445, %v1441
        %v1602 = vpack.c.b16 %v1446, %v1442
        %v1603 = vpack.c.b16 %v1447, %v1443
        %v1604 = vpack.c.b16 %v1448, %v1444
        %v1605 = vpack.c.b16 %v1453, %v1449
        %v1606 = vpack.c.b16 %v1454, %v1450
        %v1607 = vpack.c.b16 %v1455, %v1451
        %v1608 = vpack.c.b16 %v1456, %v1452
        %v1609 = vpack.c.b16 %v1461, %v1457
        %v1610 = vpack.c.b16 %v1462, %v1458
        %v1611 = vpack.c.b16 %v1463, %v1459
        %v1612 = vpack.c.b16 %v1464, %v1460
        %v1613 = vpack.c.b16 %v1469, %v1465
        %v1614 = vpack.c.b16 %v1470, %v1466
        %v1615 = vpack.c.b16 %v1471, %v1467
        %v1616 = vpack.c.b16 %v1472, %v1468
        %v1617 = vpack.c.b16 %v1477, %v1473
        %v1618 = vpack.c.b16 %v1478, %v1474
        %v1619 = vpack.c.b16 %v1479, %v1475
        %v1620 = vpack.c.b16 %v1480, %v1476
        %v1621 = vpack.c.b16 %v1485, %v1481
        %v1622 = vpack.c.b16 %v1486, %v1482
        %v1623 = vpack.c.b16 %v1487, %v1483
        %v1624 = vpack.c.b16 %v1488, %v1484
        %v1625 = vpack.c.b16 %v1493, %v1489
        %v1626 = vpack.c.b16 %v1494, %v1490
        %v1627 = vpack.c.b16 %v1495, %v1491
        %v1628 = vpack.c.b16 %v1496, %v1492
        %v1629 = vpack.c.b16 %v1501, %v1497
        %v1630 = vpack.c.b16 %v1502, %v1498
        %v1631 = vpack.c.b16 %v1503, %v1499
        %v1632 = vpack.c.b16 %v1504, %v1500
        %1761 = vmatprep.subr.bf16.mxu0 %v1506
        %1762 = vmatpush1.bf16.msra.mxu0 %v1505
        %1763 = vmatprep.subr.bf16.mxu0 %v1510
        %1764 = vmatpush1.bf16.msra.mxu0 %v1509
        %1765 = vmatprep.subr.bf16.mxu0 %v1514
        %1766 = vmatpush1.bf16.msra.mxu0 %v1513
        %1767 = vmatprep.subr.bf16.mxu0 %v1518
        %1768 = vmatpush1.bf16.msra.mxu0 %v1517
        %1769 = vmatprep.subr.bf16.mxu0 %v1522
        %1770 = vmatpush1.bf16.msra.mxu0 %v1521
        %1771 = vmatprep.subr.bf16.mxu0 %v1526
        %1772 = vmatpush1.bf16.msra.mxu0 %v1525
        %1773 = vmatprep.subr.bf16.mxu0 %v1530
        %1774 = vmatpush1.bf16.msra.mxu0 %v1529
        %1775 = vmatprep.subr.bf16.mxu0 %v1534
        %1776 = vmatpush1.bf16.msra.mxu0 %v1533
        %1777 = vmatprep.subr.bf16.mxu0 %v1538
        %1778 = vmatpush1.bf16.msra.mxu0 %v1537
        %1779 = vmatprep.subr.bf16.mxu0 %v1542
        %1780 = vmatpush1.bf16.msra.mxu0 %v1541
        %1781 = vmatprep.subr.bf16.mxu0 %v1546
        %1782 = vmatpush1.bf16.msra.mxu0 %v1545
        %1783 = vmatprep.subr.bf16.mxu0 %v1550
        %1784 = vmatpush1.bf16.msra.mxu0 %v1549
        %1785 = vmatprep.subr.bf16.mxu0 %v1554
        %1786 = vmatpush1.bf16.msra.mxu0 %v1553
        %1787 = vmatprep.subr.bf16.mxu0 %v1558
        %1788 = vmatpush1.bf16.msra.mxu0 %v1557
        %1789 = vmatprep.subr.bf16.mxu0 %v1562
        %1790 = vmatpush1.bf16.msra.mxu0 %v1561
        %1791 = vmatprep.subr.bf16.mxu0 %v1566
        %1792 = vmatpush1.bf16.msra.mxu0 %v1565
        %1793 = vmatprep.mubr.bf16.mxu0 %v940
        %1794 = vmatmul.mubr.bf16.gmra.mrb[0].mxu0 %v939
        %v1795 = vpop.f32.mrb[0].mxu0
        %v1796 = vadd.f32 %v1104, %v1795
        %v1797 = vpop.f32.mrb[0].mxu0
        %v1798 = vadd.f32 %v1108, %v1797
        %v1799 = vpop.f32.mrb[0].mxu0
        %v1800 = vadd.f32 %v1104, %v1799
        %v1801 = vpop.f32.mrb[0].mxu0
        %v1802 = vadd.f32 %v1108, %v1801
        %1803 = vmatprep.mubr.bf16.mxu0 %v944
        %1804 = vmatmul.mubr.bf16.gmra.mrb[0].mxu0 %v943
        %v1805 = vpop.f32.mrb[0].mxu0
        %v1806 = vadd.f32 %v1104, %v1805
        %v1807 = vpop.f32.mrb[0].mxu0
        %v1808 = vadd.f32 %v1108, %v1807
        %v1809 = vpop.f32.mrb[0].mxu0
        %v1810 = vadd.f32 %v1104, %v1809
        %v1811 = vpop.f32.mrb[0].mxu0
        %v1812 = vadd.f32 %v1108, %v1811
        %1813 = vmatprep.mubr.bf16.mxu0 %v948
        %1814 = vmatmul.mubr.bf16.gmra.mrb[0].mxu0 %v947
        %v1815 = vpop.f32.mrb[0].mxu0
        %v1816 = vadd.f32 %v1104, %v1815
        %v1817 = vpop.f32.mrb[0].mxu0
        %v1818 = vadd.f32 %v1108, %v1817
        %v1819 = vpop.f32.mrb[0].mxu0
        %v1820 = vadd.f32 %v1104, %v1819
        %v1821 = vpop.f32.mrb[0].mxu0
        %v1822 = vadd.f32 %v1108, %v1821
        %1823 = vmatprep.mubr.bf16.mxu0 %v952
        %1824 = vmatmul.mubr.bf16.gmra.mrb[0].mxu0 %v951
        %v1825 = vpop.f32.mrb[0].mxu0
        %v1826 = vadd.f32 %v1104, %v1825
        %v1827 = vpop.f32.mrb[0].mxu0
        %v1828 = vadd.f32 %v1108, %v1827
        %v1829 = vpop.f32.mrb[0].mxu0
        %v1830 = vadd.f32 %v1104, %v1829
        %v1831 = vpop.f32.mrb[0].mxu0
        %v1832 = vadd.f32 %v1108, %v1831
        %1833 = vmatprep.mubr.bf16.mxu0 %v956
        %1834 = vmatmul.mubr.bf16.gmra.mrb[0].mxu0 %v955
        %v1835 = vpop.f32.mrb[0].mxu0
        %v1836 = vadd.f32 %v1104, %v1835
        %v1837 = vpop.f32.mrb[0].mxu0
        %v1838 = vadd.f32 %v1108, %v1837
        %v1839 = vpop.f32.mrb[0].mxu0
        %v1840 = vadd.f32 %v1104, %v1839
        %v1841 = vpop.f32.mrb[0].mxu0
        %v1842 = vadd.f32 %v1108, %v1841
        %1843 = vmatprep.mubr.bf16.mxu0 %v960
        %1844 = vmatmul.mubr.bf16.gmra.mrb[0].mxu0 %v959
        %v1845 = vpop.f32.mrb[0].mxu0
        %v1846 = vadd.f32 %v1104, %v1845
        %v1847 = vpop.f32.mrb[0].mxu0
        %v1848 = vadd.f32 %v1108, %v1847
        %v1849 = vpop.f32.mrb[0].mxu0
        %v1850 = vadd.f32 %v1104, %v1849
        %v1851 = vpop.f32.mrb[0].mxu0
        %v1852 = vadd.f32 %v1108, %v1851
        %1853 = vmatprep.mubr.bf16.mxu0 %v964
        %1854 = vmatmul.mubr.bf16.gmra.mrb[0].mxu0 %v963
        %v1855 = vpop.f32.mrb[0].mxu0
        %v1856 = vadd.f32 %v1104, %v1855
        %v1857 = vpop.f32.mrb[0].mxu0
        %v1858 = vadd.f32 %v1108, %v1857
        %v1859 = vpop.f32.mrb[0].mxu0
        %v1860 = vadd.f32 %v1104, %v1859
        %v1861 = vpop.f32.mrb[0].mxu0
        %v1862 = vadd.f32 %v1108, %v1861
        %1863 = vmatprep.mubr.bf16.mxu0 %v968
        %1864 = vmatmul.mubr.bf16.gmra.mrb[0].mxu0 %v967
        %v1865 = vpop.f32.mrb[0].mxu0
        %v1866 = vadd.f32 %v1104, %v1865
        %v1867 = vpop.f32.mrb[0].mxu0
        %v1868 = vadd.f32 %v1108, %v1867
        %v1869 = vpop.f32.mrb[0].mxu0
        %v1870 = vadd.f32 %v1104, %v1869
        %v1871 = vpop.f32.mrb[0].mxu0
        %v1872 = vadd.f32 %v1108, %v1871
        %1873 = vdwg.mxu0
        %1874 = vmatprep.subr.bf16.mxu0 %v1570
        %1875 = vmatpush1.bf16.msra.mxu0 %v1569
        %1876 = vmatprep.subr.bf16.mxu0 %v1574
        %1877 = vmatpush1.bf16.msra.mxu0 %v1573
        %1878 = vmatprep.subr.bf16.mxu0 %v1578
        %1879 = vmatpush1.bf16.msra.mxu0 %v1577
        %1880 = vmatprep.subr.bf16.mxu0 %v1582
        %1881 = vmatpush1.bf16.msra.mxu0 %v1581
        %1882 = vmatprep.subr.bf16.mxu0 %v1586
        %1883 = vmatpush1.bf16.msra.mxu0 %v1585
        %1884 = vmatprep.subr.bf16.mxu0 %v1590
        %1885 = vmatpush1.bf16.msra.mxu0 %v1589
        %1886 = vmatprep.subr.bf16.mxu0 %v1594
        %1887 = vmatpush1.bf16.msra.mxu0 %v1593
        %1888 = vmatprep.subr.bf16.mxu0 %v1598
        %1889 = vmatpush1.bf16.msra.mxu0 %v1597
        %1890 = vmatprep.subr.bf16.mxu0 %v1602
        %1891 = vmatpush1.bf16.msra.mxu0 %v1601
        %1892 = vmatprep.subr.bf16.mxu0 %v1606
        %1893 = vmatpush1.bf16.msra.mxu0 %v1605
        %1894 = vmatprep.subr.bf16.mxu0 %v1610
        %1895 = vmatpush1.bf16.msra.mxu0 %v1609
        %1896 = vmatprep.subr.bf16.mxu0 %v1614
        %1897 = vmatpush1.bf16.msra.mxu0 %v1613
        %1898 = vmatprep.subr.bf16.mxu0 %v1618
        %1899 = vmatpush1.bf16.msra.mxu0 %v1617
        %1900 = vmatprep.subr.bf16.mxu0 %v1622
        %1901 = vmatpush1.bf16.msra.mxu0 %v1621
        %1902 = vmatprep.subr.bf16.mxu0 %v1626
        %1903 = vmatpush1.bf16.msra.mxu0 %v1625
        %1904 = vmatprep.subr.bf16.mxu0 %v1630
        %1905 = vmatpush1.bf16.msra.mxu0 %v1629
        %1906 = vmatprep.mubr.bf16.mxu0 %v942
        %1907 = vmatmul.mubr.bf16.gmra.mrb[0].mxu0 %v941
        %v1908 = vpop.f32.mrb[0].mxu0
        %v1909 = vadd.f32 %v1796, %v1908
        %v1910 = vpop.f32.mrb[0].mxu0
        %v1911 = vadd.f32 %v1798, %v1910
        %v1912 = vpop.f32.mrb[0].mxu0
        %v1913 = vadd.f32 %v1800, %v1912
        %v1914 = vpop.f32.mrb[0].mxu0
        %v1915 = vadd.f32 %v1802, %v1914
        %1916 = vmatprep.mubr.bf16.mxu0 %v946
        %1917 = vmatmul.mubr.bf16.gmra.mrb[0].mxu0 %v945
        %v1918 = vpop.f32.mrb[0].mxu0
        %v1919 = vadd.f32 %v1806, %v1918
        %v1920 = vpop.f32.mrb[0].mxu0
        %v1921 = vadd.f32 %v1808, %v1920
        %v1922 = vpop.f32.mrb[0].mxu0
        %v1923 = vadd.f32 %v1810, %v1922
        %v1924 = vpop.f32.mrb[0].mxu0
        %v1925 = vadd.f32 %v1812, %v1924
        %1926 = vmatprep.mubr.bf16.mxu0 %v950
        %1927 = vmatmul.mubr.bf16.gmra.mrb[0].mxu0 %v949
        %v1928 = vpop.f32.mrb[0].mxu0
        %v1929 = vadd.f32 %v1816, %v1928
        %v1930 = vpop.f32.mrb[0].mxu0
        %v1931 = vadd.f32 %v1818, %v1930
        %v1932 = vpop.f32.mrb[0].mxu0
        %v1933 = vadd.f32 %v1820, %v1932
        %v1934 = vpop.f32.mrb[0].mxu0
        %v1935 = vadd.f32 %v1822, %v1934
        %1936 = vmatprep.mubr.bf16.mxu0 %v954
        %1937 = vmatmul.mubr.bf16.gmra.mrb[0].mxu0 %v953
        %v1938 = vpop.f32.mrb[0].mxu0
        %v1939 = vadd.f32 %v1826, %v1938
        %v1940 = vpop.f32.mrb[0].mxu0
        %v1941 = vadd.f32 %v1828, %v1940
        %v1942 = vpop.f32.mrb[0].mxu0
        %v1943 = vadd.f32 %v1830, %v1942
        %v1944 = vpop.f32.mrb[0].mxu0
        %v1945 = vadd.f32 %v1832, %v1944
        %1946 = vmatprep.mubr.bf16.mxu0 %v958
        %1947 = vmatmul.mubr.bf16.gmra.mrb[0].mxu0 %v957
        %v1948 = vpop.f32.mrb[0].mxu0
        %v1949 = vadd.f32 %v1836, %v1948
        %v1950 = vpop.f32.mrb[0].mxu0
        %v1951 = vadd.f32 %v1838, %v1950
        %v1952 = vpop.f32.mrb[0].mxu0
        %v1953 = vadd.f32 %v1840, %v1952
        %v1954 = vpop.f32.mrb[0].mxu0
        %v1955 = vadd.f32 %v1842, %v1954
        %1956 = vmatprep.mubr.bf16.mxu0 %v962
        %1957 = vmatmul.mubr.bf16.gmra.mrb[0].mxu0 %v961
        %v1958 = vpop.f32.mrb[0].mxu0
        %v1959 = vadd.f32 %v1846, %v1958
        %v1960 = vpop.f32.mrb[0].mxu0
        %v1961 = vadd.f32 %v1848, %v1960
        %v1962 = vpop.f32.mrb[0].mxu0
        %v1963 = vadd.f32 %v1850, %v1962
        %v1964 = vpop.f32.mrb[0].mxu0
        %v1965 = vadd.f32 %v1852, %v1964
        %1966 = vmatprep.mubr.bf16.mxu0 %v966
        %1967 = vmatmul.mubr.bf16.gmra.mrb[0].mxu0 %v965
        %v1968 = vpop.f32.mrb[0].mxu0
        %v1969 = vadd.f32 %v1856, %v1968
        %v1970 = vpop.f32.mrb[0].mxu0
        %v1971 = vadd.f32 %v1858, %v1970
        %v1972 = vpop.f32.mrb[0].mxu0
        %v1973 = vadd.f32 %v1860, %v1972
        %v1974 = vpop.f32.mrb[0].mxu0
        %v1975 = vadd.f32 %v1862, %v1974
        %1976 = vmatprep.mubr.bf16.mxu0 %v970
        %1977 = vmatmul.mubr.bf16.gmra.mrb[0].mxu0 %v969
        %v1978 = vpop.f32.mrb[0].mxu0
        %v1979 = vadd.f32 %v1866, %v1978
        %v1980 = vpop.f32.mrb[0].mxu0
        %v1981 = vadd.f32 %v1868, %v1980
        %v1982 = vpop.f32.mrb[0].mxu0
        %v1983 = vadd.f32 %v1870, %v1982
        %v1984 = vpop.f32.mrb[0].mxu0
        %v1985 = vadd.f32 %v1872, %v1984
        %1986 = vdwg.mxu0
        %1987 = vmatprep.subr.bf16.mxu0 %v1508
        %1988 = vmatpush1.bf16.msra.mxu0 %v1507
        %1989 = vmatprep.subr.bf16.mxu0 %v1512
        %1990 = vmatpush1.bf16.msra.mxu0 %v1511
        %1991 = vmatprep.subr.bf16.mxu0 %v1516
        %1992 = vmatpush1.bf16.msra.mxu0 %v1515
        %1993 = vmatprep.subr.bf16.mxu0 %v1520
        %1994 = vmatpush1.bf16.msra.mxu0 %v1519
        %1995 = vmatprep.subr.bf16.mxu0 %v1524
        %1996 = vmatpush1.bf16.msra.mxu0 %v1523
        %1997 = vmatprep.subr.bf16.mxu0 %v1528
        %1998 = vmatpush1.bf16.msra.mxu0 %v1527
        %1999 = vmatprep.subr.bf16.mxu0 %v1532
        %2000 = vmatpush1.bf16.msra.mxu0 %v1531
        %2001 = vmatprep.subr.bf16.mxu0 %v1536
        %2002 = vmatpush1.bf16.msra.mxu0 %v1535
        %2003 = vmatprep.subr.bf16.mxu0 %v1540
        %2004 = vmatpush1.bf16.msra.mxu0 %v1539
        %2005 = vmatprep.subr.bf16.mxu0 %v1544
        %2006 = vmatpush1.bf16.msra.mxu0 %v1543
        %2007 = vmatprep.subr.bf16.mxu0 %v1548
        %2008 = vmatpush1.bf16.msra.mxu0 %v1547
        %2009 = vmatprep.subr.bf16.mxu0 %v1552
        %2010 = vmatpush1.bf16.msra.mxu0 %v1551
        %2011 = vmatprep.subr.bf16.mxu0 %v1556
        %2012 = vmatpush1.bf16.msra.mxu0 %v1555
        %2013 = vmatprep.subr.bf16.mxu0 %v1560
        %2014 = vmatpush1.bf16.msra.mxu0 %v1559
        %2015 = vmatprep.subr.bf16.mxu0 %v1564
        %2016 = vmatpush1.bf16.msra.mxu0 %v1563
        %2017 = vmatprep.subr.bf16.mxu0 %v1568
        %2018 = vmatpush1.bf16.msra.mxu0 %v1567
        %2019 = vmatprep.mubr.bf16.mxu0 %v940
        %2020 = vmatmul.mubr.bf16.gmra.mrb[0].mxu0 %v939
        %v2021 = vpop.f32.mrb[0].mxu0
        %v2022 = vadd.f32 %v1112, %v2021
        %v2023 = vpop.f32.mrb[0].mxu0
        %v2024 = vadd.f32 %v1116, %v2023
        %v2025 = vpop.f32.mrb[0].mxu0
        %v2026 = vadd.f32 %v1112, %v2025
        %v2027 = vpop.f32.mrb[0].mxu0
        %v2028 = vadd.f32 %v1116, %v2027
        %2029 = vmatprep.mubr.bf16.mxu0 %v944
        %2030 = vmatmul.mubr.bf16.gmra.mrb[0].mxu0 %v943
        %v2031 = vpop.f32.mrb[0].mxu0
        %v2032 = vadd.f32 %v1112, %v2031
        %v2033 = vpop.f32.mrb[0].mxu0
        %v2034 = vadd.f32 %v1116, %v2033
        %v2035 = vpop.f32.mrb[0].mxu0
        %v2036 = vadd.f32 %v1112, %v2035
        %v2037 = vpop.f32.mrb[0].mxu0
        %v2038 = vadd.f32 %v1116, %v2037
        %2039 = vmatprep.mubr.bf16.mxu0 %v948
        %2040 = vmatmul.mubr.bf16.gmra.mrb[0].mxu0 %v947
        %v2041 = vpop.f32.mrb[0].mxu0
        %v2042 = vadd.f32 %v1112, %v2041
        %v2043 = vpop.f32.mrb[0].mxu0
        %v2044 = vadd.f32 %v1116, %v2043
        %v2045 = vpop.f32.mrb[0].mxu0
        %v2046 = vadd.f32 %v1112, %v2045
        %v2047 = vpop.f32.mrb[0].mxu0
        %v2048 = vadd.f32 %v1116, %v2047
        %2049 = vmatprep.mubr.bf16.mxu0 %v952
        %2050 = vmatmul.mubr.bf16.gmra.mrb[0].mxu0 %v951
        %v2051 = vpop.f32.mrb[0].mxu0
        %v2052 = vadd.f32 %v1112, %v2051
        %v2053 = vpop.f32.mrb[0].mxu0
        %v2054 = vadd.f32 %v1116, %v2053
        %v2055 = vpop.f32.mrb[0].mxu0
        %v2056 = vadd.f32 %v1112, %v2055
        %v2057 = vpop.f32.mrb[0].mxu0
        %v2058 = vadd.f32 %v1116, %v2057
        %2059 = vmatprep.mubr.bf16.mxu0 %v956
        %2060 = vmatmul.mubr.bf16.gmra.mrb[0].mxu0 %v955
        %v2061 = vpop.f32.mrb[0].mxu0
        %v2062 = vadd.f32 %v1112, %v2061
        %v2063 = vpop.f32.mrb[0].mxu0
        %v2064 = vadd.f32 %v1116, %v2063
        %v2065 = vpop.f32.mrb[0].mxu0
        %v2066 = vadd.f32 %v1112, %v2065
        %v2067 = vpop.f32.mrb[0].mxu0
        %v2068 = vadd.f32 %v1116, %v2067
        %2069 = vmatprep.mubr.bf16.mxu0 %v960
        %2070 = vmatmul.mubr.bf16.gmra.mrb[0].mxu0 %v959
        %v2071 = vpop.f32.mrb[0].mxu0
        %v2072 = vadd.f32 %v1112, %v2071
        %v2073 = vpop.f32.mrb[0].mxu0
        %v2074 = vadd.f32 %v1116, %v2073
        %v2075 = vpop.f32.mrb[0].mxu0
        %v2076 = vadd.f32 %v1112, %v2075
        %v2077 = vpop.f32.mrb[0].mxu0
        %v2078 = vadd.f32 %v1116, %v2077
        %2079 = vmatprep.mubr.bf16.mxu0 %v964
        %2080 = vmatmul.mubr.bf16.gmra.mrb[0].mxu0 %v963
        %v2081 = vpop.f32.mrb[0].mxu0
        %v2082 = vadd.f32 %v1112, %v2081
        %v2083 = vpop.f32.mrb[0].mxu0
        %v2084 = vadd.f32 %v1116, %v2083
        %v2085 = vpop.f32.mrb[0].mxu0
        %v2086 = vadd.f32 %v1112, %v2085
        %v2087 = vpop.f32.mrb[0].mxu0
        %v2088 = vadd.f32 %v1116, %v2087
        %2089 = vmatprep.mubr.bf16.mxu0 %v968
        %2090 = vmatmul.mubr.bf16.gmra.mrb[0].mxu0 %v967
        %v2091 = vpop.f32.mrb[0].mxu0
        %v2092 = vadd.f32 %v1112, %v2091
        %v2093 = vpop.f32.mrb[0].mxu0
        %v2094 = vadd.f32 %v1116, %v2093
        %v2095 = vpop.f32.mrb[0].mxu0
        %v2096 = vadd.f32 %v1112, %v2095
        %v2097 = vpop.f32.mrb[0].mxu0
        %v2098 = vadd.f32 %v1116, %v2097
        %2099 = vdwg.mxu0
        %2100 = vmatprep.subr.bf16.mxu0 %v1572
        %2101 = vmatpush1.bf16.msra.mxu0 %v1571
        %2102 = vmatprep.subr.bf16.mxu0 %v1576
        %2103 = vmatpush1.bf16.msra.mxu0 %v1575
        %2104 = vmatprep.subr.bf16.mxu0 %v1580
        %2105 = vmatpush1.bf16.msra.mxu0 %v1579
        %2106 = vmatprep.subr.bf16.mxu0 %v1584
        %2107 = vmatpush1.bf16.msra.mxu0 %v1583
        %2108 = vmatprep.subr.bf16.mxu0 %v1588
        %2109 = vmatpush1.bf16.msra.mxu0 %v1587
        %2110 = vmatprep.subr.bf16.mxu0 %v1592
        %2111 = vmatpush1.bf16.msra.mxu0 %v1591
        %2112 = vmatprep.subr.bf16.mxu0 %v1596
        %2113 = vmatpush1.bf16.msra.mxu0 %v1595
        %2114 = vmatprep.subr.bf16.mxu0 %v1600
        %2115 = vmatpush1.bf16.msra.mxu0 %v1599
        %2116 = vmatprep.subr.bf16.mxu0 %v1604
        %2117 = vmatpush1.bf16.msra.mxu0 %v1603
        %2118 = vmatprep.subr.bf16.mxu0 %v1608
        %2119 = vmatpush1.bf16.msra.mxu0 %v1607
        %2120 = vmatprep.subr.bf16.mxu0 %v1612
        %2121 = vmatpush1.bf16.msra.mxu0 %v1611
        %2122 = vmatprep.subr.bf16.mxu0 %v1616
        %2123 = vmatpush1.bf16.msra.mxu0 %v1615
        %2124 = vmatprep.subr.bf16.mxu0 %v1620
        %2125 = vmatpush1.bf16.msra.mxu0 %v1619
        %2126 = vmatprep.subr.bf16.mxu0 %v1624
        %2127 = vmatpush1.bf16.msra.mxu0 %v1623
        %2128 = vmatprep.subr.bf16.mxu0 %v1628
        %2129 = vmatpush1.bf16.msra.mxu0 %v1627
        %2130 = vmatprep.subr.bf16.mxu0 %v1632
        %2131 = vmatpush1.bf16.msra.mxu0 %v1631
        %2132 = vmatprep.mubr.bf16.mxu0 %v942
        %2133 = vmatmul.mubr.bf16.gmra.mrb[0].mxu0 %v941
        %v2134 = vpop.f32.mrb[0].mxu0
        %v2135 = vadd.f32 %v2022, %v2134
        %v2136 = vpop.f32.mrb[0].mxu0
        %v2137 = vadd.f32 %v2024, %v2136
        %v2138 = vpop.f32.mrb[0].mxu0
        %v2139 = vadd.f32 %v2026, %v2138
        %v2140 = vpop.f32.mrb[0].mxu0
        %v2141 = vadd.f32 %v2028, %v2140
        %2142 = vmatprep.mubr.bf16.mxu0 %v946
        %2143 = vmatmul.mubr.bf16.gmra.mrb[0].mxu0 %v945
        %v2144 = vpop.f32.mrb[0].mxu0
        %v2145 = vadd.f32 %v2032, %v2144
        %v2146 = vpop.f32.mrb[0].mxu0
        %v2147 = vadd.f32 %v2034, %v2146
        %v2148 = vpop.f32.mrb[0].mxu0
        %v2149 = vadd.f32 %v2036, %v2148
        %v2150 = vpop.f32.mrb[0].mxu0
        %v2151 = vadd.f32 %v2038, %v2150
        %2152 = vmatprep.mubr.bf16.mxu0 %v950
        %2153 = vmatmul.mubr.bf16.gmra.mrb[0].mxu0 %v949
        %v2154 = vpop.f32.mrb[0].mxu0
        %v2155 = vadd.f32 %v2042, %v2154
        %v2156 = vpop.f32.mrb[0].mxu0
        %v2157 = vadd.f32 %v2044, %v2156
        %v2158 = vpop.f32.mrb[0].mxu0
        %v2159 = vadd.f32 %v2046, %v2158
        %v2160 = vpop.f32.mrb[0].mxu0
        %v2161 = vadd.f32 %v2048, %v2160
        %2162 = vmatprep.mubr.bf16.mxu0 %v954
        %2163 = vmatmul.mubr.bf16.gmra.mrb[0].mxu0 %v953
        %v2164 = vpop.f32.mrb[0].mxu0
        %v2165 = vadd.f32 %v2052, %v2164
        %v2166 = vpop.f32.mrb[0].mxu0
        %v2167 = vadd.f32 %v2054, %v2166
        %v2168 = vpop.f32.mrb[0].mxu0
        %v2169 = vadd.f32 %v2056, %v2168
        %v2170 = vpop.f32.mrb[0].mxu0
        %v2171 = vadd.f32 %v2058, %v2170
        %2172 = vmatprep.mubr.bf16.mxu0 %v958
        %2173 = vmatmul.mubr.bf16.gmra.mrb[0].mxu0 %v957
        %v2174 = vpop.f32.mrb[0].mxu0
        %v2175 = vadd.f32 %v2062, %v2174
        %v2176 = vpop.f32.mrb[0].mxu0
        %v2177 = vadd.f32 %v2064, %v2176
        %v2178 = vpop.f32.mrb[0].mxu0
        %v2179 = vadd.f32 %v2066, %v2178
        %v2180 = vpop.f32.mrb[0].mxu0
        %v2181 = vadd.f32 %v2068, %v2180
        %2182 = vmatprep.mubr.bf16.mxu0 %v962
        %2183 = vmatmul.mubr.bf16.gmra.mrb[0].mxu0 %v961
        %v2184 = vpop.f32.mrb[0].mxu0
        %v2185 = vadd.f32 %v2072, %v2184
        %v2186 = vpop.f32.mrb[0].mxu0
        %v2187 = vadd.f32 %v2074, %v2186
        %v2188 = vpop.f32.mrb[0].mxu0
        %v2189 = vadd.f32 %v2076, %v2188
        %v2190 = vpop.f32.mrb[0].mxu0
        %v2191 = vadd.f32 %v2078, %v2190
        %2192 = vmatprep.mubr.bf16.mxu0 %v966
        %2193 = vmatmul.mubr.bf16.gmra.mrb[0].mxu0 %v965
        %v2194 = vpop.f32.mrb[0].mxu0
        %v2195 = vadd.f32 %v2082, %v2194
        %v2196 = vpop.f32.mrb[0].mxu0
        %v2197 = vadd.f32 %v2084, %v2196
        %v2198 = vpop.f32.mrb[0].mxu0
        %v2199 = vadd.f32 %v2086, %v2198
        %v2200 = vpop.f32.mrb[0].mxu0
        %v2201 = vadd.f32 %v2088, %v2200
        %2202 = vmatprep.mubr.bf16.mxu0 %v970
        %2203 = vmatmul.mubr.bf16.gmra.mrb[0].mxu0 %v969
        %v2204 = vpop.f32.mrb[0].mxu0
        %v2205 = vadd.f32 %v2092, %v2204
        %v2206 = vpop.f32.mrb[0].mxu0
        %v2207 = vadd.f32 %v2094, %v2206
        %v2208 = vpop.f32.mrb[0].mxu0
        %v2209 = vadd.f32 %v2096, %v2208
        %v2210 = vpop.f32.mrb[0].mxu0
        %v2211 = vadd.f32 %v2098, %v2210
        %2212 = vdwg.mxu0
        %v2213 = vmax.f32 %v1909, 0.0
        %v2214 = vmax.f32 %v1911, 0.0
        %v2215 = vmax.f32 %v2135, 0.0
        %v2216 = vmax.f32 %v2137, 0.0
        %v2217 = vmax.f32 %v1913, 0.0
        %v2218 = vmax.f32 %v1915, 0.0
        %v2219 = vmax.f32 %v2139, 0.0
        %v2220 = vmax.f32 %v2141, 0.0
        %v2221 = vmax.f32 %v1919, 0.0
        %v2222 = vmax.f32 %v1921, 0.0
        %v2223 = vmax.f32 %v2145, 0.0
        %v2224 = vmax.f32 %v2147, 0.0
        %v2225 = vmax.f32 %v1923, 0.0
        %v2226 = vmax.f32 %v1925, 0.0
        %v2227 = vmax.f32 %v2149, 0.0
        %v2228 = vmax.f32 %v2151, 0.0
        %v2229 = vmax.f32 %v1929, 0.0
        %v2230 = vmax.f32 %v1931, 0.0
        %v2231 = vmax.f32 %v2155, 0.0
        %v2232 = vmax.f32 %v2157, 0.0
        %v2233 = vmax.f32 %v1933, 0.0
        %v2234 = vmax.f32 %v1935, 0.0
        %v2235 = vmax.f32 %v2159, 0.0
        %v2236 = vmax.f32 %v2161, 0.0
        %v2237 = vmax.f32 %v1939, 0.0
        %v2238 = vmax.f32 %v1941, 0.0
        %v2239 = vmax.f32 %v2165, 0.0
        %v2240 = vmax.f32 %v2167, 0.0
        %v2241 = vmax.f32 %v1943, 0.0
        %v2242 = vmax.f32 %v1945, 0.0
        %v2243 = vmax.f32 %v2169, 0.0
        %v2244 = vmax.f32 %v2171, 0.0
        %v2245 = vmax.f32 %v1949, 0.0
        %v2246 = vmax.f32 %v1951, 0.0
        %v2247 = vmax.f32 %v2175, 0.0
        %v2248 = vmax.f32 %v2177, 0.0
        %v2249 = vmax.f32 %v1953, 0.0
        %v2250 = vmax.f32 %v1955, 0.0
        %v2251 = vmax.f32 %v2179, 0.0
        %v2252 = vmax.f32 %v2181, 0.0
        %v2253 = vmax.f32 %v1959, 0.0
        %v2254 = vmax.f32 %v1961, 0.0
        %v2255 = vmax.f32 %v2185, 0.0
        %v2256 = vmax.f32 %v2187, 0.0
        %v2257 = vmax.f32 %v1963, 0.0
        %v2258 = vmax.f32 %v1965, 0.0
        %v2259 = vmax.f32 %v2189, 0.0
        %v2260 = vmax.f32 %v2191, 0.0
        %v2261 = vmax.f32 %v1969, 0.0
        %v2262 = vmax.f32 %v1971, 0.0
        %v2263 = vmax.f32 %v2195, 0.0
        %v2264 = vmax.f32 %v2197, 0.0
        %v2265 = vmax.f32 %v1973, 0.0
        %v2266 = vmax.f32 %v1975, 0.0
        %v2267 = vmax.f32 %v2199, 0.0
        %v2268 = vmax.f32 %v2201, 0.0
        %v2269 = vmax.f32 %v1979, 0.0
        %v2270 = vmax.f32 %v1981, 0.0
        %v2271 = vmax.f32 %v2205, 0.0
        %v2272 = vmax.f32 %v2207, 0.0
        %v2273 = vmax.f32 %v1983, 0.0
        %v2274 = vmax.f32 %v1985, 0.0
        %v2275 = vmax.f32 %v2209, 0.0
        %v2276 = vmax.f32 %v2211, 0.0
        %v2277 = vpack.c.bf16 %v2217, %v2213
        %v2278 = vpack.c.bf16 %v2218, %v2214
        %v2279 = vpack.c.bf16 %v2219, %v2215
        %v2280 = vpack.c.bf16 %v2220, %v2216
        %v2281 = vpack.c.bf16 %v2225, %v2221
        %v2282 = vpack.c.bf16 %v2226, %v2222
        %v2283 = vpack.c.bf16 %v2227, %v2223
        %v2284 = vpack.c.bf16 %v2228, %v2224
        %v2285 = vpack.c.bf16 %v2233, %v2229
        %v2286 = vpack.c.bf16 %v2234, %v2230
        %v2287 = vpack.c.bf16 %v2235, %v2231
        %v2288 = vpack.c.bf16 %v2236, %v2232
        %v2289 = vpack.c.bf16 %v2241, %v2237
        %v2290 = vpack.c.bf16 %v2242, %v2238
        %v2291 = vpack.c.bf16 %v2243, %v2239
        %v2292 = vpack.c.bf16 %v2244, %v2240
        %v2293 = vpack.c.bf16 %v2249, %v2245
        %v2294 = vpack.c.bf16 %v2250, %v2246
        %v2295 = vpack.c.bf16 %v2251, %v2247
        %v2296 = vpack.c.bf16 %v2252, %v2248
        %v2297 = vpack.c.bf16 %v2257, %v2253
        %v2298 = vpack.c.bf16 %v2258, %v2254
        %v2299 = vpack.c.bf16 %v2259, %v2255
        %v2300 = vpack.c.bf16 %v2260, %v2256
        %v2301 = vpack.c.bf16 %v2265, %v2261
        %v2302 = vpack.c.bf16 %v2266, %v2262
        %v2303 = vpack.c.bf16 %v2267, %v2263
        %v2304 = vpack.c.bf16 %v2268, %v2264
        %v2305 = vpack.c.bf16 %v2273, %v2269
        %v2306 = vpack.c.bf16 %v2274, %v2270
        %v2307 = vpack.c.bf16 %v2275, %v2271
        %v2308 = vpack.c.bf16 %v2276, %v2272
        %v2309 = vld [vmem:[#allocation8] sm:$0xff]
        %v2310 = vld [vmem:[#allocation8 + $0x8] sm:$0xff]
        %v2311 = vld [vmem:[#allocation8 + $0x10] sm:$0xff]
        %v2312 = vld [vmem:[#allocation8 + $0x18] sm:$0xff]
        %v2313 = vld [vmem:[#allocation8 + $0x20] sm:$0xff]
        %v2314 = vld [vmem:[#allocation8 + $0x28] sm:$0xff]
        %v2315 = vld [vmem:[#allocation8 + $0x30] sm:$0xff]
        %v2316 = vld [vmem:[#allocation8 + $0x38] sm:$0xff]
        %v2317 = vld [vmem:[#allocation8 + $0x40] sm:$0xff]
        %v2318 = vld [vmem:[#allocation8 + $0x48] sm:$0xff]
        %v2319 = vld [vmem:[#allocation8 + $0x50] sm:$0xff]
        %v2320 = vld [vmem:[#allocation8 + $0x58] sm:$0xff]
        %v2321 = vld [vmem:[#allocation8 + $0x60] sm:$0xff]
        %v2322 = vld [vmem:[#allocation8 + $0x68] sm:$0xff]
        %v2323 = vld [vmem:[#allocation8 + $0x70] sm:$0xff]
        %v2324 = vld [vmem:[#allocation8 + $0x78] sm:$0xff]
        %v2325 = vld [vmem:[#allocation8 + $0x80] sm:$0xff]
        %v2326 = vld [vmem:[#allocation8 + $0x88] sm:$0xff]
        %v2327 = vld [vmem:[#allocation8 + $0x90] sm:$0xff]
        %v2328 = vld [vmem:[#allocation8 + $0x98] sm:$0xff]
        %v2329 = vld [vmem:[#allocation8 + $0xa0] sm:$0xff]
        %v2330 = vld [vmem:[#allocation8 + $0xa8] sm:$0xff]
        %v2331 = vld [vmem:[#allocation8 + $0xb0] sm:$0xff]
        %v2332 = vld [vmem:[#allocation8 + $0xb8] sm:$0xff]
        %v2333 = vld [vmem:[#allocation8 + $0xc0] sm:$0xff]
        %v2334 = vld [vmem:[#allocation8 + $0xc8] sm:$0xff]
        %v2335 = vld [vmem:[#allocation8 + $0xd0] sm:$0xff]
        %v2336 = vld [vmem:[#allocation8 + $0xd8] sm:$0xff]
        %v2337 = vld [vmem:[#allocation8 + $0xe0] sm:$0xff]
        %v2338 = vld [vmem:[#allocation8 + $0xe8] sm:$0xff]
        %v2339 = vld [vmem:[#allocation8 + $0xf0] sm:$0xff]
        %v2340 = vld [vmem:[#allocation8 + $0xf8] sm:$0xff]
        %v2341 = vld [vmem:[#allocation8 + $0x100] sm:$0xff]
        %v2342 = vld [vmem:[#allocation8 + $0x108] sm:$0xff]
        %v2343 = vld [vmem:[#allocation8 + $0x110] sm:$0xff]
        %v2344 = vld [vmem:[#allocation8 + $0x118] sm:$0xff]
        %v2345 = vld [vmem:[#allocation8 + $0x120] sm:$0xff]
        %v2346 = vld [vmem:[#allocation8 + $0x128] sm:$0xff]
        %v2347 = vld [vmem:[#allocation8 + $0x130] sm:$0xff]
        %v2348 = vld [vmem:[#allocation8 + $0x138] sm:$0xff]
        %v2349 = vld [vmem:[#allocation8 + $0x140] sm:$0xff]
        %v2350 = vld [vmem:[#allocation8 + $0x148] sm:$0xff]
        %v2351 = vld [vmem:[#allocation8 + $0x150] sm:$0xff]
        %v2352 = vld [vmem:[#allocation8 + $0x158] sm:$0xff]
        %v2353 = vld [vmem:[#allocation8 + $0x160] sm:$0xff]
        %v2354 = vld [vmem:[#allocation8 + $0x168] sm:$0xff]
        %v2355 = vld [vmem:[#allocation8 + $0x170] sm:$0xff]
        %v2356 = vld [vmem:[#allocation8 + $0x178] sm:$0xff]
        %v2357 = vld [vmem:[#allocation8 + $0x180] sm:$0xff]
        %v2358 = vld [vmem:[#allocation8 + $0x188] sm:$0xff]
        %v2359 = vld [vmem:[#allocation8 + $0x190] sm:$0xff]
        %v2360 = vld [vmem:[#allocation8 + $0x198] sm:$0xff]
        %v2361 = vld [vmem:[#allocation8 + $0x1a0] sm:$0xff]
        %v2362 = vld [vmem:[#allocation8 + $0x1a8] sm:$0xff]
        %v2363 = vld [vmem:[#allocation8 + $0x1b0] sm:$0xff]
        %v2364 = vld [vmem:[#allocation8 + $0x1b8] sm:$0xff]
        %v2365 = vld [vmem:[#allocation8 + $0x1c0] sm:$0xff]
        %v2366 = vld [vmem:[#allocation8 + $0x1c8] sm:$0xff]
        %v2367 = vld [vmem:[#allocation8 + $0x1d0] sm:$0xff]
        %v2368 = vld [vmem:[#allocation8 + $0x1d8] sm:$0xff]
        %v2369 = vld [vmem:[#allocation8 + $0x1e0] sm:$0xff]
        %v2370 = vld [vmem:[#allocation8 + $0x1e8] sm:$0xff]
        %v2371 = vld [vmem:[#allocation8 + $0x1f0] sm:$0xff]
        %v2372 = vld [vmem:[#allocation8 + $0x1f8] sm:$0xff]
        %v2373 = vld [vmem:[#allocation8 + $0x200] sm:$0xff]
        %v2374 = vld [vmem:[#allocation8 + $0x208] sm:$0xff]
        %v2375 = vld [vmem:[#allocation8 + $0x210] sm:$0xff]
        %v2376 = vld [vmem:[#allocation8 + $0x218] sm:$0xff]
        %v2377 = vld [vmem:[#allocation8 + $0x220] sm:$0xff]
        %v2378 = vld [vmem:[#allocation8 + $0x228] sm:$0xff]
        %v2379 = vld [vmem:[#allocation8 + $0x230] sm:$0xff]
        %v2380 = vld [vmem:[#allocation8 + $0x238] sm:$0xff]
        %v2381 = vld [vmem:[#allocation8 + $0x240] sm:$0xff]
        %v2382 = vld [vmem:[#allocation8 + $0x248] sm:$0xff]
        %v2383 = vld [vmem:[#allocation8 + $0x250] sm:$0xff]
        %v2384 = vld [vmem:[#allocation8 + $0x258] sm:$0xff]
        %v2385 = vld [vmem:[#allocation8 + $0x260] sm:$0xff]
        %v2386 = vld [vmem:[#allocation8 + $0x268] sm:$0xff]
        %v2387 = vld [vmem:[#allocation8 + $0x270] sm:$0xff]
        %v2388 = vld [vmem:[#allocation8 + $0x278] sm:$0xff]
        %v2389 = vld [vmem:[#allocation8 + $0x280] sm:$0xff]
        %v2390 = vld [vmem:[#allocation8 + $0x288] sm:$0xff]
        %v2391 = vld [vmem:[#allocation8 + $0x290] sm:$0xff]
        %v2392 = vld [vmem:[#allocation8 + $0x298] sm:$0xff]
        %v2393 = vld [vmem:[#allocation8 + $0x2a0] sm:$0xff]
        %v2394 = vld [vmem:[#allocation8 + $0x2a8] sm:$0xff]
        %v2395 = vld [vmem:[#allocation8 + $0x2b0] sm:$0xff]
        %v2396 = vld [vmem:[#allocation8 + $0x2b8] sm:$0xff]
        %v2397 = vld [vmem:[#allocation8 + $0x2c0] sm:$0xff]
        %v2398 = vld [vmem:[#allocation8 + $0x2c8] sm:$0xff]
        %v2399 = vld [vmem:[#allocation8 + $0x2d0] sm:$0xff]
        %v2400 = vld [vmem:[#allocation8 + $0x2d8] sm:$0xff]
        %v2401 = vld [vmem:[#allocation8 + $0x2e0] sm:$0xff]
        %v2402 = vld [vmem:[#allocation8 + $0x2e8] sm:$0xff]
        %v2403 = vld [vmem:[#allocation8 + $0x2f0] sm:$0xff]
        %v2404 = vld [vmem:[#allocation8 + $0x2f8] sm:$0xff]
        %v2405 = vld [vmem:[#allocation8 + $0x300] sm:$0xff]
        %v2406 = vld [vmem:[#allocation8 + $0x308] sm:$0xff]
        %v2407 = vld [vmem:[#allocation8 + $0x310] sm:$0xff]
        %v2408 = vld [vmem:[#allocation8 + $0x318] sm:$0xff]
        %v2409 = vld [vmem:[#allocation8 + $0x320] sm:$0xff]
        %v2410 = vld [vmem:[#allocation8 + $0x328] sm:$0xff]
        %v2411 = vld [vmem:[#allocation8 + $0x330] sm:$0xff]
        %v2412 = vld [vmem:[#allocation8 + $0x338] sm:$0xff]
        %v2413 = vld [vmem:[#allocation8 + $0x340] sm:$0xff]
        %v2414 = vld [vmem:[#allocation8 + $0x348] sm:$0xff]
        %v2415 = vld [vmem:[#allocation8 + $0x350] sm:$0xff]
        %v2416 = vld [vmem:[#allocation8 + $0x358] sm:$0xff]
        %v2417 = vld [vmem:[#allocation8 + $0x360] sm:$0xff]
        %v2418 = vld [vmem:[#allocation8 + $0x368] sm:$0xff]
        %v2419 = vld [vmem:[#allocation8 + $0x370] sm:$0xff]
        %v2420 = vld [vmem:[#allocation8 + $0x378] sm:$0xff]
        %v2421 = vld [vmem:[#allocation8 + $0x380] sm:$0xff]
        %v2422 = vld [vmem:[#allocation8 + $0x388] sm:$0xff]
        %v2423 = vld [vmem:[#allocation8 + $0x390] sm:$0xff]
        %v2424 = vld [vmem:[#allocation8 + $0x398] sm:$0xff]
        %v2425 = vld [vmem:[#allocation8 + $0x3a0] sm:$0xff]
        %v2426 = vld [vmem:[#allocation8 + $0x3a8] sm:$0xff]
        %v2427 = vld [vmem:[#allocation8 + $0x3b0] sm:$0xff]
        %v2428 = vld [vmem:[#allocation8 + $0x3b8] sm:$0xff]
        %v2429 = vld [vmem:[#allocation8 + $0x3c0] sm:$0xff]
        %v2430 = vld [vmem:[#allocation8 + $0x3c8] sm:$0xff]
        %v2431 = vld [vmem:[#allocation8 + $0x3d0] sm:$0xff]
        %v2432 = vld [vmem:[#allocation8 + $0x3d8] sm:$0xff]
        %v2433 = vld [vmem:[#allocation8 + $0x3e0] sm:$0xff]
        %v2434 = vld [vmem:[#allocation8 + $0x3e8] sm:$0xff]
        %v2435 = vld [vmem:[#allocation8 + $0x3f0] sm:$0xff]
        %v2436 = vld [vmem:[#allocation8 + $0x3f8] sm:$0xff]
        %v2437 = vld [vmem:[%s7] sm:$0xf]
        %v2439 = vlaneseq
        %v2440 = vshrl.u32 %v2439, 7
        %v2441 = vsub.s32 0, %v2440
        %v2442 = vrot.slane %v2437, %v2441
        %v2443 = vlaneseq
        %v2444 = vshrl.u32 %v2443, 7
        %v2445 = vsub.s32 1, %v2444
        %v2446 = vrot.slane %v2437, %v2445
        %v2447 = vlaneseq
        %v2448 = vshrl.u32 %v2447, 7
        %v2449 = vsub.s32 2, %v2448
        %v2450 = vrot.slane %v2437, %v2449
        %v2451 = vlaneseq
        %v2452 = vshrl.u32 %v2451, 7
        %v2453 = vsub.s32 3, %v2452
        %v2454 = vrot.slane %v2437, %v2453
        %v2587 = vunpack.c.l.b16 %v2309
        %v2588 = vunpack.c.h.b16 %v2309
        %v2589 = vunpack.c.l.b16 %v2310
        %v2590 = vunpack.c.h.b16 %v2310
        %v2591 = vunpack.c.l.b16 %v2311
        %v2592 = vunpack.c.h.b16 %v2311
        %v2593 = vunpack.c.l.b16 %v2312
        %v2594 = vunpack.c.h.b16 %v2312
        %v2595 = vunpack.c.l.b16 %v2313
        %v2596 = vunpack.c.h.b16 %v2313
        %v2597 = vunpack.c.l.b16 %v2314
        %v2598 = vunpack.c.h.b16 %v2314
        %v2599 = vunpack.c.l.b16 %v2315
        %v2600 = vunpack.c.h.b16 %v2315
        %v2601 = vunpack.c.l.b16 %v2316
        %v2602 = vunpack.c.h.b16 %v2316
        %v2603 = vunpack.c.l.b16 %v2317
        %v2604 = vunpack.c.h.b16 %v2317
        %v2605 = vunpack.c.l.b16 %v2318
        %v2606 = vunpack.c.h.b16 %v2318
        %v2607 = vunpack.c.l.b16 %v2319
        %v2608 = vunpack.c.h.b16 %v2319
        %v2609 = vunpack.c.l.b16 %v2320
        %v2610 = vunpack.c.h.b16 %v2320
        %v2611 = vunpack.c.l.b16 %v2321
        %v2612 = vunpack.c.h.b16 %v2321
        %v2613 = vunpack.c.l.b16 %v2322
        %v2614 = vunpack.c.h.b16 %v2322
        %v2615 = vunpack.c.l.b16 %v2323
        %v2616 = vunpack.c.h.b16 %v2323
        %v2617 = vunpack.c.l.b16 %v2324
        %v2618 = vunpack.c.h.b16 %v2324
        %v2619 = vunpack.c.l.b16 %v2325
        %v2620 = vunpack.c.h.b16 %v2325
        %v2621 = vunpack.c.l.b16 %v2326
        %v2622 = vunpack.c.h.b16 %v2326
        %v2623 = vunpack.c.l.b16 %v2327
        %v2624 = vunpack.c.h.b16 %v2327
        %v2625 = vunpack.c.l.b16 %v2328
        %v2626 = vunpack.c.h.b16 %v2328
        %v2627 = vunpack.c.l.b16 %v2329
        %v2628 = vunpack.c.h.b16 %v2329
        %v2629 = vunpack.c.l.b16 %v2330
        %v2630 = vunpack.c.h.b16 %v2330
        %v2631 = vunpack.c.l.b16 %v2331
        %v2632 = vunpack.c.h.b16 %v2331
        %v2633 = vunpack.c.l.b16 %v2332
        %v2634 = vunpack.c.h.b16 %v2332
        %v2635 = vunpack.c.l.b16 %v2333
        %v2636 = vunpack.c.h.b16 %v2333
        %v2637 = vunpack.c.l.b16 %v2334
        %v2638 = vunpack.c.h.b16 %v2334
        %v2639 = vunpack.c.l.b16 %v2335
        %v2640 = vunpack.c.h.b16 %v2335
        %v2641 = vunpack.c.l.b16 %v2336
        %v2642 = vunpack.c.h.b16 %v2336
        %v2643 = vunpack.c.l.b16 %v2337
        %v2644 = vunpack.c.h.b16 %v2337
        %v2645 = vunpack.c.l.b16 %v2338
        %v2646 = vunpack.c.h.b16 %v2338
        %v2647 = vunpack.c.l.b16 %v2339
        %v2648 = vunpack.c.h.b16 %v2339
        %v2649 = vunpack.c.l.b16 %v2340
        %v2650 = vunpack.c.h.b16 %v2340
        %v2651 = vunpack.c.l.b16 %v2341
        %v2652 = vunpack.c.h.b16 %v2341
        %v2653 = vunpack.c.l.b16 %v2342
        %v2654 = vunpack.c.h.b16 %v2342
        %v2655 = vunpack.c.l.b16 %v2343
        %v2656 = vunpack.c.h.b16 %v2343
        %v2657 = vunpack.c.l.b16 %v2344
        %v2658 = vunpack.c.h.b16 %v2344
        %v2659 = vunpack.c.l.b16 %v2345
        %v2660 = vunpack.c.h.b16 %v2345
        %v2661 = vunpack.c.l.b16 %v2346
        %v2662 = vunpack.c.h.b16 %v2346
        %v2663 = vunpack.c.l.b16 %v2347
        %v2664 = vunpack.c.h.b16 %v2347
        %v2665 = vunpack.c.l.b16 %v2348
        %v2666 = vunpack.c.h.b16 %v2348
        %v2667 = vunpack.c.l.b16 %v2349
        %v2668 = vunpack.c.h.b16 %v2349
        %v2669 = vunpack.c.l.b16 %v2350
        %v2670 = vunpack.c.h.b16 %v2350
        %v2671 = vunpack.c.l.b16 %v2351
        %v2672 = vunpack.c.h.b16 %v2351
        %v2673 = vunpack.c.l.b16 %v2352
        %v2674 = vunpack.c.h.b16 %v2352
        %v2675 = vunpack.c.l.b16 %v2353
        %v2676 = vunpack.c.h.b16 %v2353
        %v2677 = vunpack.c.l.b16 %v2354
        %v2678 = vunpack.c.h.b16 %v2354
        %v2679 = vunpack.c.l.b16 %v2355
        %v2680 = vunpack.c.h.b16 %v2355
        %v2681 = vunpack.c.l.b16 %v2356
        %v2682 = vunpack.c.h.b16 %v2356
        %v2683 = vunpack.c.l.b16 %v2357
        %v2684 = vunpack.c.h.b16 %v2357
        %v2685 = vunpack.c.l.b16 %v2358
        %v2686 = vunpack.c.h.b16 %v2358
        %v2687 = vunpack.c.l.b16 %v2359
        %v2688 = vunpack.c.h.b16 %v2359
        %v2689 = vunpack.c.l.b16 %v2360
        %v2690 = vunpack.c.h.b16 %v2360
        %v2691 = vunpack.c.l.b16 %v2361
        %v2692 = vunpack.c.h.b16 %v2361
        %v2693 = vunpack.c.l.b16 %v2362
        %v2694 = vunpack.c.h.b16 %v2362
        %v2695 = vunpack.c.l.b16 %v2363
        %v2696 = vunpack.c.h.b16 %v2363
        %v2697 = vunpack.c.l.b16 %v2364
        %v2698 = vunpack.c.h.b16 %v2364
        %v2699 = vunpack.c.l.b16 %v2365
        %v2700 = vunpack.c.h.b16 %v2365
        %v2701 = vunpack.c.l.b16 %v2366
        %v2702 = vunpack.c.h.b16 %v2366
        %v2703 = vunpack.c.l.b16 %v2367
        %v2704 = vunpack.c.h.b16 %v2367
        %v2705 = vunpack.c.l.b16 %v2368
        %v2706 = vunpack.c.h.b16 %v2368
        %v2707 = vunpack.c.l.b16 %v2369
        %v2708 = vunpack.c.h.b16 %v2369
        %v2709 = vunpack.c.l.b16 %v2370
        %v2710 = vunpack.c.h.b16 %v2370
        %v2711 = vunpack.c.l.b16 %v2371
        %v2712 = vunpack.c.h.b16 %v2371
        %v2713 = vunpack.c.l.b16 %v2372
        %v2714 = vunpack.c.h.b16 %v2372
        %v2715 = vunpack.c.l.b16 %v2373
        %v2716 = vunpack.c.h.b16 %v2373
        %v2717 = vunpack.c.l.b16 %v2374
        %v2718 = vunpack.c.h.b16 %v2374
        %v2719 = vunpack.c.l.b16 %v2375
        %v2720 = vunpack.c.h.b16 %v2375
        %v2721 = vunpack.c.l.b16 %v2376
        %v2722 = vunpack.c.h.b16 %v2376
        %v2723 = vunpack.c.l.b16 %v2377
        %v2724 = vunpack.c.h.b16 %v2377
        %v2725 = vunpack.c.l.b16 %v2378
        %v2726 = vunpack.c.h.b16 %v2378
        %v2727 = vunpack.c.l.b16 %v2379
        %v2728 = vunpack.c.h.b16 %v2379
        %v2729 = vunpack.c.l.b16 %v2380
        %v2730 = vunpack.c.h.b16 %v2380
        %v2731 = vunpack.c.l.b16 %v2381
        %v2732 = vunpack.c.h.b16 %v2381
        %v2733 = vunpack.c.l.b16 %v2382
        %v2734 = vunpack.c.h.b16 %v2382
        %v2735 = vunpack.c.l.b16 %v2383
        %v2736 = vunpack.c.h.b16 %v2383
        %v2737 = vunpack.c.l.b16 %v2384
        %v2738 = vunpack.c.h.b16 %v2384
        %v2739 = vunpack.c.l.b16 %v2385
        %v2740 = vunpack.c.h.b16 %v2385
        %v2741 = vunpack.c.l.b16 %v2386
        %v2742 = vunpack.c.h.b16 %v2386
        %v2743 = vunpack.c.l.b16 %v2387
        %v2744 = vunpack.c.h.b16 %v2387
        %v2745 = vunpack.c.l.b16 %v2388
        %v2746 = vunpack.c.h.b16 %v2388
        %v2747 = vunpack.c.l.b16 %v2389
        %v2748 = vunpack.c.h.b16 %v2389
        %v2749 = vunpack.c.l.b16 %v2390
        %v2750 = vunpack.c.h.b16 %v2390
        %v2751 = vunpack.c.l.b16 %v2391
        %v2752 = vunpack.c.h.b16 %v2391
        %v2753 = vunpack.c.l.b16 %v2392
        %v2754 = vunpack.c.h.b16 %v2392
        %v2755 = vunpack.c.l.b16 %v2393
        %v2756 = vunpack.c.h.b16 %v2393
        %v2757 = vunpack.c.l.b16 %v2394
        %v2758 = vunpack.c.h.b16 %v2394
        %v2759 = vunpack.c.l.b16 %v2395
        %v2760 = vunpack.c.h.b16 %v2395
        %v2761 = vunpack.c.l.b16 %v2396
        %v2762 = vunpack.c.h.b16 %v2396
        %v2763 = vunpack.c.l.b16 %v2397
        %v2764 = vunpack.c.h.b16 %v2397
        %v2765 = vunpack.c.l.b16 %v2398
        %v2766 = vunpack.c.h.b16 %v2398
        %v2767 = vunpack.c.l.b16 %v2399
        %v2768 = vunpack.c.h.b16 %v2399
        %v2769 = vunpack.c.l.b16 %v2400
        %v2770 = vunpack.c.h.b16 %v2400
        %v2771 = vunpack.c.l.b16 %v2401
        %v2772 = vunpack.c.h.b16 %v2401
        %v2773 = vunpack.c.l.b16 %v2402
        %v2774 = vunpack.c.h.b16 %v2402
        %v2775 = vunpack.c.l.b16 %v2403
        %v2776 = vunpack.c.h.b16 %v2403
        %v2777 = vunpack.c.l.b16 %v2404
        %v2778 = vunpack.c.h.b16 %v2404
        %v2779 = vunpack.c.l.b16 %v2405
        %v2780 = vunpack.c.h.b16 %v2405
        %v2781 = vunpack.c.l.b16 %v2406
        %v2782 = vunpack.c.h.b16 %v2406
        %v2783 = vunpack.c.l.b16 %v2407
        %v2784 = vunpack.c.h.b16 %v2407
        %v2785 = vunpack.c.l.b16 %v2408
        %v2786 = vunpack.c.h.b16 %v2408
        %v2787 = vunpack.c.l.b16 %v2409
        %v2788 = vunpack.c.h.b16 %v2409
        %v2789 = vunpack.c.l.b16 %v2410
        %v2790 = vunpack.c.h.b16 %v2410
        %v2791 = vunpack.c.l.b16 %v2411
        %v2792 = vunpack.c.h.b16 %v2411
        %v2793 = vunpack.c.l.b16 %v2412
        %v2794 = vunpack.c.h.b16 %v2412
        %v2795 = vunpack.c.l.b16 %v2413
        %v2796 = vunpack.c.h.b16 %v2413
        %v2797 = vunpack.c.l.b16 %v2414
        %v2798 = vunpack.c.h.b16 %v2414
        %v2799 = vunpack.c.l.b16 %v2415
        %v2800 = vunpack.c.h.b16 %v2415
        %v2801 = vunpack.c.l.b16 %v2416
        %v2802 = vunpack.c.h.b16 %v2416
        %v2803 = vunpack.c.l.b16 %v2417
        %v2804 = vunpack.c.h.b16 %v2417
        %v2805 = vunpack.c.l.b16 %v2418
        %v2806 = vunpack.c.h.b16 %v2418
        %v2807 = vunpack.c.l.b16 %v2419
        %v2808 = vunpack.c.h.b16 %v2419
        %v2809 = vunpack.c.l.b16 %v2420
        %v2810 = vunpack.c.h.b16 %v2420
        %v2811 = vunpack.c.l.b16 %v2421
        %v2812 = vunpack.c.h.b16 %v2421
        %v2813 = vunpack.c.l.b16 %v2422
        %v2814 = vunpack.c.h.b16 %v2422
        %v2815 = vunpack.c.l.b16 %v2423
        %v2816 = vunpack.c.h.b16 %v2423
        %v2817 = vunpack.c.l.b16 %v2424
        %v2818 = vunpack.c.h.b16 %v2424
        %v2819 = vunpack.c.l.b16 %v2425
        %v2820 = vunpack.c.h.b16 %v2425
        %v2821 = vunpack.c.l.b16 %v2426
        %v2822 = vunpack.c.h.b16 %v2426
        %v2823 = vunpack.c.l.b16 %v2427
        %v2824 = vunpack.c.h.b16 %v2427
        %v2825 = vunpack.c.l.b16 %v2428
        %v2826 = vunpack.c.h.b16 %v2428
        %v2827 = vunpack.c.l.b16 %v2429
        %v2828 = vunpack.c.h.b16 %v2429
        %v2829 = vunpack.c.l.b16 %v2430
        %v2830 = vunpack.c.h.b16 %v2430
        %v2831 = vunpack.c.l.b16 %v2431
        %v2832 = vunpack.c.h.b16 %v2431
        %v2833 = vunpack.c.l.b16 %v2432
        %v2834 = vunpack.c.h.b16 %v2432
        %v2835 = vunpack.c.l.b16 %v2433
        %v2836 = vunpack.c.h.b16 %v2433
        %v2837 = vunpack.c.l.b16 %v2434
        %v2838 = vunpack.c.h.b16 %v2434
        %v2839 = vunpack.c.l.b16 %v2435
        %v2840 = vunpack.c.h.b16 %v2435
        %v2841 = vunpack.c.l.b16 %v2436
        %v2842 = vunpack.c.h.b16 %v2436
        %v2843 = vpack.c.b16 %v2591, %v2587
        %v2844 = vpack.c.b16 %v2592, %v2588
        %v2845 = vpack.c.b16 %v2593, %v2589
        %v2846 = vpack.c.b16 %v2594, %v2590
        %v2847 = vpack.c.b16 %v2599, %v2595
        %v2848 = vpack.c.b16 %v2600, %v2596
        %v2849 = vpack.c.b16 %v2601, %v2597
        %v2850 = vpack.c.b16 %v2602, %v2598
        %v2851 = vpack.c.b16 %v2607, %v2603
        %v2852 = vpack.c.b16 %v2608, %v2604
        %v2853 = vpack.c.b16 %v2609, %v2605
        %v2854 = vpack.c.b16 %v2610, %v2606
        %v2855 = vpack.c.b16 %v2615, %v2611
        %v2856 = vpack.c.b16 %v2616, %v2612
        %v2857 = vpack.c.b16 %v2617, %v2613
        %v2858 = vpack.c.b16 %v2618, %v2614
        %v2859 = vpack.c.b16 %v2623, %v2619
        %v2860 = vpack.c.b16 %v2624, %v2620
        %v2861 = vpack.c.b16 %v2625, %v2621
        %v2862 = vpack.c.b16 %v2626, %v2622
        %v2863 = vpack.c.b16 %v2631, %v2627
        %v2864 = vpack.c.b16 %v2632, %v2628
        %v2865 = vpack.c.b16 %v2633, %v2629
        %v2866 = vpack.c.b16 %v2634, %v2630
        %v2867 = vpack.c.b16 %v2639, %v2635
        %v2868 = vpack.c.b16 %v2640, %v2636
        %v2869 = vpack.c.b16 %v2641, %v2637
        %v2870 = vpack.c.b16 %v2642, %v2638
        %v2871 = vpack.c.b16 %v2647, %v2643
        %v2872 = vpack.c.b16 %v2648, %v2644
        %v2873 = vpack.c.b16 %v2649, %v2645
        %v2874 = vpack.c.b16 %v2650, %v2646
        %v2875 = vpack.c.b16 %v2655, %v2651
        %v2876 = vpack.c.b16 %v2656, %v2652
        %v2877 = vpack.c.b16 %v2657, %v2653
        %v2878 = vpack.c.b16 %v2658, %v2654
        %v2879 = vpack.c.b16 %v2663, %v2659
        %v2880 = vpack.c.b16 %v2664, %v2660
        %v2881 = vpack.c.b16 %v2665, %v2661
        %v2882 = vpack.c.b16 %v2666, %v2662
        %v2883 = vpack.c.b16 %v2671, %v2667
        %v2884 = vpack.c.b16 %v2672, %v2668
        %v2885 = vpack.c.b16 %v2673, %v2669
        %v2886 = vpack.c.b16 %v2674, %v2670
        %v2887 = vpack.c.b16 %v2679, %v2675
        %v2888 = vpack.c.b16 %v2680, %v2676
        %v2889 = vpack.c.b16 %v2681, %v2677
        %v2890 = vpack.c.b16 %v2682, %v2678
        %v2891 = vpack.c.b16 %v2687, %v2683
        %v2892 = vpack.c.b16 %v2688, %v2684
        %v2893 = vpack.c.b16 %v2689, %v2685
        %v2894 = vpack.c.b16 %v2690, %v2686
        %v2895 = vpack.c.b16 %v2695, %v2691
        %v2896 = vpack.c.b16 %v2696, %v2692
        %v2897 = vpack.c.b16 %v2697, %v2693
        %v2898 = vpack.c.b16 %v2698, %v2694
        %v2899 = vpack.c.b16 %v2703, %v2699
        %v2900 = vpack.c.b16 %v2704, %v2700
        %v2901 = vpack.c.b16 %v2705, %v2701
        %v2902 = vpack.c.b16 %v2706, %v2702
        %v2903 = vpack.c.b16 %v2711, %v2707
        %v2904 = vpack.c.b16 %v2712, %v2708
        %v2905 = vpack.c.b16 %v2713, %v2709
        %v2906 = vpack.c.b16 %v2714, %v2710
        %v2907 = vpack.c.b16 %v2719, %v2715
        %v2908 = vpack.c.b16 %v2720, %v2716
        %v2909 = vpack.c.b16 %v2721, %v2717
        %v2910 = vpack.c.b16 %v2722, %v2718
        %v2911 = vpack.c.b16 %v2727, %v2723
        %v2912 = vpack.c.b16 %v2728, %v2724
        %v2913 = vpack.c.b16 %v2729, %v2725
        %v2914 = vpack.c.b16 %v2730, %v2726
        %v2915 = vpack.c.b16 %v2735, %v2731
        %v2916 = vpack.c.b16 %v2736, %v2732
        %v2917 = vpack.c.b16 %v2737, %v2733
        %v2918 = vpack.c.b16 %v2738, %v2734
        %v2919 = vpack.c.b16 %v2743, %v2739
        %v2920 = vpack.c.b16 %v2744, %v2740
        %v2921 = vpack.c.b16 %v2745, %v2741
        %v2922 = vpack.c.b16 %v2746, %v2742
        %v2923 = vpack.c.b16 %v2751, %v2747
        %v2924 = vpack.c.b16 %v2752, %v2748
        %v2925 = vpack.c.b16 %v2753, %v2749
        %v2926 = vpack.c.b16 %v2754, %v2750
        %v2927 = vpack.c.b16 %v2759, %v2755
        %v2928 = vpack.c.b16 %v2760, %v2756
        %v2929 = vpack.c.b16 %v2761, %v2757
        %v2930 = vpack.c.b16 %v2762, %v2758
        %v2931 = vpack.c.b16 %v2767, %v2763
        %v2932 = vpack.c.b16 %v2768, %v2764
        %v2933 = vpack.c.b16 %v2769, %v2765
        %v2934 = vpack.c.b16 %v2770, %v2766
        %v2935 = vpack.c.b16 %v2775, %v2771
        %v2936 = vpack.c.b16 %v2776, %v2772
        %v2937 = vpack.c.b16 %v2777, %v2773
        %v2938 = vpack.c.b16 %v2778, %v2774
        %v2939 = vpack.c.b16 %v2783, %v2779
        %v2940 = vpack.c.b16 %v2784, %v2780
        %v2941 = vpack.c.b16 %v2785, %v2781
        %v2942 = vpack.c.b16 %v2786, %v2782
        %v2943 = vpack.c.b16 %v2791, %v2787
        %v2944 = vpack.c.b16 %v2792, %v2788
        %v2945 = vpack.c.b16 %v2793, %v2789
        %v2946 = vpack.c.b16 %v2794, %v2790
        %v2947 = vpack.c.b16 %v2799, %v2795
        %v2948 = vpack.c.b16 %v2800, %v2796
        %v2949 = vpack.c.b16 %v2801, %v2797
        %v2950 = vpack.c.b16 %v2802, %v2798
        %v2951 = vpack.c.b16 %v2807, %v2803
        %v2952 = vpack.c.b16 %v2808, %v2804
        %v2953 = vpack.c.b16 %v2809, %v2805
        %v2954 = vpack.c.b16 %v2810, %v2806
        %v2955 = vpack.c.b16 %v2815, %v2811
        %v2956 = vpack.c.b16 %v2816, %v2812
        %v2957 = vpack.c.b16 %v2817, %v2813
        %v2958 = vpack.c.b16 %v2818, %v2814
        %v2959 = vpack.c.b16 %v2823, %v2819
        %v2960 = vpack.c.b16 %v2824, %v2820
        %v2961 = vpack.c.b16 %v2825, %v2821
        %v2962 = vpack.c.b16 %v2826, %v2822
        %v2963 = vpack.c.b16 %v2831, %v2827
        %v2964 = vpack.c.b16 %v2832, %v2828
        %v2965 = vpack.c.b16 %v2833, %v2829
        %v2966 = vpack.c.b16 %v2834, %v2830
        %v2967 = vpack.c.b16 %v2839, %v2835
        %v2968 = vpack.c.b16 %v2840, %v2836
        %v2969 = vpack.c.b16 %v2841, %v2837
        %v2970 = vpack.c.b16 %v2842, %v2838
        %3099 = vmatprep.subr.bf16.mxu0 %v2844
        %3100 = vmatpush1.bf16.msra.mxu0 %v2843
        %3101 = vmatprep.subr.bf16.mxu0 %v2848
        %3102 = vmatpush1.bf16.msra.mxu0 %v2847
        %3103 = vmatprep.subr.bf16.mxu0 %v2852
        %3104 = vmatpush1.bf16.msra.mxu0 %v2851
        %3105 = vmatprep.subr.bf16.mxu0 %v2856
        %3106 = vmatpush1.bf16.msra.mxu0 %v2855
        %3107 = vmatprep.subr.bf16.mxu0 %v2860
        %3108 = vmatpush1.bf16.msra.mxu0 %v2859
        %3109 = vmatprep.subr.bf16.mxu0 %v2864
        %3110 = vmatpush1.bf16.msra.mxu0 %v2863
        %3111 = vmatprep.subr.bf16.mxu0 %v2868
        %3112 = vmatpush1.bf16.msra.mxu0 %v2867
        %3113 = vmatprep.subr.bf16.mxu0 %v2872
        %3114 = vmatpush1.bf16.msra.mxu0 %v2871
        %3115 = vmatprep.subr.bf16.mxu0 %v2876
        %3116 = vmatpush1.bf16.msra.mxu0 %v2875
        %3117 = vmatprep.subr.bf16.mxu0 %v2880
        %3118 = vmatpush1.bf16.msra.mxu0 %v2879
        %3119 = vmatprep.subr.bf16.mxu0 %v2884
        %3120 = vmatpush1.bf16.msra.mxu0 %v2883
        %3121 = vmatprep.subr.bf16.mxu0 %v2888
        %3122 = vmatpush1.bf16.msra.mxu0 %v2887
        %3123 = vmatprep.subr.bf16.mxu0 %v2892
        %3124 = vmatpush1.bf16.msra.mxu0 %v2891
        %3125 = vmatprep.subr.bf16.mxu0 %v2896
        %3126 = vmatpush1.bf16.msra.mxu0 %v2895
        %3127 = vmatprep.subr.bf16.mxu0 %v2900
        %3128 = vmatpush1.bf16.msra.mxu0 %v2899
        %3129 = vmatprep.subr.bf16.mxu0 %v2904
        %3130 = vmatpush1.bf16.msra.mxu0 %v2903
        %3131 = vmatprep.mubr.bf16.mxu0 %v2278
        %3132 = vmatmul.mubr.bf16.gmra.mrb[0].mxu0 %v2277
        %v3133 = vpop.f32.mrb[0].mxu0
        %v3134 = vadd.f32 %v2442, %v3133
        %v3135 = vpop.f32.mrb[0].mxu0
        %v3136 = vadd.f32 %v2446, %v3135
        %v3137 = vpop.f32.mrb[0].mxu0
        %v3138 = vadd.f32 %v2442, %v3137
        %v3139 = vpop.f32.mrb[0].mxu0
        %v3140 = vadd.f32 %v2446, %v3139
        %3141 = vmatprep.mubr.bf16.mxu0 %v2282
        %3142 = vmatmul.mubr.bf16.gmra.mrb[0].mxu0 %v2281
        %v3143 = vpop.f32.mrb[0].mxu0
        %v3144 = vadd.f32 %v2442, %v3143
        %v3145 = vpop.f32.mrb[0].mxu0
        %v3146 = vadd.f32 %v2446, %v3145
        %v3147 = vpop.f32.mrb[0].mxu0
        %v3148 = vadd.f32 %v2442, %v3147
        %v3149 = vpop.f32.mrb[0].mxu0
        %v3150 = vadd.f32 %v2446, %v3149
        %3151 = vmatprep.mubr.bf16.mxu0 %v2286
        %3152 = vmatmul.mubr.bf16.gmra.mrb[0].mxu0 %v2285
        %v3153 = vpop.f32.mrb[0].mxu0
        %v3154 = vadd.f32 %v2442, %v3153
        %v3155 = vpop.f32.mrb[0].mxu0
        %v3156 = vadd.f32 %v2446, %v3155
        %v3157 = vpop.f32.mrb[0].mxu0
        %v3158 = vadd.f32 %v2442, %v3157
        %v3159 = vpop.f32.mrb[0].mxu0
        %v3160 = vadd.f32 %v2446, %v3159
        %3161 = vmatprep.mubr.bf16.mxu0 %v2290
        %3162 = vmatmul.mubr.bf16.gmra.mrb[0].mxu0 %v2289
        %v3163 = vpop.f32.mrb[0].mxu0
        %v3164 = vadd.f32 %v2442, %v3163
        %v3165 = vpop.f32.mrb[0].mxu0
        %v3166 = vadd.f32 %v2446, %v3165
        %v3167 = vpop.f32.mrb[0].mxu0
        %v3168 = vadd.f32 %v2442, %v3167
        %v3169 = vpop.f32.mrb[0].mxu0
        %v3170 = vadd.f32 %v2446, %v3169
        %3171 = vmatprep.mubr.bf16.mxu0 %v2294
        %3172 = vmatmul.mubr.bf16.gmra.mrb[0].mxu0 %v2293
        %v3173 = vpop.f32.mrb[0].mxu0
        %v3174 = vadd.f32 %v2442, %v3173
        %v3175 = vpop.f32.mrb[0].mxu0
        %v3176 = vadd.f32 %v2446, %v3175
        %v3177 = vpop.f32.mrb[0].mxu0
        %v3178 = vadd.f32 %v2442, %v3177
        %v3179 = vpop.f32.mrb[0].mxu0
        %v3180 = vadd.f32 %v2446, %v3179
        %3181 = vmatprep.mubr.bf16.mxu0 %v2298
        %3182 = vmatmul.mubr.bf16.gmra.mrb[0].mxu0 %v2297
        %v3183 = vpop.f32.mrb[0].mxu0
        %v3184 = vadd.f32 %v2442, %v3183
        %v3185 = vpop.f32.mrb[0].mxu0
        %v3186 = vadd.f32 %v2446, %v3185
        %v3187 = vpop.f32.mrb[0].mxu0
        %v3188 = vadd.f32 %v2442, %v3187
        %v3189 = vpop.f32.mrb[0].mxu0
        %v3190 = vadd.f32 %v2446, %v3189
        %3191 = vmatprep.mubr.bf16.mxu0 %v2302
        %3192 = vmatmul.mubr.bf16.gmra.mrb[0].mxu0 %v2301
        %v3193 = vpop.f32.mrb[0].mxu0
        %v3194 = vadd.f32 %v2442, %v3193
        %v3195 = vpop.f32.mrb[0].mxu0
        %v3196 = vadd.f32 %v2446, %v3195
        %v3197 = vpop.f32.mrb[0].mxu0
        %v3198 = vadd.f32 %v2442, %v3197
        %v3199 = vpop.f32.mrb[0].mxu0
        %v3200 = vadd.f32 %v2446, %v3199
        %3201 = vmatprep.mubr.bf16.mxu0 %v2306
        %3202 = vmatmul.mubr.bf16.gmra.mrb[0].mxu0 %v2305
        %v3203 = vpop.f32.mrb[0].mxu0
        %v3204 = vadd.f32 %v2442, %v3203
        %v3205 = vpop.f32.mrb[0].mxu0
        %v3206 = vadd.f32 %v2446, %v3205
        %v3207 = vpop.f32.mrb[0].mxu0
        %v3208 = vadd.f32 %v2442, %v3207
        %v3209 = vpop.f32.mrb[0].mxu0
        %v3210 = vadd.f32 %v2446, %v3209
        %3211 = vdwg.mxu0
        %3212 = vmatprep.subr.bf16.mxu0 %v2908
        %3213 = vmatpush1.bf16.msra.mxu0 %v2907
        %3214 = vmatprep.subr.bf16.mxu0 %v2912
        %3215 = vmatpush1.bf16.msra.mxu0 %v2911
        %3216 = vmatprep.subr.bf16.mxu0 %v2916
        %3217 = vmatpush1.bf16.msra.mxu0 %v2915
        %3218 = vmatprep.subr.bf16.mxu0 %v2920
        %3219 = vmatpush1.bf16.msra.mxu0 %v2919
        %3220 = vmatprep.subr.bf16.mxu0 %v2924
        %3221 = vmatpush1.bf16.msra.mxu0 %v2923
        %3222 = vmatprep.subr.bf16.mxu0 %v2928
        %3223 = vmatpush1.bf16.msra.mxu0 %v2927
        %3224 = vmatprep.subr.bf16.mxu0 %v2932
        %3225 = vmatpush1.bf16.msra.mxu0 %v2931
        %3226 = vmatprep.subr.bf16.mxu0 %v2936
        %3227 = vmatpush1.bf16.msra.mxu0 %v2935
        %3228 = vmatprep.subr.bf16.mxu0 %v2940
        %3229 = vmatpush1.bf16.msra.mxu0 %v2939
        %3230 = vmatprep.subr.bf16.mxu0 %v2944
        %3231 = vmatpush1.bf16.msra.mxu0 %v2943
        %3232 = vmatprep.subr.bf16.mxu0 %v2948
        %3233 = vmatpush1.bf16.msra.mxu0 %v2947
        %3234 = vmatprep.subr.bf16.mxu0 %v2952
        %3235 = vmatpush1.bf16.msra.mxu0 %v2951
        %3236 = vmatprep.subr.bf16.mxu0 %v2956
        %3237 = vmatpush1.bf16.msra.mxu0 %v2955
        %3238 = vmatprep.subr.bf16.mxu0 %v2960
        %3239 = vmatpush1.bf16.msra.mxu0 %v2959
        %3240 = vmatprep.subr.bf16.mxu0 %v2964
        %3241 = vmatpush1.bf16.msra.mxu0 %v2963
        %3242 = vmatprep.subr.bf16.mxu0 %v2968
        %3243 = vmatpush1.bf16.msra.mxu0 %v2967
        %3244 = vmatprep.mubr.bf16.mxu0 %v2280
        %3245 = vmatmul.mubr.bf16.gmra.mrb[0].mxu0 %v2279
        %v3246 = vpop.f32.mrb[0].mxu0
        %v3247 = vadd.f32 %v3134, %v3246
        %v3248 = vpop.f32.mrb[0].mxu0
        %v3249 = vadd.f32 %v3136, %v3248
        %v3250 = vpop.f32.mrb[0].mxu0
        %v3251 = vadd.f32 %v3138, %v3250
        %v3252 = vpop.f32.mrb[0].mxu0
        %v3253 = vadd.f32 %v3140, %v3252
        %3254 = vmatprep.mubr.bf16.mxu0 %v2284
        %3255 = vmatmul.mubr.bf16.gmra.mrb[0].mxu0 %v2283
        %v3256 = vpop.f32.mrb[0].mxu0
        %v3257 = vadd.f32 %v3144, %v3256
        %v3258 = vpop.f32.mrb[0].mxu0
        %v3259 = vadd.f32 %v3146, %v3258
        %v3260 = vpop.f32.mrb[0].mxu0
        %v3261 = vadd.f32 %v3148, %v3260
        %v3262 = vpop.f32.mrb[0].mxu0
        %v3263 = vadd.f32 %v3150, %v3262
        %3264 = vmatprep.mubr.bf16.mxu0 %v2288
        %3265 = vmatmul.mubr.bf16.gmra.mrb[0].mxu0 %v2287
        %v3266 = vpop.f32.mrb[0].mxu0
        %v3267 = vadd.f32 %v3154, %v3266
        %v3268 = vpop.f32.mrb[0].mxu0
        %v3269 = vadd.f32 %v3156, %v3268
        %v3270 = vpop.f32.mrb[0].mxu0
        %v3271 = vadd.f32 %v3158, %v3270
        %v3272 = vpop.f32.mrb[0].mxu0
        %v3273 = vadd.f32 %v3160, %v3272
        %3274 = vmatprep.mubr.bf16.mxu0 %v2292
        %3275 = vmatmul.mubr.bf16.gmra.mrb[0].mxu0 %v2291
        %v3276 = vpop.f32.mrb[0].mxu0
        %v3277 = vadd.f32 %v3164, %v3276
        %v3278 = vpop.f32.mrb[0].mxu0
        %v3279 = vadd.f32 %v3166, %v3278
        %v3280 = vpop.f32.mrb[0].mxu0
        %v3281 = vadd.f32 %v3168, %v3280
        %v3282 = vpop.f32.mrb[0].mxu0
        %v3283 = vadd.f32 %v3170, %v3282
        %3284 = vmatprep.mubr.bf16.mxu0 %v2296
        %3285 = vmatmul.mubr.bf16.gmra.mrb[0].mxu0 %v2295
        %v3286 = vpop.f32.mrb[0].mxu0
        %v3287 = vadd.f32 %v3174, %v3286
        %v3288 = vpop.f32.mrb[0].mxu0
        %v3289 = vadd.f32 %v3176, %v3288
        %v3290 = vpop.f32.mrb[0].mxu0
        %v3291 = vadd.f32 %v3178, %v3290
        %v3292 = vpop.f32.mrb[0].mxu0
        %v3293 = vadd.f32 %v3180, %v3292
        %3294 = vmatprep.mubr.bf16.mxu0 %v2300
        %3295 = vmatmul.mubr.bf16.gmra.mrb[0].mxu0 %v2299
        %v3296 = vpop.f32.mrb[0].mxu0
        %v3297 = vadd.f32 %v3184, %v3296
        %v3298 = vpop.f32.mrb[0].mxu0
        %v3299 = vadd.f32 %v3186, %v3298
        %v3300 = vpop.f32.mrb[0].mxu0
        %v3301 = vadd.f32 %v3188, %v3300
        %v3302 = vpop.f32.mrb[0].mxu0
        %v3303 = vadd.f32 %v3190, %v3302
        %3304 = vmatprep.mubr.bf16.mxu0 %v2304
        %3305 = vmatmul.mubr.bf16.gmra.mrb[0].mxu0 %v2303
        %v3306 = vpop.f32.mrb[0].mxu0
        %v3307 = vadd.f32 %v3194, %v3306
        %v3308 = vpop.f32.mrb[0].mxu0
        %v3309 = vadd.f32 %v3196, %v3308
        %v3310 = vpop.f32.mrb[0].mxu0
        %v3311 = vadd.f32 %v3198, %v3310
        %v3312 = vpop.f32.mrb[0].mxu0
        %v3313 = vadd.f32 %v3200, %v3312
        %3314 = vmatprep.mubr.bf16.mxu0 %v2308
        %3315 = vmatmul.mubr.bf16.gmra.mrb[0].mxu0 %v2307
        %v3316 = vpop.f32.mrb[0].mxu0
        %v3317 = vadd.f32 %v3204, %v3316
        %v3318 = vpop.f32.mrb[0].mxu0
        %v3319 = vadd.f32 %v3206, %v3318
        %v3320 = vpop.f32.mrb[0].mxu0
        %v3321 = vadd.f32 %v3208, %v3320
        %v3322 = vpop.f32.mrb[0].mxu0
        %v3323 = vadd.f32 %v3210, %v3322
        %3324 = vdwg.mxu0
        %3325 = vmatprep.subr.bf16.mxu0 %v2846
        %3326 = vmatpush1.bf16.msra.mxu0 %v2845
        %3327 = vmatprep.subr.bf16.mxu0 %v2850
        %3328 = vmatpush1.bf16.msra.mxu0 %v2849
        %3329 = vmatprep.subr.bf16.mxu0 %v2854
        %3330 = vmatpush1.bf16.msra.mxu0 %v2853
        %3331 = vmatprep.subr.bf16.mxu0 %v2858
        %3332 = vmatpush1.bf16.msra.mxu0 %v2857
        %3333 = vmatprep.subr.bf16.mxu0 %v2862
        %3334 = vmatpush1.bf16.msra.mxu0 %v2861
        %3335 = vmatprep.subr.bf16.mxu0 %v2866
        %3336 = vmatpush1.bf16.msra.mxu0 %v2865
        %3337 = vmatprep.subr.bf16.mxu0 %v2870
        %3338 = vmatpush1.bf16.msra.mxu0 %v2869
        %3339 = vmatprep.subr.bf16.mxu0 %v2874
        %3340 = vmatpush1.bf16.msra.mxu0 %v2873
        %3341 = vmatprep.subr.bf16.mxu0 %v2878
        %3342 = vmatpush1.bf16.msra.mxu0 %v2877
        %3343 = vmatprep.subr.bf16.mxu0 %v2882
        %3344 = vmatpush1.bf16.msra.mxu0 %v2881
        %3345 = vmatprep.subr.bf16.mxu0 %v2886
        %3346 = vmatpush1.bf16.msra.mxu0 %v2885
        %3347 = vmatprep.subr.bf16.mxu0 %v2890
        %3348 = vmatpush1.bf16.msra.mxu0 %v2889
        %3349 = vmatprep.subr.bf16.mxu0 %v2894
        %3350 = vmatpush1.bf16.msra.mxu0 %v2893
        %3351 = vmatprep.subr.bf16.mxu0 %v2898
        %3352 = vmatpush1.bf16.msra.mxu0 %v2897
        %3353 = vmatprep.subr.bf16.mxu0 %v2902
        %3354 = vmatpush1.bf16.msra.mxu0 %v2901
        %3355 = vmatprep.subr.bf16.mxu0 %v2906
        %3356 = vmatpush1.bf16.msra.mxu0 %v2905
        %3357 = vmatprep.mubr.bf16.mxu0 %v2278
        %3358 = vmatmul.mubr.bf16.gmra.mrb[0].mxu0 %v2277
        %v3359 = vpop.f32.mrb[0].mxu0
        %v3360 = vadd.f32 %v2450, %v3359
        %v3361 = vpop.f32.mrb[0].mxu0
        %v3362 = vadd.f32 %v2454, %v3361
        %v3363 = vpop.f32.mrb[0].mxu0
        %v3364 = vadd.f32 %v2450, %v3363
        %v3365 = vpop.f32.mrb[0].mxu0
        %v3366 = vadd.f32 %v2454, %v3365
        %3367 = vmatprep.mubr.bf16.mxu0 %v2282
        %3368 = vmatmul.mubr.bf16.gmra.mrb[0].mxu0 %v2281
        %v3369 = vpop.f32.mrb[0].mxu0
        %v3370 = vadd.f32 %v2450, %v3369
        %v3371 = vpop.f32.mrb[0].mxu0
        %v3372 = vadd.f32 %v2454, %v3371
        %v3373 = vpop.f32.mrb[0].mxu0
        %v3374 = vadd.f32 %v2450, %v3373
        %v3375 = vpop.f32.mrb[0].mxu0
        %v3376 = vadd.f32 %v2454, %v3375
        %3377 = vmatprep.mubr.bf16.mxu0 %v2286
        %3378 = vmatmul.mubr.bf16.gmra.mrb[0].mxu0 %v2285
        %v3379 = vpop.f32.mrb[0].mxu0
        %v3380 = vadd.f32 %v2450, %v3379
        %v3381 = vpop.f32.mrb[0].mxu0
        %v3382 = vadd.f32 %v2454, %v3381
        %v3383 = vpop.f32.mrb[0].mxu0
        %v3384 = vadd.f32 %v2450, %v3383
        %v3385 = vpop.f32.mrb[0].mxu0
        %v3386 = vadd.f32 %v2454, %v3385
        %3387 = vmatprep.mubr.bf16.mxu0 %v2290
        %3388 = vmatmul.mubr.bf16.gmra.mrb[0].mxu0 %v2289
        %v3389 = vpop.f32.mrb[0].mxu0
        %v3390 = vadd.f32 %v2450, %v3389
        %v3391 = vpop.f32.mrb[0].mxu0
        %v3392 = vadd.f32 %v2454, %v3391
        %v3393 = vpop.f32.mrb[0].mxu0
        %v3394 = vadd.f32 %v2450, %v3393
        %v3395 = vpop.f32.mrb[0].mxu0
        %v3396 = vadd.f32 %v2454, %v3395
        %3397 = vmatprep.mubr.bf16.mxu0 %v2294
        %3398 = vmatmul.mubr.bf16.gmra.mrb[0].mxu0 %v2293
        %v3399 = vpop.f32.mrb[0].mxu0
        %v3400 = vadd.f32 %v2450, %v3399
        %v3401 = vpop.f32.mrb[0].mxu0
        %v3402 = vadd.f32 %v2454, %v3401
        %v3403 = vpop.f32.mrb[0].mxu0
        %v3404 = vadd.f32 %v2450, %v3403
        %v3405 = vpop.f32.mrb[0].mxu0
        %v3406 = vadd.f32 %v2454, %v3405
        %3407 = vmatprep.mubr.bf16.mxu0 %v2298
        %3408 = vmatmul.mubr.bf16.gmra.mrb[0].mxu0 %v2297
        %v3409 = vpop.f32.mrb[0].mxu0
        %v3410 = vadd.f32 %v2450, %v3409
        %v3411 = vpop.f32.mrb[0].mxu0
        %v3412 = vadd.f32 %v2454, %v3411
        %v3413 = vpop.f32.mrb[0].mxu0
        %v3414 = vadd.f32 %v2450, %v3413
        %v3415 = vpop.f32.mrb[0].mxu0
        %v3416 = vadd.f32 %v2454, %v3415
        %3417 = vmatprep.mubr.bf16.mxu0 %v2302
        %3418 = vmatmul.mubr.bf16.gmra.mrb[0].mxu0 %v2301
        %v3419 = vpop.f32.mrb[0].mxu0
        %v3420 = vadd.f32 %v2450, %v3419
        %v3421 = vpop.f32.mrb[0].mxu0
        %v3422 = vadd.f32 %v2454, %v3421
        %v3423 = vpop.f32.mrb[0].mxu0
        %v3424 = vadd.f32 %v2450, %v3423
        %v3425 = vpop.f32.mrb[0].mxu0
        %v3426 = vadd.f32 %v2454, %v3425
        %3427 = vmatprep.mubr.bf16.mxu0 %v2306
        %3428 = vmatmul.mubr.bf16.gmra.mrb[0].mxu0 %v2305
        %v3429 = vpop.f32.mrb[0].mxu0
        %v3430 = vadd.f32 %v2450, %v3429
        %v3431 = vpop.f32.mrb[0].mxu0
        %v3432 = vadd.f32 %v2454, %v3431
        %v3433 = vpop.f32.mrb[0].mxu0
        %v3434 = vadd.f32 %v2450, %v3433
        %v3435 = vpop.f32.mrb[0].mxu0
        %v3436 = vadd.f32 %v2454, %v3435
        %3437 = vdwg.mxu0
        %3438 = vmatprep.subr.bf16.mxu0 %v2910
        %3439 = vmatpush1.bf16.msra.mxu0 %v2909
        %3440 = vmatprep.subr.bf16.mxu0 %v2914
        %3441 = vmatpush1.bf16.msra.mxu0 %v2913
        %3442 = vmatprep.subr.bf16.mxu0 %v2918
        %3443 = vmatpush1.bf16.msra.mxu0 %v2917
        %3444 = vmatprep.subr.bf16.mxu0 %v2922
        %3445 = vmatpush1.bf16.msra.mxu0 %v2921
        %3446 = vmatprep.subr.bf16.mxu0 %v2926
        %3447 = vmatpush1.bf16.msra.mxu0 %v2925
        %3448 = vmatprep.subr.bf16.mxu0 %v2930
        %3449 = vmatpush1.bf16.msra.mxu0 %v2929
        %3450 = vmatprep.subr.bf16.mxu0 %v2934
        %3451 = vmatpush1.bf16.msra.mxu0 %v2933
        %3452 = vmatprep.subr.bf16.mxu0 %v2938
        %3453 = vmatpush1.bf16.msra.mxu0 %v2937
        %3454 = vmatprep.subr.bf16.mxu0 %v2942
        %3455 = vmatpush1.bf16.msra.mxu0 %v2941
        %3456 = vmatprep.subr.bf16.mxu0 %v2946
        %3457 = vmatpush1.bf16.msra.mxu0 %v2945
        %3458 = vmatprep.subr.bf16.mxu0 %v2950
        %3459 = vmatpush1.bf16.msra.mxu0 %v2949
        %3460 = vmatprep.subr.bf16.mxu0 %v2954
        %3461 = vmatpush1.bf16.msra.mxu0 %v2953
        %3462 = vmatprep.subr.bf16.mxu0 %v2958
        %3463 = vmatpush1.bf16.msra.mxu0 %v2957
        %3464 = vmatprep.subr.bf16.mxu0 %v2962
        %3465 = vmatpush1.bf16.msra.mxu0 %v2961
        %3466 = vmatprep.subr.bf16.mxu0 %v2966
        %3467 = vmatpush1.bf16.msra.mxu0 %v2965
        %3468 = vmatprep.subr.bf16.mxu0 %v2970
        %3469 = vmatpush1.bf16.msra.mxu0 %v2969
        %3470 = vmatprep.mubr.bf16.mxu0 %v2280
        %3471 = vmatmul.mubr.bf16.gmra.mrb[0].mxu0 %v2279
        %v3472 = vpop.f32.mrb[0].mxu0
        %v3473 = vadd.f32 %v3360, %v3472
        %v3474 = vpop.f32.mrb[0].mxu0
        %v3475 = vadd.f32 %v3362, %v3474
        %v3476 = vpop.f32.mrb[0].mxu0
        %v3477 = vadd.f32 %v3364, %v3476
        %v3478 = vpop.f32.mrb[0].mxu0
        %v3479 = vadd.f32 %v3366, %v3478
        %3480 = vmatprep.mubr.bf16.mxu0 %v2284
        %3481 = vmatmul.mubr.bf16.gmra.mrb[0].mxu0 %v2283
        %v3482 = vpop.f32.mrb[0].mxu0
        %v3483 = vadd.f32 %v3370, %v3482
        %v3484 = vpop.f32.mrb[0].mxu0
        %v3485 = vadd.f32 %v3372, %v3484
        %v3486 = vpop.f32.mrb[0].mxu0
        %v3487 = vadd.f32 %v3374, %v3486
        %v3488 = vpop.f32.mrb[0].mxu0
        %v3489 = vadd.f32 %v3376, %v3488
        %3490 = vmatprep.mubr.bf16.mxu0 %v2288
        %3491 = vmatmul.mubr.bf16.gmra.mrb[0].mxu0 %v2287
        %v3492 = vpop.f32.mrb[0].mxu0
        %v3493 = vadd.f32 %v3380, %v3492
        %v3494 = vpop.f32.mrb[0].mxu0
        %v3495 = vadd.f32 %v3382, %v3494
        %v3496 = vpop.f32.mrb[0].mxu0
        %v3497 = vadd.f32 %v3384, %v3496
        %v3498 = vpop.f32.mrb[0].mxu0
        %v3499 = vadd.f32 %v3386, %v3498
        %3500 = vmatprep.mubr.bf16.mxu0 %v2292
        %3501 = vmatmul.mubr.bf16.gmra.mrb[0].mxu0 %v2291
        %v3502 = vpop.f32.mrb[0].mxu0
        %v3503 = vadd.f32 %v3390, %v3502
        %v3504 = vpop.f32.mrb[0].mxu0
        %v3505 = vadd.f32 %v3392, %v3504
        %v3506 = vpop.f32.mrb[0].mxu0
        %v3507 = vadd.f32 %v3394, %v3506
        %v3508 = vpop.f32.mrb[0].mxu0
        %v3509 = vadd.f32 %v3396, %v3508
        %3510 = vmatprep.mubr.bf16.mxu0 %v2296
        %3511 = vmatmul.mubr.bf16.gmra.mrb[0].mxu0 %v2295
        %v3512 = vpop.f32.mrb[0].mxu0
        %v3513 = vadd.f32 %v3400, %v3512
        %v3514 = vpop.f32.mrb[0].mxu0
        %v3515 = vadd.f32 %v3402, %v3514
        %v3516 = vpop.f32.mrb[0].mxu0
        %v3517 = vadd.f32 %v3404, %v3516
        %v3518 = vpop.f32.mrb[0].mxu0
        %v3519 = vadd.f32 %v3406, %v3518
        %3520 = vmatprep.mubr.bf16.mxu0 %v2300
        %3521 = vmatmul.mubr.bf16.gmra.mrb[0].mxu0 %v2299
        %v3522 = vpop.f32.mrb[0].mxu0
        %v3523 = vadd.f32 %v3410, %v3522
        %v3524 = vpop.f32.mrb[0].mxu0
        %v3525 = vadd.f32 %v3412, %v3524
        %v3526 = vpop.f32.mrb[0].mxu0
        %v3527 = vadd.f32 %v3414, %v3526
        %v3528 = vpop.f32.mrb[0].mxu0
        %v3529 = vadd.f32 %v3416, %v3528
        %3530 = vmatprep.mubr.bf16.mxu0 %v2304
        %3531 = vmatmul.mubr.bf16.gmra.mrb[0].mxu0 %v2303
        %v3532 = vpop.f32.mrb[0].mxu0
        %v3533 = vadd.f32 %v3420, %v3532
        %v3534 = vpop.f32.mrb[0].mxu0
        %v3535 = vadd.f32 %v3422, %v3534
        %v3536 = vpop.f32.mrb[0].mxu0
        %v3537 = vadd.f32 %v3424, %v3536
        %v3538 = vpop.f32.mrb[0].mxu0
        %v3539 = vadd.f32 %v3426, %v3538
        %3540 = vmatprep.mubr.bf16.mxu0 %v2308
        %3541 = vmatmul.mubr.bf16.gmra.mrb[0].mxu0 %v2307
        %v3542 = vpop.f32.mrb[0].mxu0
        %v3543 = vadd.f32 %v3430, %v3542
        %v3544 = vpop.f32.mrb[0].mxu0
        %v3545 = vadd.f32 %v3432, %v3544
        %v3546 = vpop.f32.mrb[0].mxu0
        %v3547 = vadd.f32 %v3434, %v3546
        %v3548 = vpop.f32.mrb[0].mxu0
        %v3549 = vadd.f32 %v3436, %v3548
        %3550 = vdwg.mxu0
        %v3551 = vmax.f32 %v3247, 0.0
        %v3552 = vmax.f32 %v3249, 0.0
        %v3553 = vmax.f32 %v3473, 0.0
        %v3554 = vmax.f32 %v3475, 0.0
        %v3555 = vmax.f32 %v3251, 0.0
        %v3556 = vmax.f32 %v3253, 0.0
        %v3557 = vmax.f32 %v3477, 0.0
        %v3558 = vmax.f32 %v3479, 0.0
        %v3559 = vmax.f32 %v3257, 0.0
        %v3560 = vmax.f32 %v3259, 0.0
        %v3561 = vmax.f32 %v3483, 0.0
        %v3562 = vmax.f32 %v3485, 0.0
        %v3563 = vmax.f32 %v3261, 0.0
        %v3564 = vmax.f32 %v3263, 0.0
        %v3565 = vmax.f32 %v3487, 0.0
        %v3566 = vmax.f32 %v3489, 0.0
        %v3567 = vmax.f32 %v3267, 0.0
        %v3568 = vmax.f32 %v3269, 0.0
        %v3569 = vmax.f32 %v3493, 0.0
        %v3570 = vmax.f32 %v3495, 0.0
        %v3571 = vmax.f32 %v3271, 0.0
        %v3572 = vmax.f32 %v3273, 0.0
        %v3573 = vmax.f32 %v3497, 0.0
        %v3574 = vmax.f32 %v3499, 0.0
        %v3575 = vmax.f32 %v3277, 0.0
        %v3576 = vmax.f32 %v3279, 0.0
        %v3577 = vmax.f32 %v3503, 0.0
        %v3578 = vmax.f32 %v3505, 0.0
        %v3579 = vmax.f32 %v3281, 0.0
        %v3580 = vmax.f32 %v3283, 0.0
        %v3581 = vmax.f32 %v3507, 0.0
        %v3582 = vmax.f32 %v3509, 0.0
        %v3583 = vmax.f32 %v3287, 0.0
        %v3584 = vmax.f32 %v3289, 0.0
        %v3585 = vmax.f32 %v3513, 0.0
        %v3586 = vmax.f32 %v3515, 0.0
        %v3587 = vmax.f32 %v3291, 0.0
        %v3588 = vmax.f32 %v3293, 0.0
        %v3589 = vmax.f32 %v3517, 0.0
        %v3590 = vmax.f32 %v3519, 0.0
        %v3591 = vmax.f32 %v3297, 0.0
        %v3592 = vmax.f32 %v3299, 0.0
        %v3593 = vmax.f32 %v3523, 0.0
        %v3594 = vmax.f32 %v3525, 0.0
        %v3595 = vmax.f32 %v3301, 0.0
        %v3596 = vmax.f32 %v3303, 0.0
        %v3597 = vmax.f32 %v3527, 0.0
        %v3598 = vmax.f32 %v3529, 0.0
        %v3599 = vmax.f32 %v3307, 0.0
        %v3600 = vmax.f32 %v3309, 0.0
        %v3601 = vmax.f32 %v3533, 0.0
        %v3602 = vmax.f32 %v3535, 0.0
        %v3603 = vmax.f32 %v3311, 0.0
        %v3604 = vmax.f32 %v3313, 0.0
        %v3605 = vmax.f32 %v3537, 0.0
        %v3606 = vmax.f32 %v3539, 0.0
        %v3607 = vmax.f32 %v3317, 0.0
        %v3608 = vmax.f32 %v3319, 0.0
        %v3609 = vmax.f32 %v3543, 0.0
        %v3610 = vmax.f32 %v3545, 0.0
        %v3611 = vmax.f32 %v3321, 0.0
        %v3612 = vmax.f32 %v3323, 0.0
        %v3613 = vmax.f32 %v3547, 0.0
        %v3614 = vmax.f32 %v3549, 0.0
        %s3615 = sld [smem:[#allocation2]]
        %v3616 = vld [vmem:[%s8] sm:$0xf]
        %v3618 = vlaneseq
        %v3619 = vshrl.u32 %v3618, 7
        %v3620 = vsub.s32 0, %v3619
        %v3621 = vrot.slane %v3616, %v3620
        %v3622 = vlaneseq
        %v3623 = vshrl.u32 %v3622, 7
        %v3624 = vsub.s32 1, %v3623
        %v3625 = vrot.slane %v3616, %v3624
        %v3626 = vlaneseq
        %v3627 = vshrl.u32 %v3626, 7
        %v3628 = vsub.s32 2, %v3627
        %v3629 = vrot.slane %v3616, %v3628
        %v3630 = vlaneseq
        %v3631 = vshrl.u32 %v3630, 7
        %v3632 = vsub.s32 3, %v3631
        %v3633 = vrot.slane %v3616, %v3632
        %v3638 = vmul.f32 %v3551, %v3621
        %v3639 = vmul.f32 %v3552, %v3625
        %v3640 = vmul.f32 %v3553, %v3629
        %v3641 = vmul.f32 %v3554, %v3633
        %v3642 = vmul.f32 %v3555, %v3621
        %v3643 = vmul.f32 %v3556, %v3625
        %v3644 = vmul.f32 %v3557, %v3629
        %v3645 = vmul.f32 %v3558, %v3633
        %v3646 = vmul.f32 %v3559, %v3621
        %v3647 = vmul.f32 %v3560, %v3625
        %v3648 = vmul.f32 %v3561, %v3629
        %v3649 = vmul.f32 %v3562, %v3633
        %v3650 = vmul.f32 %v3563, %v3621
        %v3651 = vmul.f32 %v3564, %v3625
        %v3652 = vmul.f32 %v3565, %v3629
        %v3653 = vmul.f32 %v3566, %v3633
        %v3654 = vmul.f32 %v3567, %v3621
        %v3655 = vmul.f32 %v3568, %v3625
        %v3656 = vmul.f32 %v3569, %v3629
        %v3657 = vmul.f32 %v3570, %v3633
        %v3658 = vmul.f32 %v3571, %v3621
        %v3659 = vmul.f32 %v3572, %v3625
        %v3660 = vmul.f32 %v3573, %v3629
        %v3661 = vmul.f32 %v3574, %v3633
        %v3662 = vmul.f32 %v3575, %v3621
        %v3663 = vmul.f32 %v3576, %v3625
        %v3664 = vmul.f32 %v3577, %v3629
        %v3665 = vmul.f32 %v3578, %v3633
        %v3666 = vmul.f32 %v3579, %v3621
        %v3667 = vmul.f32 %v3580, %v3625
        %v3668 = vmul.f32 %v3581, %v3629
        %v3669 = vmul.f32 %v3582, %v3633
        %v3670 = vmul.f32 %v3583, %v3621
        %v3671 = vmul.f32 %v3584, %v3625
        %v3672 = vmul.f32 %v3585, %v3629
        %v3673 = vmul.f32 %v3586, %v3633
        %v3674 = vmul.f32 %v3587, %v3621
        %v3675 = vmul.f32 %v3588, %v3625
        %v3676 = vmul.f32 %v3589, %v3629
        %v3677 = vmul.f32 %v3590, %v3633
        %v3678 = vmul.f32 %v3591, %v3621
        %v3679 = vmul.f32 %v3592, %v3625
        %v3680 = vmul.f32 %v3593, %v3629
        %v3681 = vmul.f32 %v3594, %v3633
        %v3682 = vmul.f32 %v3595, %v3621
        %v3683 = vmul.f32 %v3596, %v3625
        %v3684 = vmul.f32 %v3597, %v3629
        %v3685 = vmul.f32 %v3598, %v3633
        %v3686 = vmul.f32 %v3599, %v3621
        %v3687 = vmul.f32 %v3600, %v3625
        %v3688 = vmul.f32 %v3601, %v3629
        %v3689 = vmul.f32 %v3602, %v3633
        %v3690 = vmul.f32 %v3603, %v3621
        %v3691 = vmul.f32 %v3604, %v3625
        %v3692 = vmul.f32 %v3605, %v3629
        %v3693 = vmul.f32 %v3606, %v3633
        %v3694 = vmul.f32 %v3607, %v3621
        %v3695 = vmul.f32 %v3608, %v3625
        %v3696 = vmul.f32 %v3609, %v3629
        %v3697 = vmul.f32 %v3610, %v3633
        %v3698 = vmul.f32 %v3611, %v3621
        %v3699 = vmul.f32 %v3612, %v3625
        %v3700 = vmul.f32 %v3613, %v3629
        %v3701 = vmul.f32 %v3614, %v3633
        %v3702 = vadd.f32 %v3638, %v3639
        %v3703 = vadd.f32 %v3702, %v3640
        %v3704 = vadd.f32 %v3703, %v3641
        %3705 = vadd.xlane.f32.xlu0 %v3704
        %v3706 = vpop.xlane.xlu0 %3705
        %v3707 = vadd.f32 %v3642, %v3643
        %v3708 = vadd.f32 %v3707, %v3644
        %v3709 = vadd.f32 %v3708, %v3645
        %3710 = vadd.xlane.f32.xlu0 %v3709
        %v3711 = vpop.xlane.xlu0 %3710
        %v3712 = vadd.f32 %v3646, %v3647
        %v3713 = vadd.f32 %v3712, %v3648
        %v3714 = vadd.f32 %v3713, %v3649
        %3715 = vadd.xlane.f32.xlu0 %v3714
        %v3716 = vpop.xlane.xlu0 %3715
        %v3717 = vadd.f32 %v3650, %v3651
        %v3718 = vadd.f32 %v3717, %v3652
        %v3719 = vadd.f32 %v3718, %v3653
        %3720 = vadd.xlane.f32.xlu0 %v3719
        %v3721 = vpop.xlane.xlu0 %3720
        %v3722 = vadd.f32 %v3654, %v3655
        %v3723 = vadd.f32 %v3722, %v3656
        %v3724 = vadd.f32 %v3723, %v3657
        %3725 = vadd.xlane.f32.xlu0 %v3724
        %v3726 = vpop.xlane.xlu0 %3725
        %v3727 = vadd.f32 %v3658, %v3659
        %v3728 = vadd.f32 %v3727, %v3660
        %v3729 = vadd.f32 %v3728, %v3661
        %3730 = vadd.xlane.f32.xlu0 %v3729
        %v3731 = vpop.xlane.xlu0 %3730
        %v3732 = vadd.f32 %v3662, %v3663
        %v3733 = vadd.f32 %v3732, %v3664
        %v3734 = vadd.f32 %v3733, %v3665
        %3735 = vadd.xlane.f32.xlu0 %v3734
        %v3736 = vpop.xlane.xlu0 %3735
        %v3737 = vadd.f32 %v3666, %v3667
        %v3738 = vadd.f32 %v3737, %v3668
        %v3739 = vadd.f32 %v3738, %v3669
        %3740 = vadd.xlane.f32.xlu0 %v3739
        %v3741 = vpop.xlane.xlu0 %3740
        %v3742 = vadd.f32 %v3670, %v3671
        %v3743 = vadd.f32 %v3742, %v3672
        %v3744 = vadd.f32 %v3743, %v3673
        %3745 = vadd.xlane.f32.xlu0 %v3744
        %v3746 = vpop.xlane.xlu0 %3745
        %v3747 = vadd.f32 %v3674, %v3675
        %v3748 = vadd.f32 %v3747, %v3676
        %v3749 = vadd.f32 %v3748, %v3677
        %3750 = vadd.xlane.f32.xlu0 %v3749
        %v3751 = vpop.xlane.xlu0 %3750
        %v3752 = vadd.f32 %v3678, %v3679
        %v3753 = vadd.f32 %v3752, %v3680
        %v3754 = vadd.f32 %v3753, %v3681
        %3755 = vadd.xlane.f32.xlu0 %v3754
        %v3756 = vpop.xlane.xlu0 %3755
        %v3757 = vadd.f32 %v3682, %v3683
        %v3758 = vadd.f32 %v3757, %v3684
        %v3759 = vadd.f32 %v3758, %v3685
        %3760 = vadd.xlane.f32.xlu0 %v3759
        %v3761 = vpop.xlane.xlu0 %3760
        %v3762 = vadd.f32 %v3686, %v3687
        %v3763 = vadd.f32 %v3762, %v3688
        %v3764 = vadd.f32 %v3763, %v3689
        %3765 = vadd.xlane.f32.xlu0 %v3764
        %v3766 = vpop.xlane.xlu0 %3765
        %v3767 = vadd.f32 %v3690, %v3691
        %v3768 = vadd.f32 %v3767, %v3692
        %v3769 = vadd.f32 %v3768, %v3693
        %3770 = vadd.xlane.f32.xlu0 %v3769
        %v3771 = vpop.xlane.xlu0 %3770
        %v3772 = vadd.f32 %v3694, %v3695
        %v3773 = vadd.f32 %v3772, %v3696
        %v3774 = vadd.f32 %v3773, %v3697
        %3775 = vadd.xlane.f32.xlu0 %v3774
        %v3776 = vpop.xlane.xlu0 %3775
        %v3777 = vadd.f32 %v3698, %v3699
        %v3778 = vadd.f32 %v3777, %v3700
        %v3779 = vadd.f32 %v3778, %v3701
        %3780 = vadd.xlane.f32.xlu0 %v3779
        %v3781 = vpop.xlane.xlu0 %3780
        %v3782 = vstv %s3615
        %v3783 = vadd.f32 %v3706, %v3782
        %v3784 = vadd.f32 %v3711, %v3782
        %v3785 = vadd.f32 %v3716, %v3782
        %v3786 = vadd.f32 %v3721, %v3782
        %v3787 = vadd.f32 %v3726, %v3782
        %v3788 = vadd.f32 %v3731, %v3782
        %v3789 = vadd.f32 %v3736, %v3782
        %v3790 = vadd.f32 %v3741, %v3782
        %v3791 = vadd.f32 %v3746, %v3782
        %v3792 = vadd.f32 %v3751, %v3782
        %v3793 = vadd.f32 %v3756, %v3782
        %v3794 = vadd.f32 %v3761, %v3782
        %v3795 = vadd.f32 %v3766, %v3782
        %v3796 = vadd.f32 %v3771, %v3782
        %v3797 = vadd.f32 %v3776, %v3782
        %v3798 = vadd.f32 %v3781, %v3782
        %v3799 = vtanh.pop %v3783
        %v3800 = vtanh.pop %v3784
        %v3801 = vtanh.pop %v3785
        %v3802 = vtanh.pop %v3786
        %v3803 = vtanh.pop %v3787
        %v3804 = vtanh.pop %v3788
        %v3805 = vtanh.pop %v3789
        %v3806 = vtanh.pop %v3790
        %v3807 = vtanh.pop %v3791
        %v3808 = vtanh.pop %v3792
        %v3809 = vtanh.pop %v3793
        %v3810 = vtanh.pop %v3794
        %v3811 = vtanh.pop %v3795
        %v3812 = vtanh.pop %v3796
        %v3813 = vtanh.pop %v3797
        %v3814 = vtanh.pop %v3798
        %v3815 = vld [vmem:[%s494] sm:$0xff]
        %v3816 = vld [vmem:[%s494 + $0x8] sm:$0xff]
        %v3817 = vld [vmem:[%s494 + $0x10] sm:$0xff]
        %v3818 = vld [vmem:[%s494 + $0x18] sm:$0xff]
        %v3819 = vld [vmem:[%s494 + $0x20] sm:$0xff]
        %v3820 = vld [vmem:[%s494 + $0x28] sm:$0xff]
        %v3821 = vld [vmem:[%s494 + $0x30] sm:$0xff]
        %v3822 = vld [vmem:[%s494 + $0x38] sm:$0xff]
        %v3823 = vld [vmem:[%s494 + $0x40] sm:$0xff]
        %v3824 = vld [vmem:[%s494 + $0x48] sm:$0xff]
        %v3825 = vld [vmem:[%s494 + $0x50] sm:$0xff]
        %v3826 = vld [vmem:[%s494 + $0x58] sm:$0xff]
        %v3827 = vld [vmem:[%s494 + $0x60] sm:$0xff]
        %v3828 = vld [vmem:[%s494 + $0x68] sm:$0xff]
        %v3829 = vld [vmem:[%s494 + $0x70] sm:$0xff]
        %v3830 = vld [vmem:[%s494 + $0x78] sm:$0xff]
        %v3831 = vld [vmem:[%s11] sm:$0x1]
        %v3833 = vlaneseq
        %v3834 = vshrl.u32 %v3833, 7
        %v3835 = vsub.s32 0, %v3834
        %v3836 = vrot.slane %v3831, %v3835
        %v3838 = vmul.f32 %v3815, %v3836
        %v3839 = vmul.f32 %v3816, %v3836
        %v3840 = vmul.f32 %v3817, %v3836
        %v3841 = vmul.f32 %v3818, %v3836
        %v3842 = vmul.f32 %v3819, %v3836
        %v3843 = vmul.f32 %v3820, %v3836
        %v3844 = vmul.f32 %v3821, %v3836
        %v3845 = vmul.f32 %v3822, %v3836
        %v3846 = vmul.f32 %v3823, %v3836
        %v3847 = vmul.f32 %v3824, %v3836
        %v3848 = vmul.f32 %v3825, %v3836
        %v3849 = vmul.f32 %v3826, %v3836
        %v3850 = vmul.f32 %v3827, %v3836
        %v3851 = vmul.f32 %v3828, %v3836
        %v3852 = vmul.f32 %v3829, %v3836
        %v3853 = vmul.f32 %v3830, %v3836
        %vm3854 = vcmask 31744
        %v3855 = vsel %vm3854, %v3838, 0.0
        %3856 = vadd.xlane.f32.xlu0 %v3855
        %v3857 = vpop.xlane.xlu0 %3856
        %v3858 = vsel %vm3854, %v3839, 0.0
        %3859 = vadd.xlane.f32.xlu0 %v3858
        %v3860 = vpop.xlane.xlu0 %3859
        %v3861 = vsel %vm3854, %v3840, 0.0
        %3862 = vadd.xlane.f32.xlu0 %v3861
        %v3863 = vpop.xlane.xlu0 %3862
        %v3864 = vsel %vm3854, %v3841, 0.0
        %3865 = vadd.xlane.f32.xlu0 %v3864
        %v3866 = vpop.xlane.xlu0 %3865
        %v3867 = vsel %vm3854, %v3842, 0.0
        %3868 = vadd.xlane.f32.xlu0 %v3867
        %v3869 = vpop.xlane.xlu0 %3868
        %v3870 = vsel %vm3854, %v3843, 0.0
        %3871 = vadd.xlane.f32.xlu0 %v3870
        %v3872 = vpop.xlane.xlu0 %3871
        %v3873 = vsel %vm3854, %v3844, 0.0
        %3874 = vadd.xlane.f32.xlu0 %v3873
        %v3875 = vpop.xlane.xlu0 %3874
        %v3876 = vsel %vm3854, %v3845, 0.0
        %3877 = vadd.xlane.f32.xlu0 %v3876
        %v3878 = vpop.xlane.xlu0 %3877
        %v3879 = vsel %vm3854, %v3846, 0.0
        %3880 = vadd.xlane.f32.xlu0 %v3879
        %v3881 = vpop.xlane.xlu0 %3880
        %v3882 = vsel %vm3854, %v3847, 0.0
        %3883 = vadd.xlane.f32.xlu0 %v3882
        %v3884 = vpop.xlane.xlu0 %3883
        %v3885 = vsel %vm3854, %v3848, 0.0
        %3886 = vadd.xlane.f32.xlu0 %v3885
        %v3887 = vpop.xlane.xlu0 %3886
        %v3888 = vsel %vm3854, %v3849, 0.0
        %3889 = vadd.xlane.f32.xlu0 %v3888
        %v3890 = vpop.xlane.xlu0 %3889
        %v3891 = vsel %vm3854, %v3850, 0.0
        %3892 = vadd.xlane.f32.xlu0 %v3891
        %v3893 = vpop.xlane.xlu0 %3892
        %v3894 = vsel %vm3854, %v3851, 0.0
        %3895 = vadd.xlane.f32.xlu0 %v3894
        %v3896 = vpop.xlane.xlu0 %3895
        %v3897 = vsel %vm3854, %v3852, 0.0
        %3898 = vadd.xlane.f32.xlu0 %v3897
        %v3899 = vpop.xlane.xlu0 %3898
        %v3900 = vsel %vm3854, %v3853, 0.0
        %3901 = vadd.xlane.f32.xlu0 %v3900
        %v3902 = vpop.xlane.xlu0 %3901
        %s3903 = sld [smem:[#allocation3]]
        %v3904 = vstv %s3903
        %v3905 = vmul.f32 %v3799, %v3904
        %v3906 = vmul.f32 %v3800, %v3904
        %v3907 = vmul.f32 %v3801, %v3904
        %v3908 = vmul.f32 %v3802, %v3904
        %v3909 = vmul.f32 %v3803, %v3904
        %v3910 = vmul.f32 %v3804, %v3904
        %v3911 = vmul.f32 %v3805, %v3904
        %v3912 = vmul.f32 %v3806, %v3904
        %v3913 = vmul.f32 %v3807, %v3904
        %v3914 = vmul.f32 %v3808, %v3904
        %v3915 = vmul.f32 %v3809, %v3904
        %v3916 = vmul.f32 %v3810, %v3904
        %v3917 = vmul.f32 %v3811, %v3904
        %v3918 = vmul.f32 %v3812, %v3904
        %v3919 = vmul.f32 %v3813, %v3904
        %v3920 = vmul.f32 %v3814, %v3904
        %v3921 = vadd.f32 %v3905, %v3857
        %v3922 = vadd.f32 %v3906, %v3860
        %v3923 = vadd.f32 %v3907, %v3863
        %v3924 = vadd.f32 %v3908, %v3866
        %v3925 = vadd.f32 %v3909, %v3869
        %v3926 = vadd.f32 %v3910, %v3872
        %v3927 = vadd.f32 %v3911, %v3875
        %v3928 = vadd.f32 %v3912, %v3878
        %v3929 = vadd.f32 %v3913, %v3881
        %v3930 = vadd.f32 %v3914, %v3884
        %v3931 = vadd.f32 %v3915, %v3887
        %v3932 = vadd.f32 %v3916, %v3890
        %v3933 = vadd.f32 %v3917, %v3893
        %v3934 = vadd.f32 %v3918, %v3896
        %v3935 = vadd.f32 %v3919, %v3899
        %v3936 = vadd.f32 %v3920, %v3902
        %s3937 = sld [smem:[#allocation4]]
        %v3938 = vstv %s3937
        %v3939 = vadd.f32 %v3921, %v3938
        %v3940 = vadd.f32 %v3922, %v3938
        %v3941 = vadd.f32 %v3923, %v3938
        %v3942 = vadd.f32 %v3924, %v3938
        %v3943 = vadd.f32 %v3925, %v3938
        %v3944 = vadd.f32 %v3926, %v3938
        %v3945 = vadd.f32 %v3927, %v3938
        %v3946 = vadd.f32 %v3928, %v3938
        %v3947 = vadd.f32 %v3929, %v3938
        %v3948 = vadd.f32 %v3930, %v3938
        %v3949 = vadd.f32 %v3931, %v3938
        %v3950 = vadd.f32 %v3932, %v3938
        %v3951 = vadd.f32 %v3933, %v3938
        %v3952 = vadd.f32 %v3934, %v3938
        %v3953 = vadd.f32 %v3935, %v3938
        %v3954 = vadd.f32 %v3936, %v3938
        %3955 = vst [vmem:[%s483] sm:$0xff] %v3939
        %3956 = vst [vmem:[%s483 + $0x8] sm:$0xff] %v3940
        %3957 = vst [vmem:[%s483 + $0x10] sm:$0xff] %v3941
        %3958 = vst [vmem:[%s483 + $0x18] sm:$0xff] %v3942
        %3959 = vst [vmem:[%s483 + $0x20] sm:$0xff] %v3943
        %3960 = vst [vmem:[%s483 + $0x28] sm:$0xff] %v3944
        %3961 = vst [vmem:[%s483 + $0x30] sm:$0xff] %v3945
        %3962 = vst [vmem:[%s483 + $0x38] sm:$0xff] %v3946
        %3963 = vst [vmem:[%s483 + $0x40] sm:$0xff] %v3947
        %3964 = vst [vmem:[%s483 + $0x48] sm:$0xff] %v3948
        %3965 = vst [vmem:[%s483 + $0x50] sm:$0xff] %v3949
        %3966 = vst [vmem:[%s483 + $0x58] sm:$0xff] %v3950
        %3967 = vst [vmem:[%s483 + $0x60] sm:$0xff] %v3951
        %3968 = vst [vmem:[%s483 + $0x68] sm:$0xff] %v3952
        %3969 = vst [vmem:[%s483 + $0x70] sm:$0xff] %v3953
        %3970 = vst [vmem:[%s483 + $0x78] sm:$0xff] %v3954
        %s3971 = sand.u32 %s323, 1
        %s3972 = scalar_lea.sflag [#allocation7], %s3971
        %s3973 = sand.u32 %s323, 1
        %s3974 = smul.addr %s3973, 128
        %s3975 = scalar_lea.vmem [#allocation10], %s3974
        // Predicated region
        $region81: #{tpu_custom_call.1} parent=71 // pred_check
          %p3976 = pneg %p333
        $region82: #{tpu_custom_call.1} parent=71 // pred_check_branch
          %3978 = sbr.rel (%p3976) target = $region84
        $region83: #{tpu_custom_call.1} parent=71 // pred_region
          %s3979 = smul.u32 16, %s32
          %s3981 = ssub.s32 2048, 2048
          %3982 = vsyncadd %s3972, %s3981
          %s3983 = smul.addr %s3979, 128
          %s3984 = scalar_lea.hbm %s13, %s3983
          %s3985 = sshll.u32 %s3975, 4
          %s3986 = int_to_ptr.vmem [resolvable:$true] %s3985
          %3991 = dma.vmem_to_hbm [thread:$0]  %s3986, 2048, %s3984, %s3972, 128, 128, 8
        $region84: #{tpu_custom_call.1} parent=71 // pred_fallthru
          _
      $region72: #{tpu_custom_call.1} parent=5 // pred_fallthru
        _
      %p3992 = scmp.le.s32.totalorder 2, %s27
      // Predicated region
      $region85: #{tpu_custom_call.1} parent=5 // pred_check
        %p3993 = pneg %p3992
      $region86: #{tpu_custom_call.1} parent=5 // pred_check_branch
        %3995 = sbr.rel (%p3993) target = $region88
      $region87: #{tpu_custom_call.1} parent=5 // pred_region
        %s3996 = ssub.s32 %s27, 2
        // Predicated region
        $region89: #{tpu_custom_call.1} parent=87 // pred_check
          %p3997 = pneg %p339
        $region90: #{tpu_custom_call.1} parent=87 // pred_check_branch
          %3999 = sbr.rel (%p3997) target = $region92
        $region91: #{tpu_custom_call.1} parent=87 // pred_region
          %s4000 = sand.u32 %s324, 1
          %s4001 = scalar_lea.sflag [#allocation7], %s4000
          %s4002 = sand.u32 %s324, 1
          %s4003 = smul.addr %s4002, 128
          %s4004 = scalar_lea.vmem [#allocation10], %s4003
          %4005 = dma.done %s4001, 2048
        $region92: #{tpu_custom_call.1} parent=87 // pred_fallthru
          _
      $region88: #{tpu_custom_call.1} parent=5 // pred_fallthru
        _
    $region6: #{tpu_custom_call.1} parent=1 // loop_footer
      %s31 = sadd.s32 1, %s27
    $region7: #{tpu_custom_call.1} parent=1 // loop_footer_branch
      %26 = sbr.rel target = $region3
    $region8: #{tpu_custom_call.1} parent=1 // loop_exit
      _
    %4006 = vsyncpa [#allocation6], 1
    %s4007 = scalar_lea.sflag [#allocation6], 1
    %4008 = vsyncpa %s4007, 1
    %4009 = vsyncpa [#allocation9], 1
    %4010 = vsyncpa [#allocation7], 1
    %s4011 = scalar_lea.sflag [#allocation7], 1
    %4012 = vsyncpa %s4011, 1

</llo_original>
